<compile_context>
chip_gen: v7x
topology: tpu7x:2x2x1
jax: 0.10.0
libtpu: 0.0.40
codegen_flags: <defaults>
</compile_context>

<pallas_src>
import functools

import jax
import jax.numpy as jnp
from jax.experimental import pallas as pl
from jax.experimental.pallas import tpu as pltpu


def _round_up(v, m):
    return ((v + m - 1) // m) * m


def _cdiv(a, b):
    return -(-a // b)


# ----------------------------- Pallas kernel ------------------------------- #
def _stft_loss_kernel(*refs, r, chunk, tf, ext, nbp, nb, n_frames, n_basis):
    xa_ref, xb_ref, ya_ref, yb_ref = refs[:4]
    basis_refs = refs[4:4 + n_basis]
    o_ref = refs[4 + n_basis]
    xbuf, ybuf, x_acc, y_acc = refs[5 + n_basis:]

    i = pl.program_id(1)

    if r > 1:
        # Stage this tile's chunk rows plus the overlap tail from the next tile
        # so every shifted frame view is one contiguous sublane slice.
        xbuf[0:tf, :] = xa_ref[0]
        xbuf[tf:tf + ext, :] = xb_ref[0]
        ybuf[0:tf, :] = ya_ref[0]
        ybuf[tf:tf + ext, :] = yb_ref[0]

    # Windowed rDFT: r accumulated MXU matmuls per signal (frame f = chunks
    # [f, f+r)); the hann window is folded into the basis and the basis may be
    # split into bf16 hi/lo parts.  Accumulation uses the canonical
    # `acc_ref[...] += jnp.dot(...)` idiom into persistent VMEM scratch.
    first = True
    for j in range(r):
        if r > 1:
            lhs_x = xbuf[j:j + tf, :]
            lhs_y = ybuf[j:j + tf, :]
        else:
            lhs_x = xa_ref[0]
            lhs_y = ya_ref[0]
        for b_ref in basis_refs:
            rhs = b_ref[j]
            px = jnp.dot(lhs_x, rhs, preferred_element_type=jnp.float32)
            py = jnp.dot(lhs_y, rhs, preferred_element_type=jnp.float32)
            if first:
                x_acc[...] = px
                y_acc[...] = py
                first = False
            else:
                x_acc[...] += px
                y_acc[...] += py

    xs = x_acc[...]
    ys = y_acc[...]
    xr, xi = xs[:, :nbp], xs[:, nbp:]
    yr, yi = ys[:, :nbp], ys[:, nbp:]

    # clamp of the squared magnitude == torch clamp-before-sqrt; single sqrt
    # for (y_mag - x_mag)^2 and 0.5*|log y2 - log x2| for the log term.
    x2 = jnp.maximum(xr * xr + xi * xi, 1e-7)
    y2 = jnp.maximum(yr * yr + yi * yi, 1e-7)
    d2 = y2 + x2 - 2.0 * jnp.sqrt(x2 * y2)
    logd = 0.5 * jnp.abs(jnp.log(y2) - jnp.log(x2))

    # Mask invalid frame rows (beyond n_frames they alias neighbouring chunk
    # data), the packed column 0 (handled separately below) and the padded
    # columns >= nb AFTER the clamp, so every padded element contributes
    # exactly 0 and no host-side correction constants are needed.
    row = jax.lax.broadcasted_iota(jnp.int32, (tf, 1), 0) + i * tf
    rowv = (row < n_frames).astype(jnp.float32)
    col = jax.lax.broadcasted_iota(jnp.int32, (1, nbp), 1)
    colv = jnp.logical_and(col >= 1, col < nb).astype(jnp.float32)
    m = rowv * colv

    od = jnp.sum(d2 * m, axis=0, keepdims=True)       # (1, nbp)
    oy = jnp.sum(y2 * m, axis=0, keepdims=True)
    ol = jnp.sum(logd * m, axis=0, keepdims=True)

    # DC (col 0 of the cos half) and Nyquist (col 0 of the sin half, whose own
    # imag basis is identically zero) are the two purely-real bins removed from
    # the complex path; fold their contributions into output column 0.
    def _real_bin(a, c):
        a2 = jnp.maximum(a * a, 1e-7)
        c2 = jnp.maximum(c * c, 1e-7)
        dd = c2 + a2 - 2.0 * jnp.sqrt(a2 * c2)
        ll = 0.5 * jnp.abs(jnp.log(c2) - jnp.log(a2))
        return dd, c2, ll

    d_dc, y_dc, l_dc = _real_bin(xr[:, 0:1], yr[:, 0:1])
    d_ny, y_ny, l_ny = _real_bin(xi[:, 0:1], yi[:, 0:1])
    col0 = (col == 0).astype(jnp.float32)
    od = od + jnp.sum((d_dc + d_ny) * rowv, axis=0, keepdims=True) * col0
    oy = oy + jnp.sum((y_dc + y_ny) * rowv, axis=0, keepdims=True) * col0
    ol = ol + jnp.sum((l_dc + l_ny) * rowv, axis=0, keepdims=True) * col0

    o_ref[...] = jnp.concatenate([od, oy, ol], axis=-1).reshape(o_ref.shape)


# ------------------------------- JAX glue ----------------------------------- #
def _hann_window(n):
    # torch.hann_window(n) (periodic): 0.5 - 0.5*cos(2*pi*k/n)
    k = jnp.arange(n, dtype=jnp.float32)
    return 0.5 - 0.5 * jnp.cos(2.0 * jnp.pi * k / n)


def _padded_window(fft_size, win_length):
    w = _hann_window(win_length)
    left = (fft_size - win_length) // 2
    return jnp.pad(w, (left, fft_size - win_length - left))


def _reflect_pad(sig, fft_size):
    pad = fft_size // 2
    return jnp.pad(sig, ((0, 0), (pad, pad)), mode="reflect")


def _dft_basis_blocks(fft_size, win_length, hop, chunk, r, nb, nbp):
    """Window-folded rDFT basis laid out as (r, chunk, 2*nbp) per-shift blocks.

    Cols [0, nbp): w*cos (real part), col 0 = DC.  Cols [nbp, 2*nbp): -w*sin
    (imag part); col nbp+0 carries the Nyquist real basis w*(-1)^n instead
    (its own imag value is identically zero).  Rows of shift block j map to
    padded-signal samples j*hop + t, t in [0, hop); rows past the fft window
    (and past hop inside a sublane-padded chunk) are zero.
    """
    w = _padded_window(fft_size, win_length)
    n = jnp.arange(fft_size, dtype=jnp.float32)[:, None]
    k = jnp.arange(nb, dtype=jnp.float32)[None, :]
    ang = 2.0 * jnp.pi * n * k / fft_size
    cosb = w[:, None] * jnp.cos(ang)
    sinb = -w[:, None] * jnp.sin(ang)
    nyq = w * jnp.cos(jnp.pi * jnp.arange(fft_size, dtype=jnp.float32))
    sinb = sinb.at[:, 0].set(nyq)

    flat = jnp.zeros((fft_size, 2 * nbp), jnp.float32)
    flat = flat.at[:, :nb].set(cosb)
    flat = flat.at[:, nbp:nbp + nb].set(sinb)

    blocks = jnp.zeros((r, chunk, 2 * nbp), jnp.float32)
    for j in range(r):
        nrow = min(hop, fft_size - j * hop)
        blocks = blocks.at[j, :nrow, :].set(flat[j * hop:j * hop + nrow, :])
    return blocks


def stft_loss(x, y, fft_size=1024, shift_size=120, win_length=600,
              tile_frames=None, precision="bf16_hilo"):
    """Pallas STFTLoss.forward.  x, y: (B, T) float32.  Returns (sc_loss, mag_loss).

    precision: "bf16_hilo" (default: bf16 signal + hi/lo-split bf16 basis,
    two accumulating MXU passes), "bf16" (single pass, fastest) or "f32".
    """
    assert x.shape == y.shape and x.ndim == 2
    b, _ = x.shape
    hop = shift_size
    n_bins = fft_size // 2 + 1
    nb = fft_size // 2                 # complex bins on the MXU (DC/Nyquist packed into col 0)
    nbp = _round_up(nb, 128)

    r = _cdiv(fft_size, hop)           # chunks per frame (general hop supported)
    chunk = _round_up(hop, 8)          # sublane-aligned chunk width

    # ---- window-folded basis blocks, optional bf16 hi/lo split ----
    basis = _dft_basis_blocks(fft_size, win_length, hop, chunk, r, nb, nbp)
    if precision == "f32":
        basis_parts = [basis]
        sig_dtype = jnp.float32
    elif precision == "bf16":
        basis_parts = [basis.astype(jnp.bfloat16)]
        sig_dtype = jnp.bfloat16
    else:  # "bf16_hilo"
        b_hi = basis.astype(jnp.bfloat16)
        b_lo = (basis - b_hi.astype(jnp.float32)).astype(jnp.bfloat16)
        basis_parts = [b_hi, b_lo]
        sig_dtype = jnp.bfloat16
    n_basis = len(basis_parts)

    # ---- signal -> non-overlapping hop-wide chunks (no framed-tensor blowup) ----
    xp = _reflect_pad(x.astype(jnp.float32), fft_size)
    yp = _reflect_pad(y.astype(jnp.float32), fft_size)
    t_pad = xp.shape[1]
    n_frames = 1 + (t_pad - fft_size) // hop
    n_chunks = n_frames + r - 1
    need = n_chunks * hop
    if need > t_pad:
        xp = jnp.pad(xp, ((0, 0), (0, need - t_pad)))
        yp = jnp.pad(yp, ((0, 0), (0, need - t_pad)))
    xc = xp[:, :need].reshape(b, n_chunks, hop)
    yc = yp[:, :need].reshape(b, n_chunks, hop)
    if chunk != hop:
        xc = jnp.pad(xc, ((0, 0), (0, 0), (0, chunk - hop)))
        yc = jnp.pad(yc, ((0, 0), (0, 0), (0, chunk - hop)))
    xc = xc.astype(sig_dtype)
    yc = yc.astype(sig_dtype)

    # ---- generation-aware tiling / VMEM limit ----
    try:
        vmem_cap = getattr(pltpu.get_tpu_info(), "vmem_capacity_bytes",
                           64 * 1024 * 1024)
    except Exception:
        vmem_cap = 64 * 1024 * 1024
    vmem_limit = int(max(32 * 1024 * 1024,
                         min(vmem_cap - 16 * 1024 * 1024, 112 * 1024 * 1024)))
    if tile_frames is None:
        tile_frames = 512 if vmem_cap >= 96 * 1024 * 1024 else 256

    ext = _round_up(max(r - 1, 1), 16)          # overlap-tail rows, aligned
    tf = _round_up(min(tile_frames, n_frames), ext)
    n_tiles = _cdiv(n_frames, tf)
    if b * n_tiles < 2 and n_frames > ext:
        # v7x megacore: make sure both TensorCores get at least one grid point.
        tf = _round_up(_cdiv(n_frames, 2), ext)
        n_tiles = _cdiv(n_frames, tf)
    step_b = tf // ext

    n_chunks_p = n_tiles * tf + ext
    pad_c = n_chunks_p - xc.shape[1]
    if pad_c > 0:
        xc = jnp.pad(xc, ((0, 0), (0, pad_c), (0, 0)))
        yc = jnp.pad(yc, ((0, 0), (0, pad_c), (0, 0)))

    kernel = functools.partial(_stft_loss_kernel, r=r, chunk=chunk, tf=tf,
                               ext=ext, nbp=nbp, nb=nb, n_frames=n_frames,
                               n_basis=n_basis)

    chunk_spec = pl.BlockSpec((1, tf, chunk), lambda bb, i: (bb, i, 0))
    tail_spec = pl.BlockSpec((1, ext, chunk),
                             lambda bb, i: (bb, (i + 1) * step_b, 0))
    basis_spec = pl.BlockSpec((r, chunk, 2 * nbp), lambda bb, i: (0, 0, 0))

    out = pl.pallas_call(
        kernel,
        out_shape=jax.ShapeDtypeStruct((b, n_tiles, 3 * nbp), jnp.float32),
        grid_spec=pltpu.PrefetchScalarGridSpec(
            num_scalar_prefetch=0,
            grid=(b, n_tiles),
            in_specs=[chunk_spec, tail_spec, chunk_spec, tail_spec]
                     + [basis_spec] * n_basis,
            out_specs=pl.BlockSpec((1, 1, 3 * nbp), lambda bb, i: (bb, i, 0)),
            scratch_shapes=[
                pltpu.VMEM((tf + ext, chunk), sig_dtype),   # staged x chunks
                pltpu.VMEM((tf + ext, chunk), sig_dtype),   # staged y chunks
                pltpu.VMEM((tf, 2 * nbp), jnp.float32),     # x spectrum acc
                pltpu.VMEM((tf, 2 * nbp), jnp.float32),     # y spectrum acc
            ],
        ),
        compiler_params=pltpu.CompilerParams(
            dimension_semantics=("parallel", "parallel"),
            vmem_limit_bytes=vmem_limit),
    )(xc, xc, yc, yc, *basis_parts)

    # Host-side finish: all padded/invalid elements contribute exactly 0.
    sd = jnp.sum(out[..., 0:nbp])
    sy = jnp.sum(out[..., nbp:2 * nbp])
    sl = jnp.sum(out[..., 2 * nbp:])
    sc_loss = jnp.sqrt(sd) / jnp.sqrt(sy)
    mag_loss = sl / (b * n_frames * n_bins)
    return sc_loss, mag_loss


# --------------------------- pure-JAX reference ------------------------------ #
def stft_loss_ref(x, y, fft_size, shift_size, win_length):
    win = _padded_window(fft_size, win_length)

    def mag(sig):
        sp = _reflect_pad(sig.astype(jnp.float32), fft_size)
        n_frames = 1 + (sp.shape[1] - fft_size) // shift_size
        idx = (jnp.arange(n_frames)[:, None] * shift_size
               + jnp.arange(fft_size)[None, :])
        fr = sp[:, idx] * win
        spec = jnp.fft.rfft(fr, n=fft_size, axis=-1)
        return jnp.sqrt(jnp.maximum(jnp.real(spec) ** 2 + jnp.imag(spec) ** 2, 1e-7))

    xm, ym = mag(x), mag(y)
    sc = jnp.sqrt(jnp.sum((ym - xm) ** 2)) / jnp.sqrt(jnp.sum(ym ** 2))
    mg = jnp.mean(jnp.abs(jnp.log(ym) - jnp.log(xm)))
    return sc, mg


if __name__ == "__main__":
    key = jax.random.PRNGKey(0)
    kx, ky = jax.random.split(key)
    B, T = 2, 800                    # small shapes; STFT params scaled down accordingly
    FFT, HOP, WIN = 128, 32, 64

    x = jax.random.normal(kx, (B, T), dtype=jnp.float32)
    y = jax.random.normal(ky, (B, T), dtype=jnp.float32)

    sc, mag = stft_loss(x, y, fft_size=FFT, shift_size=HOP, win_length=WIN)
    sc, mag = jax.block_until_ready(sc), jax.block_until_ready(mag)

    sc_r, mag_r = stft_loss_ref(x, y, FFT, HOP, WIN)
    assert jnp.allclose(sc, sc_r, rtol=2e-3, atol=1e-4), (sc, sc_r)
    assert jnp.allclose(mag, mag_r, rtol=2e-3, atol=1e-4), (mag, mag_r)

    print("KERNEL_OK")
</pallas_src>

<mosaic_0001>
module attributes {stable_mosaic.version = 11 : i64} {
  func.func @_stft_loss_kernel(%arg0: i32, %arg1: i32, %arg2: memref<1x32x32xbf16, #tpu.memory_space<vmem>>, %arg3: memref<1x16x32xbf16, #tpu.memory_space<vmem>>, %arg4: memref<1x32x32xbf16, #tpu.memory_space<vmem>>, %arg5: memref<1x16x32xbf16, #tpu.memory_space<vmem>>, %arg6: memref<4x32x256xbf16, #tpu.memory_space<vmem>>, %arg7: memref<4x32x256xbf16, #tpu.memory_space<vmem>>, %arg8: memref<1x1x384xf32, #tpu.memory_space<vmem>>, %arg9: memref<48x32xbf16, #tpu.memory_space<vmem>>, %arg10: memref<48x32xbf16, #tpu.memory_space<vmem>>, %arg11: memref<32x256xf32, #tpu.memory_space<vmem>>, %arg12: memref<32x256xf32, #tpu.memory_space<vmem>>) attributes {dimension_semantics = [#tpu.dimension_semantics<parallel>, #tpu.dimension_semantics<parallel>], iteration_bounds = array<i64: 2, 1>, scalar_prefetch = 0 : i64, scratch_operands = 4 : i64, tpu.core_type = #tpu.core_type<tc>, window_params = [{transform_indices = @transform_0, window_bounds = array<i64: 1, 32, 32>}, {transform_indices = @transform_1, window_bounds = array<i64: 1, 16, 32>}, {transform_indices = @transform_2, window_bounds = array<i64: 1, 32, 32>}, {transform_indices = @transform_3, window_bounds = array<i64: 1, 16, 32>}, {pipeline_mode = #tpu.pipeline_mode<synchronous>, transform_indices = @transform_4, window_bounds = array<i64: 4, 32, 256>}, {pipeline_mode = #tpu.pipeline_mode<synchronous>, transform_indices = @transform_5, window_bounds = array<i64: 4, 32, 256>}, {transform_indices = @transform_6, window_bounds = array<i64: 1, 1, 384>}]} {
    %c0 = arith.constant 0 : index
    %c0_0 = arith.constant 0 : index
    %c0_1 = arith.constant 0 : index
    %0 = vector.load %arg2[%c0, %c0_0, %c0_1] : memref<1x32x32xbf16, #tpu.memory_space<vmem>>, vector<1x32x32xbf16>
    %1 = vector.shape_cast %0 : vector<1x32x32xbf16> to vector<32x32xbf16>
    %c0_2 = arith.constant 0 : index
    %c0_3 = arith.constant 0 : index
    %2 = vector.load %arg9[%c0_2, %c0_3] : memref<48x32xbf16, #tpu.memory_space<vmem>>, vector<32x32xbf16>
    tpu.vector_store %arg9[%c0_2, %c0_3], %1 {strides = array<i32>} : memref<48x32xbf16, #tpu.memory_space<vmem>>, vector<32x32xbf16>,
    %c0_4 = arith.constant 0 : index
    %c0_5 = arith.constant 0 : index
    %c0_6 = arith.constant 0 : index
    %3 = vector.load %arg3[%c0_4, %c0_5, %c0_6] : memref<1x16x32xbf16, #tpu.memory_space<vmem>>, vector<1x16x32xbf16>
    %4 = vector.shape_cast %3 : vector<1x16x32xbf16> to vector<16x32xbf16>
    %c32 = arith.constant 32 : index
    %c0_7 = arith.constant 0 : index
    %5 = vector.load %arg9[%c32, %c0_7] : memref<48x32xbf16, #tpu.memory_space<vmem>>, vector<16x32xbf16>
    tpu.vector_store %arg9[%c32, %c0_7], %4 {strides = array<i32>} : memref<48x32xbf16, #tpu.memory_space<vmem>>, vector<16x32xbf16>,
    %c0_8 = arith.constant 0 : index
    %c0_9 = arith.constant 0 : index
    %c0_10 = arith.constant 0 : index
    %6 = vector.load %arg4[%c0_8, %c0_9, %c0_10] : memref<1x32x32xbf16, #tpu.memory_space<vmem>>, vector<1x32x32xbf16>
    %7 = vector.shape_cast %6 : vector<1x32x32xbf16> to vector<32x32xbf16>
    %c0_11 = arith.constant 0 : index
    %c0_12 = arith.constant 0 : index
    %8 = vector.load %arg10[%c0_11, %c0_12] : memref<48x32xbf16, #tpu.memory_space<vmem>>, vector<32x32xbf16>
    tpu.vector_store %arg10[%c0_11, %c0_12], %7 {strides = array<i32>} : memref<48x32xbf16, #tpu.memory_space<vmem>>, vector<32x32xbf16>,
    %c0_13 = arith.constant 0 : index
    %c0_14 = arith.constant 0 : index
    %c0_15 = arith.constant 0 : index
    %9 = vector.load %arg5[%c0_13, %c0_14, %c0_15] : memref<1x16x32xbf16, #tpu.memory_space<vmem>>, vector<1x16x32xbf16>
    %10 = vector.shape_cast %9 : vector<1x16x32xbf16> to vector<16x32xbf16>
    %c32_16 = arith.constant 32 : index
    %c0_17 = arith.constant 0 : index
    %11 = vector.load %arg10[%c32_16, %c0_17] : memref<48x32xbf16, #tpu.memory_space<vmem>>, vector<16x32xbf16>
    tpu.vector_store %arg10[%c32_16, %c0_17], %10 {strides = array<i32>} : memref<48x32xbf16, #tpu.memory_space<vmem>>, vector<16x32xbf16>,
    %c0_18 = arith.constant 0 : index
    %c0_19 = arith.constant 0 : index
    %12 = vector.load %arg9[%c0_18, %c0_19] : memref<48x32xbf16, #tpu.memory_space<vmem>>, vector<32x32xbf16>
    %c0_20 = arith.constant 0 : index
    %c0_21 = arith.constant 0 : index
    %13 = vector.load %arg10[%c0_20, %c0_21] : memref<48x32xbf16, #tpu.memory_space<vmem>>, vector<32x32xbf16>
    %c0_22 = arith.constant 0 : index
    %c0_23 = arith.constant 0 : index
    %c0_24 = arith.constant 0 : index
    %14 = vector.load %arg6[%c0_22, %c0_23, %c0_24] : memref<4x32x256xbf16, #tpu.memory_space<vmem>>, vector<1x32x256xbf16>
    %15 = vector.shape_cast %14 : vector<1x32x256xbf16> to vector<32x256xbf16>
    %cst = arith.constant dense<0.000000e+00> : vector<32x256xf32>
    %16 = tpu.matmul %12, %15, %cst {dimension_numbers = #tpu.dot_dimension_numbers<[1], [0], [0], [1], [0, 0, 1, 1], [], []>} : vector<32x32xbf16>, vector<32x256xbf16>, vector<32x256xf32> -> vector<32x256xf32>
    %cst_25 = arith.constant dense<0.000000e+00> : vector<32x256xf32>
    %17 = tpu.matmul %13, %15, %cst_25 {dimension_numbers = #tpu.dot_dimension_numbers<[1], [0], [0], [1], [0, 0, 1, 1], [], []>} : vector<32x32xbf16>, vector<32x256xbf16>, vector<32x256xf32> -> vector<32x256xf32>
    %c0_26 = arith.constant 0 : index
    %c0_27 = arith.constant 0 : index
    %18 = vector.load %arg11[%c0_26, %c0_27] : memref<32x256xf32, #tpu.memory_space<vmem>>, vector<32x256xf32>
    tpu.vector_store %arg11[%c0_26, %c0_27], %16 {strides = array<i32>} : memref<32x256xf32, #tpu.memory_space<vmem>>, vector<32x256xf32>,
    %c0_28 = arith.constant 0 : index
    %c0_29 = arith.constant 0 : index
    %19 = vector.load %arg12[%c0_28, %c0_29] : memref<32x256xf32, #tpu.memory_space<vmem>>, vector<32x256xf32>
    tpu.vector_store %arg12[%c0_28, %c0_29], %17 {strides = array<i32>} : memref<32x256xf32, #tpu.memory_space<vmem>>, vector<32x256xf32>,
    %c0_30 = arith.constant 0 : index
    %c0_31 = arith.constant 0 : index
    %c0_32 = arith.constant 0 : index
    %20 = vector.load %arg7[%c0_30, %c0_31, %c0_32] : memref<4x32x256xbf16, #tpu.memory_space<vmem>>, vector<1x32x256xbf16>
    %21 = vector.shape_cast %20 : vector<1x32x256xbf16> to vector<32x256xbf16>
    %cst_33 = arith.constant dense<0.000000e+00> : vector<32x256xf32>
    %22 = tpu.matmul %12, %21, %cst_33 {dimension_numbers = #tpu.dot_dimension_numbers<[1], [0], [0], [1], [0, 0, 1, 1], [], []>} : vector<32x32xbf16>, vector<32x256xbf16>, vector<32x256xf32> -> vector<32x256xf32>
    %cst_34 = arith.constant dense<0.000000e+00> : vector<32x256xf32>
    %23 = tpu.matmul %13, %21, %cst_34 {dimension_numbers = #tpu.dot_dimension_numbers<[1], [0], [0], [1], [0, 0, 1, 1], [], []>} : vector<32x32xbf16>, vector<32x256xbf16>, vector<32x256xf32> -> vector<32x256xf32>
    %c0_35 = arith.constant 0 : index
    %c0_36 = arith.constant 0 : index
    %24 = vector.load %arg11[%c0_35, %c0_36] : memref<32x256xf32, #tpu.memory_space<vmem>>, vector<32x256xf32>
    %25 = arith.addf %24, %22 : vector<32x256xf32>
    %c0_37 = arith.constant 0 : index
    %c0_38 = arith.constant 0 : index
    %26 = vector.load %arg11[%c0_37, %c0_38] : memref<32x256xf32, #tpu.memory_space<vmem>>, vector<32x256xf32>
    tpu.vector_store %arg11[%c0_37, %c0_38], %25 {strides = array<i32>} : memref<32x256xf32, #tpu.memory_space<vmem>>, vector<32x256xf32>,
    %c0_39 = arith.constant 0 : index
    %c0_40 = arith.constant 0 : index
    %27 = vector.load %arg12[%c0_39, %c0_40] : memref<32x256xf32, #tpu.memory_space<vmem>>, vector<32x256xf32>
    %28 = arith.addf %27, %23 : vector<32x256xf32>
    %c0_41 = arith.constant 0 : index
    %c0_42 = arith.constant 0 : index
    %29 = vector.load %arg12[%c0_41, %c0_42] : memref<32x256xf32, #tpu.memory_space<vmem>>, vector<32x256xf32>
    tpu.vector_store %arg12[%c0_41, %c0_42], %28 {strides = array<i32>} : memref<32x256xf32, #tpu.memory_space<vmem>>, vector<32x256xf32>,
    %c1 = arith.constant 1 : index
    %c0_43 = arith.constant 0 : index
    %30 = vector.load %arg9[%c1, %c0_43] : memref<48x32xbf16, #tpu.memory_space<vmem>>, vector<32x32xbf16>
    %c1_44 = arith.constant 1 : index
    %c0_45 = arith.constant 0 : index
    %31 = vector.load %arg10[%c1_44, %c0_45] : memref<48x32xbf16, #tpu.memory_space<vmem>>, vector<32x32xbf16>
    %c1_46 = arith.constant 1 : index
    %c0_47 = arith.constant 0 : index
    %c0_48 = arith.constant 0 : index
    %32 = vector.load %arg6[%c1_46, %c0_47, %c0_48] : memref<4x32x256xbf16, #tpu.memory_space<vmem>>, vector<1x32x256xbf16>
    %33 = vector.shape_cast %32 : vector<1x32x256xbf16> to vector<32x256xbf16>
    %cst_49 = arith.constant dense<0.000000e+00> : vector<32x256xf32>
    %34 = tpu.matmul %30, %33, %cst_49 {dimension_numbers = #tpu.dot_dimension_numbers<[1], [0], [0], [1], [0, 0, 1, 1], [], []>} : vector<32x32xbf16>, vector<32x256xbf16>, vector<32x256xf32> -> vector<32x256xf32>
    %cst_50 = arith.constant dense<0.000000e+00> : vector<32x256xf32>
    %35 = tpu.matmul %31, %33, %cst_50 {dimension_numbers = #tpu.dot_dimension_numbers<[1], [0], [0], [1], [0, 0, 1, 1], [], []>} : vector<32x32xbf16>, vector<32x256xbf16>, vector<32x256xf32> -> vector<32x256xf32>
    %c0_51 = arith.constant 0 : index
    %c0_52 = arith.constant 0 : index
    %36 = vector.load %arg11[%c0_51, %c0_52] : memref<32x256xf32, #tpu.memory_space<vmem>>, vector<32x256xf32>
    %37 = arith.addf %36, %34 : vector<32x256xf32>
    %c0_53 = arith.constant 0 : index
    %c0_54 = arith.constant 0 : index
    %38 = vector.load %arg11[%c0_53, %c0_54] : memref<32x256xf32, #tpu.memory_space<vmem>>, vector<32x256xf32>
    tpu.vector_store %arg11[%c0_53, %c0_54], %37 {strides = array<i32>} : memref<32x256xf32, #tpu.memory_space<vmem>>, vector<32x256xf32>,
    %c0_55 = arith.constant 0 : index
    %c0_56 = arith.constant 0 : index
    %39 = vector.load %arg12[%c0_55, %c0_56] : memref<32x256xf32, #tpu.memory_space<vmem>>, vector<32x256xf32>
    %40 = arith.addf %39, %35 : vector<32x256xf32>
    %c0_57 = arith.constant 0 : index
    %c0_58 = arith.constant 0 : index
    %41 = vector.load %arg12[%c0_57, %c0_58] : memref<32x256xf32, #tpu.memory_space<vmem>>, vector<32x256xf32>
    tpu.vector_store %arg12[%c0_57, %c0_58], %40 {strides = array<i32>} : memref<32x256xf32, #tpu.memory_space<vmem>>, vector<32x256xf32>,
    %c1_59 = arith.constant 1 : index
    %c0_60 = arith.constant 0 : index
    %c0_61 = arith.constant 0 : index
    %42 = vector.load %arg7[%c1_59, %c0_60, %c0_61] : memref<4x32x256xbf16, #tpu.memory_space<vmem>>, vector<1x32x256xbf16>
    %43 = vector.shape_cast %42 : vector<1x32x256xbf16> to vector<32x256xbf16>
    %cst_62 = arith.constant dense<0.000000e+00> : vector<32x256xf32>
    %44 = tpu.matmul %30, %43, %cst_62 {dimension_numbers = #tpu.dot_dimension_numbers<[1], [0], [0], [1], [0, 0, 1, 1], [], []>} : vector<32x32xbf16>, vector<32x256xbf16>, vector<32x256xf32> -> vector<32x256xf32>
    %cst_63 = arith.constant dense<0.000000e+00> : vector<32x256xf32>
    %45 = tpu.matmul %31, %43, %cst_63 {dimension_numbers = #tpu.dot_dimension_numbers<[1], [0], [0], [1], [0, 0, 1, 1], [], []>} : vector<32x32xbf16>, vector<32x256xbf16>, vector<32x256xf32> -> vector<32x256xf32>
    %c0_64 = arith.constant 0 : index
    %c0_65 = arith.constant 0 : index
    %46 = vector.load %arg11[%c0_64, %c0_65] : memref<32x256xf32, #tpu.memory_space<vmem>>, vector<32x256xf32>
    %47 = arith.addf %46, %44 : vector<32x256xf32>
    %c0_66 = arith.constant 0 : index
    %c0_67 = arith.constant 0 : index
    %48 = vector.load %arg11[%c0_66, %c0_67] : memref<32x256xf32, #tpu.memory_space<vmem>>, vector<32x256xf32>
    tpu.vector_store %arg11[%c0_66, %c0_67], %47 {strides = array<i32>} : memref<32x256xf32, #tpu.memory_space<vmem>>, vector<32x256xf32>,
    %c0_68 = arith.constant 0 : index
    %c0_69 = arith.constant 0 : index
    %49 = vector.load %arg12[%c0_68, %c0_69] : memref<32x256xf32, #tpu.memory_space<vmem>>, vector<32x256xf32>
    %50 = arith.addf %49, %45 : vector<32x256xf32>
    %c0_70 = arith.constant 0 : index
    %c0_71 = arith.constant 0 : index
    %51 = vector.load %arg12[%c0_70, %c0_71] : memref<32x256xf32, #tpu.memory_space<vmem>>, vector<32x256xf32>
    tpu.vector_store %arg12[%c0_70, %c0_71], %50 {strides = array<i32>} : memref<32x256xf32, #tpu.memory_space<vmem>>, vector<32x256xf32>,
    %c2 = arith.constant 2 : index
    %c0_72 = arith.constant 0 : index
    %52 = vector.load %arg9[%c2, %c0_72] : memref<48x32xbf16, #tpu.memory_space<vmem>>, vector<32x32xbf16>
    %c2_73 = arith.constant 2 : index
    %c0_74 = arith.constant 0 : index
    %53 = vector.load %arg10[%c2_73, %c0_74] : memref<48x32xbf16, #tpu.memory_space<vmem>>, vector<32x32xbf16>
    %c2_75 = arith.constant 2 : index
    %c0_76 = arith.constant 0 : index
    %c0_77 = arith.constant 0 : index
    %54 = vector.load %arg6[%c2_75, %c0_76, %c0_77] : memref<4x32x256xbf16, #tpu.memory_space<vmem>>, vector<1x32x256xbf16>
    %55 = vector.shape_cast %54 : vector<1x32x256xbf16> to vector<32x256xbf16>
    %cst_78 = arith.constant dense<0.000000e+00> : vector<32x256xf32>
    %56 = tpu.matmul %52, %55, %cst_78 {dimension_numbers = #tpu.dot_dimension_numbers<[1], [0], [0], [1], [0, 0, 1, 1], [], []>} : vector<32x32xbf16>, vector<32x256xbf16>, vector<32x256xf32> -> vector<32x256xf32>
    %cst_79 = arith.constant dense<0.000000e+00> : vector<32x256xf32>
    %57 = tpu.matmul %53, %55, %cst_79 {dimension_numbers = #tpu.dot_dimension_numbers<[1], [0], [0], [1], [0, 0, 1, 1], [], []>} : vector<32x32xbf16>, vector<32x256xbf16>, vector<32x256xf32> -> vector<32x256xf32>
    %c0_80 = arith.constant 0 : index
    %c0_81 = arith.constant 0 : index
    %58 = vector.load %arg11[%c0_80, %c0_81] : memref<32x256xf32, #tpu.memory_space<vmem>>, vector<32x256xf32>
    %59 = arith.addf %58, %56 : vector<32x256xf32>
    %c0_82 = arith.constant 0 : index
    %c0_83 = arith.constant 0 : index
    %60 = vector.load %arg11[%c0_82, %c0_83] : memref<32x256xf32, #tpu.memory_space<vmem>>, vector<32x256xf32>
    tpu.vector_store %arg11[%c0_82, %c0_83], %59 {strides = array<i32>} : memref<32x256xf32, #tpu.memory_space<vmem>>, vector<32x256xf32>,
    %c0_84 = arith.constant 0 : index
    %c0_85 = arith.constant 0 : index
    %61 = vector.load %arg12[%c0_84, %c0_85] : memref<32x256xf32, #tpu.memory_space<vmem>>, vector<32x256xf32>
    %62 = arith.addf %61, %57 : vector<32x256xf32>
    %c0_86 = arith.constant 0 : index
    %c0_87 = arith.constant 0 : index
    %63 = vector.load %arg12[%c0_86, %c0_87] : memref<32x256xf32, #tpu.memory_space<vmem>>, vector<32x256xf32>
    tpu.vector_store %arg12[%c0_86, %c0_87], %62 {strides = array<i32>} : memref<32x256xf32, #tpu.memory_space<vmem>>, vector<32x256xf32>,
    %c2_88 = arith.constant 2 : index
    %c0_89 = arith.constant 0 : index
    %c0_90 = arith.constant 0 : index
    %64 = vector.load %arg7[%c2_88, %c0_89, %c0_90] : memref<4x32x256xbf16, #tpu.memory_space<vmem>>, vector<1x32x256xbf16>
    %65 = vector.shape_cast %64 : vector<1x32x256xbf16> to vector<32x256xbf16>
    %cst_91 = arith.constant dense<0.000000e+00> : vector<32x256xf32>
    %66 = tpu.matmul %52, %65, %cst_91 {dimension_numbers = #tpu.dot_dimension_numbers<[1], [0], [0], [1], [0, 0, 1, 1], [], []>} : vector<32x32xbf16>, vector<32x256xbf16>, vector<32x256xf32> -> vector<32x256xf32>
    %cst_92 = arith.constant dense<0.000000e+00> : vector<32x256xf32>
    %67 = tpu.matmul %53, %65, %cst_92 {dimension_numbers = #tpu.dot_dimension_numbers<[1], [0], [0], [1], [0, 0, 1, 1], [], []>} : vector<32x32xbf16>, vector<32x256xbf16>, vector<32x256xf32> -> vector<32x256xf32>
    %c0_93 = arith.constant 0 : index
    %c0_94 = arith.constant 0 : index
    %68 = vector.load %arg11[%c0_93, %c0_94] : memref<32x256xf32, #tpu.memory_space<vmem>>, vector<32x256xf32>
    %69 = arith.addf %68, %66 : vector<32x256xf32>
    %c0_95 = arith.constant 0 : index
    %c0_96 = arith.constant 0 : index
    %70 = vector.load %arg11[%c0_95, %c0_96] : memref<32x256xf32, #tpu.memory_space<vmem>>, vector<32x256xf32>
    tpu.vector_store %arg11[%c0_95, %c0_96], %69 {strides = array<i32>} : memref<32x256xf32, #tpu.memory_space<vmem>>, vector<32x256xf32>,
    %c0_97 = arith.constant 0 : index
    %c0_98 = arith.constant 0 : index
    %71 = vector.load %arg12[%c0_97, %c0_98] : memref<32x256xf32, #tpu.memory_space<vmem>>, vector<32x256xf32>
    %72 = arith.addf %71, %67 : vector<32x256xf32>
    %c0_99 = arith.constant 0 : index
    %c0_100 = arith.constant 0 : index
    %73 = vector.load %arg12[%c0_99, %c0_100] : memref<32x256xf32, #tpu.memory_space<vmem>>, vector<32x256xf32>
    tpu.vector_store %arg12[%c0_99, %c0_100], %72 {strides = array<i32>} : memref<32x256xf32, #tpu.memory_space<vmem>>, vector<32x256xf32>,
    %c3 = arith.constant 3 : index
    %c0_101 = arith.constant 0 : index
    %74 = vector.load %arg9[%c3, %c0_101] : memref<48x32xbf16, #tpu.memory_space<vmem>>, vector<32x32xbf16>
    %c3_102 = arith.constant 3 : index
    %c0_103 = arith.constant 0 : index
    %75 = vector.load %arg10[%c3_102, %c0_103] : memref<48x32xbf16, #tpu.memory_space<vmem>>, vector<32x32xbf16>
    %c3_104 = arith.constant 3 : index
    %c0_105 = arith.constant 0 : index
    %c0_106 = arith.constant 0 : index
    %76 = vector.load %arg6[%c3_104, %c0_105, %c0_106] : memref<4x32x256xbf16, #tpu.memory_space<vmem>>, vector<1x32x256xbf16>
    %77 = vector.shape_cast %76 : vector<1x32x256xbf16> to vector<32x256xbf16>
    %cst_107 = arith.constant dense<0.000000e+00> : vector<32x256xf32>
    %78 = tpu.matmul %74, %77, %cst_107 {dimension_numbers = #tpu.dot_dimension_numbers<[1], [0], [0], [1], [0, 0, 1, 1], [], []>} : vector<32x32xbf16>, vector<32x256xbf16>, vector<32x256xf32> -> vector<32x256xf32>
    %cst_108 = arith.constant dense<0.000000e+00> : vector<32x256xf32>
    %79 = tpu.matmul %75, %77, %cst_108 {dimension_numbers = #tpu.dot_dimension_numbers<[1], [0], [0], [1], [0, 0, 1, 1], [], []>} : vector<32x32xbf16>, vector<32x256xbf16>, vector<32x256xf32> -> vector<32x256xf32>
    %c0_109 = arith.constant 0 : index
    %c0_110 = arith.constant 0 : index
    %80 = vector.load %arg11[%c0_109, %c0_110] : memref<32x256xf32, #tpu.memory_space<vmem>>, vector<32x256xf32>
    %81 = arith.addf %80, %78 : vector<32x256xf32>
    %c0_111 = arith.constant 0 : index
    %c0_112 = arith.constant 0 : index
    %82 = vector.load %arg11[%c0_111, %c0_112] : memref<32x256xf32, #tpu.memory_space<vmem>>, vector<32x256xf32>
    tpu.vector_store %arg11[%c0_111, %c0_112], %81 {strides = array<i32>} : memref<32x256xf32, #tpu.memory_space<vmem>>, vector<32x256xf32>,
    %c0_113 = arith.constant 0 : index
    %c0_114 = arith.constant 0 : index
    %83 = vector.load %arg12[%c0_113, %c0_114] : memref<32x256xf32, #tpu.memory_space<vmem>>, vector<32x256xf32>
    %84 = arith.addf %83, %79 : vector<32x256xf32>
    %c0_115 = arith.constant 0 : index
    %c0_116 = arith.constant 0 : index
    %85 = vector.load %arg12[%c0_115, %c0_116] : memref<32x256xf32, #tpu.memory_space<vmem>>, vector<32x256xf32>
    tpu.vector_store %arg12[%c0_115, %c0_116], %84 {strides = array<i32>} : memref<32x256xf32, #tpu.memory_space<vmem>>, vector<32x256xf32>,
    %c3_117 = arith.constant 3 : index
    %c0_118 = arith.constant 0 : index
    %c0_119 = arith.constant 0 : index
    %86 = vector.load %arg7[%c3_117, %c0_118, %c0_119] : memref<4x32x256xbf16, #tpu.memory_space<vmem>>, vector<1x32x256xbf16>
    %87 = vector.shape_cast %86 : vector<1x32x256xbf16> to vector<32x256xbf16>
    %cst_120 = arith.constant dense<0.000000e+00> : vector<32x256xf32>
    %88 = tpu.matmul %74, %87, %cst_120 {dimension_numbers = #tpu.dot_dimension_numbers<[1], [0], [0], [1], [0, 0, 1, 1], [], []>} : vector<32x32xbf16>, vector<32x256xbf16>, vector<32x256xf32> -> vector<32x256xf32>
    %cst_121 = arith.constant dense<0.000000e+00> : vector<32x256xf32>
    %89 = tpu.matmul %75, %87, %cst_121 {dimension_numbers = #tpu.dot_dimension_numbers<[1], [0], [0], [1], [0, 0, 1, 1], [], []>} : vector<32x32xbf16>, vector<32x256xbf16>, vector<32x256xf32> -> vector<32x256xf32>
    %c0_122 = arith.constant 0 : index
    %c0_123 = arith.constant 0 : index
    %90 = vector.load %arg11[%c0_122, %c0_123] : memref<32x256xf32, #tpu.memory_space<vmem>>, vector<32x256xf32>
    %91 = arith.addf %90, %88 : vector<32x256xf32>
    %c0_124 = arith.constant 0 : index
    %c0_125 = arith.constant 0 : index
    %92 = vector.load %arg11[%c0_124, %c0_125] : memref<32x256xf32, #tpu.memory_space<vmem>>, vector<32x256xf32>
    tpu.vector_store %arg11[%c0_124, %c0_125], %91 {strides = array<i32>} : memref<32x256xf32, #tpu.memory_space<vmem>>, vector<32x256xf32>,
    %c0_126 = arith.constant 0 : index
    %c0_127 = arith.constant 0 : index
    %93 = vector.load %arg12[%c0_126, %c0_127] : memref<32x256xf32, #tpu.memory_space<vmem>>, vector<32x256xf32>
    %94 = arith.addf %93, %89 : vector<32x256xf32>
    %c0_128 = arith.constant 0 : index
    %c0_129 = arith.constant 0 : index
    %95 = vector.load %arg12[%c0_128, %c0_129] : memref<32x256xf32, #tpu.memory_space<vmem>>, vector<32x256xf32>
    tpu.vector_store %arg12[%c0_128, %c0_129], %94 {strides = array<i32>} : memref<32x256xf32, #tpu.memory_space<vmem>>, vector<32x256xf32>,
    %c0_130 = arith.constant 0 : index
    %c0_131 = arith.constant 0 : index
    %96 = vector.load %arg11[%c0_130, %c0_131] : memref<32x256xf32, #tpu.memory_space<vmem>>, vector<32x256xf32>
    %c0_132 = arith.constant 0 : index
    %c0_133 = arith.constant 0 : index
    %97 = vector.load %arg12[%c0_132, %c0_133] : memref<32x256xf32, #tpu.memory_space<vmem>>, vector<32x256xf32>
    %98 = vector.extract_strided_slice %96 {offsets = [0, 0], sizes = [32, 128], strides = [1, 1]} : vector<32x256xf32> to vector<32x128xf32>
    %99 = vector.extract_strided_slice %96 {offsets = [0, 128], sizes = [32, 128], strides = [1, 1]} : vector<32x256xf32> to vector<32x128xf32>
    %100 = vector.extract_strided_slice %97 {offsets = [0, 0], sizes = [32, 128], strides = [1, 1]} : vector<32x256xf32> to vector<32x128xf32>
    %101 = vector.extract_strided_slice %97 {offsets = [0, 128], sizes = [32, 128], strides = [1, 1]} : vector<32x256xf32> to vector<32x128xf32>
    %102 = arith.mulf %98, %98 : vector<32x128xf32>
    %103 = arith.mulf %99, %99 : vector<32x128xf32>
    %104 = arith.addf %102, %103 : vector<32x128xf32>
    %cst_134 = arith.constant 1.000000e-07 : f32
    %105 = vector.broadcast %cst_134 : f32 to vector<32x128xf32>
    %106 = arith.maximumf %104, %105 : vector<32x128xf32>
    %107 = arith.mulf %100, %100 : vector<32x128xf32>
    %108 = arith.mulf %101, %101 : vector<32x128xf32>
    %109 = arith.addf %107, %108 : vector<32x128xf32>
    %cst_135 = arith.constant 1.000000e-07 : f32
    %110 = vector.broadcast %cst_135 : f32 to vector<32x128xf32>
    %111 = arith.maximumf %109, %110 : vector<32x128xf32>
    %112 = arith.addf %111, %106 : vector<32x128xf32>
    %113 = arith.mulf %106, %111 : vector<32x128xf32>
    %114 = math.sqrt %113 : vector<32x128xf32>
    %cst_136 = arith.constant 2.000000e+00 : f32
    %115 = vector.broadcast %cst_136 : f32 to vector<32x128xf32>
    %116 = arith.mulf %115, %114 : vector<32x128xf32>
    %117 = arith.subf %112, %116 : vector<32x128xf32>
    %118 = math.log %111 : vector<32x128xf32>
    %119 = math.log %106 : vector<32x128xf32>
    %120 = arith.subf %118, %119 : vector<32x128xf32>
    %121 = math.absf %120 : vector<32x128xf32>
    %cst_137 = arith.constant 5.000000e-01 : f32
    %122 = vector.broadcast %cst_137 : f32 to vector<32x128xf32>
    %123 = arith.mulf %122, %121 : vector<32x128xf32>
    %124 = tpu.iota {dimensions = array<i32: 0>} : vector<32x1xi32>
    %c32_i32 = arith.constant 32 : i32
    %125 = arith.muli %arg1, %c32_i32 : i32
    %126 = vector.broadcast %125 : i32 to vector<32x1xi32>
    %127 = arith.addi %124, %126 : vector<32x1xi32>
    %c26_i32 = arith.constant 26 : i32
    %128 = vector.broadcast %c26_i32 : i32 to vector<32x1xi32>
    %129 = arith.cmpi slt, %127, %128 : vector<32x1xi32>
    %130 = arith.extui %129 : vector<32x1xi1> to vector<32x1xi32>
    %131 = arith.sitofp %130 : vector<32x1xi32> to vector<32x1xf32>
    %132 = tpu.iota {dimensions = array<i32: 1>} : vector<1x128xi32>
    %c1_i32 = arith.constant 1 : i32
    %133 = vector.broadcast %c1_i32 : i32 to vector<1x128xi32>
    %134 = arith.cmpi sge, %132, %133 : vector<1x128xi32>
    %c64_i32 = arith.constant 64 : i32
    %135 = vector.broadcast %c64_i32 : i32 to vector<1x128xi32>
    %136 = arith.cmpi slt, %132, %135 : vector<1x128xi32>
    %137 = arith.andi %134, %136 : vector<1x128xi1>
    %138 = arith.extui %137 : vector<1x128xi1> to vector<1x128xi32>
    %139 = arith.sitofp %138 : vector<1x128xi32> to vector<1x128xf32>
    %140 = vector.broadcast %131 : vector<32x1xf32> to vector<32x128xf32>
    %141 = vector.broadcast %139 : vector<1x128xf32> to vector<32x128xf32>
    %142 = arith.mulf %140, %141 : vector<32x128xf32>
    %143 = arith.mulf %117, %142 : vector<32x128xf32>
    %cst_138 = arith.constant dense<0.000000e+00> : vector<128xf32>
    %144 = vector.multi_reduction <add>, %143, %cst_138 [0] : vector<32x128xf32> to vector<128xf32>
    %145 = vector.shape_cast %144 : vector<128xf32> to vector<1x128xf32>
    %146 = arith.mulf %111, %142 : vector<32x128xf32>
    %cst_139 = arith.constant dense<0.000000e+00> : vector<128xf32>
    %147 = vector.multi_reduction <add>, %146, %cst_139 [0] : vector<32x128xf32> to vector<128xf32>
    %148 = vector.shape_cast %147 : vector<128xf32> to vector<1x128xf32>
    %149 = arith.mulf %123, %142 : vector<32x128xf32>
    %cst_140 = arith.constant dense<0.000000e+00> : vector<128xf32>
    %150 = vector.multi_reduction <add>, %149, %cst_140 [0] : vector<32x128xf32> to vector<128xf32>
    %151 = vector.shape_cast %150 : vector<128xf32> to vector<1x128xf32>
    %152 = vector.extract_strided_slice %98 {offsets = [0, 0], sizes = [32, 1], strides = [1, 1]} : vector<32x128xf32> to vector<32x1xf32>
    %153 = vector.extract_strided_slice %100 {offsets = [0, 0], sizes = [32, 1], strides = [1, 1]} : vector<32x128xf32> to vector<32x1xf32>
    %154 = arith.mulf %152, %152 : vector<32x1xf32>
    %cst_141 = arith.constant 1.000000e-07 : f32
    %155 = vector.broadcast %cst_141 : f32 to vector<32x1xf32>
    %156 = arith.maximumf %154, %155 : vector<32x1xf32>
    %157 = arith.mulf %153, %153 : vector<32x1xf32>
    %cst_142 = arith.constant 1.000000e-07 : f32
    %158 = vector.broadcast %cst_142 : f32 to vector<32x1xf32>
    %159 = arith.maximumf %157, %158 : vector<32x1xf32>
    %160 = arith.addf %159, %156 : vector<32x1xf32>
    %161 = arith.mulf %156, %159 : vector<32x1xf32>
    %162 = math.sqrt %161 : vector<32x1xf32>
    %cst_143 = arith.constant 2.000000e+00 : f32
    %163 = vector.broadcast %cst_143 : f32 to vector<32x1xf32>
    %164 = arith.mulf %163, %162 : vector<32x1xf32>
    %165 = arith.subf %160, %164 : vector<32x1xf32>
    %166 = math.log %159 : vector<32x1xf32>
    %167 = math.log %156 : vector<32x1xf32>
    %168 = arith.subf %166, %167 : vector<32x1xf32>
    %169 = math.absf %168 : vector<32x1xf32>
    %cst_144 = arith.constant 5.000000e-01 : f32
    %170 = vector.broadcast %cst_144 : f32 to vector<32x1xf32>
    %171 = arith.mulf %170, %169 : vector<32x1xf32>
    %172 = vector.extract_strided_slice %99 {offsets = [0, 0], sizes = [32, 1], strides = [1, 1]} : vector<32x128xf32> to vector<32x1xf32>
    %173 = vector.extract_strided_slice %101 {offsets = [0, 0], sizes = [32, 1], strides = [1, 1]} : vector<32x128xf32> to vector<32x1xf32>
    %174 = arith.mulf %172, %172 : vector<32x1xf32>
    %cst_145 = arith.constant 1.000000e-07 : f32
    %175 = vector.broadcast %cst_145 : f32 to vector<32x1xf32>
    %176 = arith.maximumf %174, %175 : vector<32x1xf32>
    %177 = arith.mulf %173, %173 : vector<32x1xf32>
    %cst_146 = arith.constant 1.000000e-07 : f32
    %178 = vector.broadcast %cst_146 : f32 to vector<32x1xf32>
    %179 = arith.maximumf %177, %178 : vector<32x1xf32>
    %180 = arith.addf %179, %176 : vector<32x1xf32>
    %181 = arith.mulf %176, %179 : vector<32x1xf32>
    %182 = math.sqrt %181 : vector<32x1xf32>
    %cst_147 = arith.constant 2.000000e+00 : f32
    %183 = vector.broadcast %cst_147 : f32 to vector<32x1xf32>
    %184 = arith.mulf %183, %182 : vector<32x1xf32>
    %185 = arith.subf %180, %184 : vector<32x1xf32>
    %186 = math.log %179 : vector<32x1xf32>
    %187 = math.log %176 : vector<32x1xf32>
    %188 = arith.subf %186, %187 : vector<32x1xf32>
    %189 = math.absf %188 : vector<32x1xf32>
    %cst_148 = arith.constant 5.000000e-01 : f32
    %190 = vector.broadcast %cst_148 : f32 to vector<32x1xf32>
    %191 = arith.mulf %190, %189 : vector<32x1xf32>
    %c0_i32 = arith.constant 0 : i32
    %192 = vector.broadcast %c0_i32 : i32 to vector<1x128xi32>
    %193 = arith.cmpi eq, %132, %192 : vector<1x128xi32>
    %194 = arith.extui %193 : vector<1x128xi1> to vector<1x128xi32>
    %195 = arith.sitofp %194 : vector<1x128xi32> to vector<1x128xf32>
    %196 = arith.addf %165, %185 : vector<32x1xf32>
    %197 = arith.mulf %196, %131 : vector<32x1xf32>
    %cst_149 = arith.constant dense<0.000000e+00> : vector<1xf32>
    %198 = vector.multi_reduction <add>, %197, %cst_149 [0] : vector<32x1xf32> to vector<1xf32>
    %199 = vector.shape_cast %198 : vector<1xf32> to vector<1x1xf32>
    %200 = vector.broadcast %199 : vector<1x1xf32> to vector<1x128xf32>
    %201 = arith.mulf %200, %195 : vector<1x128xf32>
    %202 = arith.addf %145, %201 : vector<1x128xf32>
    %203 = arith.addf %159, %179 : vector<32x1xf32>
    %204 = arith.mulf %203, %131 : vector<32x1xf32>
    %cst_150 = arith.constant dense<0.000000e+00> : vector<1xf32>
    %205 = vector.multi_reduction <add>, %204, %cst_150 [0] : vector<32x1xf32> to vector<1xf32>
    %206 = vector.shape_cast %205 : vector<1xf32> to vector<1x1xf32>
    %207 = vector.broadcast %206 : vector<1x1xf32> to vector<1x128xf32>
    %208 = arith.mulf %207, %195 : vector<1x128xf32>
    %209 = arith.addf %148, %208 : vector<1x128xf32>
    %210 = arith.addf %171, %191 : vector<32x1xf32>
    %211 = arith.mulf %210, %131 : vector<32x1xf32>
    %cst_151 = arith.constant dense<0.000000e+00> : vector<1xf32>
    %212 = vector.multi_reduction <add>, %211, %cst_151 [0] : vector<32x1xf32> to vector<1xf32>
    %213 = vector.shape_cast %212 : vector<1xf32> to vector<1x1xf32>
    %214 = vector.broadcast %213 : vector<1x1xf32> to vector<1x128xf32>
    %215 = arith.mulf %214, %195 : vector<1x128xf32>
    %216 = arith.addf %151, %215 : vector<1x128xf32>
    %217 = tpu.concatenate %202, %209, %216 in 1 : vector<1x128xf32>, vector<1x128xf32>, vector<1x128xf32> -> vector<1x384xf32>
    %218 = vector.shape_cast %217 : vector<1x384xf32> to vector<1x1x384xf32>
    %c0_152 = arith.constant 0 : index
    %c0_153 = arith.constant 0 : index
    %c0_154 = arith.constant 0 : index
    %219 = vector.load %arg8[%c0_152, %c0_153, %c0_154] : memref<1x1x384xf32, #tpu.memory_space<vmem>>, vector<1x1x384xf32>
    tpu.vector_store %arg8[%c0_152, %c0_153, %c0_154], %218 {strides = array<i32>} : memref<1x1x384xf32, #tpu.memory_space<vmem>>, vector<1x1x384xf32>,
    return
  }
  func.func @transform_0(%arg0: i32, %arg1: i32) -> (i32, i32, i32) {
    %c0_i32 = arith.constant 0 : i32
    %c0_i32_0 = arith.constant 0 : i32
    return %arg0, %arg1, %c0_i32 : i32, i32, i32
  }
  func.func @transform_1(%arg0: i32, %arg1: i32) -> (i32, i32, i32) {
    %c1_i32 = arith.constant 1 : i32
    %0 = arith.addi %arg1, %c1_i32 : i32
    %c2_i32 = arith.constant 2 : i32
    %1 = arith.muli %0, %c2_i32 : i32
    %c0_i32 = arith.constant 0 : i32
    %c0_i32_0 = arith.constant 0 : i32
    return %arg0, %1, %c0_i32 : i32, i32, i32
  }
  func.func @transform_2(%arg0: i32, %arg1: i32) -> (i32, i32, i32) {
    %c0_i32 = arith.constant 0 : i32
    %c0_i32_0 = arith.constant 0 : i32
    return %arg0, %arg1, %c0_i32 : i32, i32, i32
  }
  func.func @transform_3(%arg0: i32, %arg1: i32) -> (i32, i32, i32) {
    %c1_i32 = arith.constant 1 : i32
    %0 = arith.addi %arg1, %c1_i32 : i32
    %c2_i32 = arith.constant 2 : i32
    %1 = arith.muli %0, %c2_i32 : i32
    %c0_i32 = arith.constant 0 : i32
    %c0_i32_0 = arith.constant 0 : i32
    return %arg0, %1, %c0_i32 : i32, i32, i32
  }
  func.func @transform_4(%arg0: i32, %arg1: i32) -> (i32, i32, i32) {
    %c0_i32 = arith.constant 0 : i32
    %c0_i32_0 = arith.constant 0 : i32
    %c0_i32_1 = arith.constant 0 : i32
    %c0_i32_2 = arith.constant 0 : i32
    return %c0_i32, %c0_i32_0, %c0_i32_1 : i32, i32, i32
  }
  func.func @transform_5(%arg0: i32, %arg1: i32) -> (i32, i32, i32) {
    %c0_i32 = arith.constant 0 : i32
    %c0_i32_0 = arith.constant 0 : i32
    %c0_i32_1 = arith.constant 0 : i32
    %c0_i32_2 = arith.constant 0 : i32
    return %c0_i32, %c0_i32_0, %c0_i32_1 : i32, i32, i32
  }
  func.func @transform_6(%arg0: i32, %arg1: i32) -> (i32, i32, i32) {
    %c0_i32 = arith.constant 0 : i32
    %c0_i32_0 = arith.constant 0 : i32
    return %arg0, %arg1, %c0_i32 : i32, i32, i32
  }
}

</mosaic_0001>

<llo_original>
// kernel: tpu_custom_call.1
$region0: #{tpu_custom_call.1}
  #allocation0 [shape = 'u32[]', space=smem, size = 0x4, offset = 0x4, fixed_abs, tag = 'smem constant byte address 0x4 - core index']
  #allocation1 [shape = 'u32[144,128]{1,0:T(1,128)}', space=vmem, size = 0x12000, scoped, tag = 'internal scratch']
  #allocation2 [shape = 'bf16[48,32]{1,0:T(16,128)(2,1)}', space=vmem, size = 0x3000, scoped, tag = 'scratch operand']
  #allocation3 [shape = 'bf16[48,32]{1,0:T(16,128)(2,1)}', space=vmem, size = 0x3000, scoped, tag = 'scratch operand']
  #allocation4 [shape = 'f32[32,256]{1,0:T(8,128)}', space=vmem, size = 0x8000, scoped, tag = 'scratch operand']
  #allocation5 [shape = 'f32[32,256]{1,0:T(8,128)}', space=vmem, size = 0x8000, scoped, tag = 'scratch operand']
  %s0 = inlined_call_operand.vmem [shape: bf16[2,48,32], index: 0, kind: input, shape index: {}]
  %s1 = inlined_call_operand.vmem [shape: bf16[2,48,32], index: 1, kind: input, shape index: {}]
  %s2 = inlined_call_operand.vmem [shape: bf16[2,48,32], index: 2, kind: input, shape index: {}]
  %s3 = inlined_call_operand.vmem [shape: bf16[2,48,32], index: 3, kind: input, shape index: {}]
  %s4 = inlined_call_operand.vmem [shape: bf16[4,32,256], index: 4, kind: input, shape index: {}]
  %s5 = inlined_call_operand.vmem [shape: bf16[4,32,256], index: 5, kind: input, shape index: {}]
  %s6 = inlined_call_operand.hbm [shape: f32[2,1,384], index: 6, kind: output, shape index: {}]
  %s7 = sld [smem:[#allocation0]]
  $region57: #{tpu_custom_call.1} parent=0
    _
  %s9 = ssub.s32 1, %s7
  %s10 = scalar_select 0, %s9, %s7
  $region1: #{tpu_custom_call.1} parent=0
    #allocation6 [shape = 'u8[3072]{0}', space=vmem, size = 0xc00, scoped, tag = 'output window, operand 0']
    #allocation7 [shape = 's32[2]{0}', space=sflag, size = 0x8, scoped, tag = 'scoped memory for tpu_custom_call.1']
    %11 = vsyncpa [#allocation7], 0
    %s12 = scalar_lea.sflag [#allocation7], 1
    %13 = vsyncpa %s12, 0
    loop: start=0, step=1, limit=4
    $region2: #{tpu_custom_call.1} parent=1 // loop_pre_header
      _
    $region3: #{tpu_custom_call.1} parent=1 // loop_header
      %s15 = sphi 0, %s19
      %p16 = scmp.ge.s32.totalorder %s15, 4
      %s22 = sphi 0, %s34
      %s23 = sphi 0, %s30
      %s24 = sphi 0, %s22
      %s25 = sphi 0, %s23
      %s26 = sphi 0, %s24
      %s27 = sphi 0, %s25
      %s39 = sphi 0, %s41
      %s42 = sphi 0, %s39
      %s43 = sphi 0, %s42
      %s59 = sphi 0, %s43
      %s71 = sphi 0, %s73
      %s74 = sphi 0, %s71
      %s75 = sphi 0, %s74
      %s91 = sphi 0, %s75
      %s99 = sphi 0, %s101
      %s102 = sphi 0, %s99
      %s103 = sphi 0, %s102
      %s119 = sphi 0, %s103
      %s131 = sphi 0, %s133
      %s134 = sphi 0, %s131
      %s135 = sphi 0, %s134
      %s151 = sphi 0, %s135
      %s155 = sphi 0, %s155
      %s157 = sphi 0, %s155
      %s158 = sphi 0, %s157
      %s172 = sphi 0, %s158
      %s176 = sphi 0, %s176
      %s178 = sphi 0, %s176
      %s179 = sphi 0, %s178
      %s193 = sphi 0, %s179
      %s201 = sphi 0, %s203
      %s204 = sphi 0, %s201
      %s205 = sphi 0, %s204
      %s221 = sphi 0, %s205
    $region4: #{tpu_custom_call.1} parent=1 // loop_header_branch
      %18 = sbr.rel (%p16) target = $region8
    $region5: #{tpu_custom_call.1} parent=1 // loop_body
      %s20 = ssub.s32 %s15, 1
      %s21 = ssub.s32 %s15, 2
      %s28 = sadd.s32 1, %s23
      %p29 = scmp.ge.s32.totalorder %s28, 1
      %s30 = scalar_select %p29, 0, %s28
      %s31 = sadd.s32 1, %s22
      %s32 = scalar_select %p29, %s31, %s22
      %p33 = scmp.ge.s32.totalorder %s32, 2
      %s34 = scalar_select %p33, 0, %s32
      %s35 = ssub.s32 %s22, %s34
      %s36 = ssub.s32 %s23, %s30
      %s37 = sor.u32 %s35, %s36
      %p38 = scmp.eq.s32.totalorder %s37, 0
      %s40 = sadd.s32 %s39, 1
      %s41 = scalar_select %p38, %s39, %s40
      %p44 = pneg %p38
      %p45 = scmp.eq.s32.totalorder %s15, 1
      %p46 = por %p44, %p45
      %p47 = scmp.ne.s32.totalorder %s39, %s42
      %p48 = scmp.eq.s32.totalorder %s15, 0
      %p49 = por %p47, %p48
      %p50 = scmp.ne.s32.totalorder %s39, %s42
      %p51 = scmp.eq.s32.totalorder %s20, 1
      %p52 = por %p50, %p51
      %p53 = scmp.ne.s32.totalorder %s42, %s43
      %p54 = scmp.eq.s32.totalorder %s20, 0
      %p55 = por %p53, %p54
      %p56 = scmp.ne.s32.totalorder %s42, %s43
      %p57 = scmp.eq.s32.totalorder %s21, 1
      %p58 = por %p56, %p57
      %p60 = scmp.ne.s32.totalorder %s43, %s59
      %p61 = scmp.eq.s32.totalorder %s21, 0
      %p62 = por %p60, %p61
      %s63 = sadd.s32 %s23, 1
      %s64 = smul.u32 %s63, 2
      %s65 = sadd.s32 %s30, 1
      %s66 = smul.u32 %s65, 2
      %s67 = ssub.s32 %s22, %s34
      %s68 = ssub.s32 %s64, %s66
      %s69 = sor.u32 %s67, %s68
      %p70 = scmp.eq.s32.totalorder %s69, 0
      %s72 = sadd.s32 %s71, 1
      %s73 = scalar_select %p70, %s71, %s72
      %p76 = pneg %p70
      %p77 = scmp.eq.s32.totalorder %s15, 1
      %p78 = por %p76, %p77
      %p79 = scmp.ne.s32.totalorder %s71, %s74
      %p80 = scmp.eq.s32.totalorder %s15, 0
      %p81 = por %p79, %p80
      %p82 = scmp.ne.s32.totalorder %s71, %s74
      %p83 = scmp.eq.s32.totalorder %s20, 1
      %p84 = por %p82, %p83
      %p85 = scmp.ne.s32.totalorder %s74, %s75
      %p86 = scmp.eq.s32.totalorder %s20, 0
      %p87 = por %p85, %p86
      %p88 = scmp.ne.s32.totalorder %s74, %s75
      %p89 = scmp.eq.s32.totalorder %s21, 1
      %p90 = por %p88, %p89
      %p92 = scmp.ne.s32.totalorder %s75, %s91
      %p93 = scmp.eq.s32.totalorder %s21, 0
      %p94 = por %p92, %p93
      %s95 = ssub.s32 %s22, %s34
      %s96 = ssub.s32 %s23, %s30
      %s97 = sor.u32 %s95, %s96
      %p98 = scmp.eq.s32.totalorder %s97, 0
      %s100 = sadd.s32 %s99, 1
      %s101 = scalar_select %p98, %s99, %s100
      %p104 = pneg %p98
      %p105 = scmp.eq.s32.totalorder %s15, 1
      %p106 = por %p104, %p105
      %p107 = scmp.ne.s32.totalorder %s99, %s102
      %p108 = scmp.eq.s32.totalorder %s15, 0
      %p109 = por %p107, %p108
      %p110 = scmp.ne.s32.totalorder %s99, %s102
      %p111 = scmp.eq.s32.totalorder %s20, 1
      %p112 = por %p110, %p111
      %p113 = scmp.ne.s32.totalorder %s102, %s103
      %p114 = scmp.eq.s32.totalorder %s20, 0
      %p115 = por %p113, %p114
      %p116 = scmp.ne.s32.totalorder %s102, %s103
      %p117 = scmp.eq.s32.totalorder %s21, 1
      %p118 = por %p116, %p117
      %p120 = scmp.ne.s32.totalorder %s103, %s119
      %p121 = scmp.eq.s32.totalorder %s21, 0
      %p122 = por %p120, %p121
      %s123 = sadd.s32 %s23, 1
      %s124 = smul.u32 %s123, 2
      %s125 = sadd.s32 %s30, 1
      %s126 = smul.u32 %s125, 2
      %s127 = ssub.s32 %s22, %s34
      %s128 = ssub.s32 %s124, %s126
      %s129 = sor.u32 %s127, %s128
      %p130 = scmp.eq.s32.totalorder %s129, 0
      %s132 = sadd.s32 %s131, 1
      %s133 = scalar_select %p130, %s131, %s132
      %p136 = pneg %p130
      %p137 = scmp.eq.s32.totalorder %s15, 1
      %p138 = por %p136, %p137
      %p139 = scmp.ne.s32.totalorder %s131, %s134
      %p140 = scmp.eq.s32.totalorder %s15, 0
      %p141 = por %p139, %p140
      %p142 = scmp.ne.s32.totalorder %s131, %s134
      %p143 = scmp.eq.s32.totalorder %s20, 1
      %p144 = por %p142, %p143
      %p145 = scmp.ne.s32.totalorder %s134, %s135
      %p146 = scmp.eq.s32.totalorder %s20, 0
      %p147 = por %p145, %p146
      %p148 = scmp.ne.s32.totalorder %s134, %s135
      %p149 = scmp.eq.s32.totalorder %s21, 1
      %p150 = por %p148, %p149
      %p152 = scmp.ne.s32.totalorder %s135, %s151
      %p153 = scmp.eq.s32.totalorder %s21, 0
      %p154 = por %p152, %p153
      %s156 = sadd.s32 %s155, 1
      %p159 = scmp.eq.s32.totalorder %s15, 1
      %p160 = scmp.ne.s32.totalorder %s155, %s157
      %p161 = scmp.eq.s32.totalorder %s15, 0
      %p162 = por %p160, %p161
      %p163 = scmp.ne.s32.totalorder %s155, %s157
      %p164 = scmp.eq.s32.totalorder %s20, 1
      %p165 = por %p163, %p164
      %p166 = scmp.ne.s32.totalorder %s157, %s158
      %p167 = scmp.eq.s32.totalorder %s20, 0
      %p168 = por %p166, %p167
      %p169 = scmp.ne.s32.totalorder %s157, %s158
      %p170 = scmp.eq.s32.totalorder %s21, 1
      %p171 = por %p169, %p170
      %p173 = scmp.ne.s32.totalorder %s158, %s172
      %p174 = scmp.eq.s32.totalorder %s21, 0
      %p175 = por %p173, %p174
      %s177 = sadd.s32 %s176, 1
      %p180 = scmp.eq.s32.totalorder %s15, 1
      %p181 = scmp.ne.s32.totalorder %s176, %s178
      %p182 = scmp.eq.s32.totalorder %s15, 0
      %p183 = por %p181, %p182
      %p184 = scmp.ne.s32.totalorder %s176, %s178
      %p185 = scmp.eq.s32.totalorder %s20, 1
      %p186 = por %p184, %p185
      %p187 = scmp.ne.s32.totalorder %s178, %s179
      %p188 = scmp.eq.s32.totalorder %s20, 0
      %p189 = por %p187, %p188
      %p190 = scmp.ne.s32.totalorder %s178, %s179
      %p191 = scmp.eq.s32.totalorder %s21, 1
      %p192 = por %p190, %p191
      %p194 = scmp.ne.s32.totalorder %s179, %s193
      %p195 = scmp.eq.s32.totalorder %s21, 0
      %p196 = por %p194, %p195
      %s197 = ssub.s32 %s22, %s34
      %s198 = ssub.s32 %s23, %s30
      %s199 = sor.u32 %s197, %s198
      %p200 = scmp.eq.s32.totalorder %s199, 0
      %s202 = sadd.s32 %s201, 1
      %s203 = scalar_select %p200, %s201, %s202
      %p206 = pneg %p200
      %p207 = scmp.eq.s32.totalorder %s15, 1
      %p208 = por %p206, %p207
      %p209 = scmp.ne.s32.totalorder %s201, %s204
      %p210 = scmp.eq.s32.totalorder %s15, 0
      %p211 = por %p209, %p210
      %p212 = scmp.ne.s32.totalorder %s201, %s204
      %p213 = scmp.eq.s32.totalorder %s20, 1
      %p214 = por %p212, %p213
      %p215 = scmp.ne.s32.totalorder %s204, %s205
      %p216 = scmp.eq.s32.totalorder %s20, 0
      %p217 = por %p215, %p216
      %p218 = scmp.ne.s32.totalorder %s204, %s205
      %p219 = scmp.eq.s32.totalorder %s21, 1
      %p220 = por %p218, %p219
      %p222 = scmp.ne.s32.totalorder %s205, %s221
      %p223 = scmp.eq.s32.totalorder %s21, 0
      %p224 = por %p222, %p223
      %p225 = scmp.le.s32.totalorder 1, %s15
      %p226 = scmp.lt.s32.totalorder %s15, 3
      %p227 = pnand %p225, %p226
      %p228 = pneg %p227
      // Predicated region
      $region9: #{tpu_custom_call.1} parent=5 // pred_check
        _
      $region10: #{tpu_custom_call.1} parent=5 // pred_check_branch
        %230 = sbr.rel (%p227) target = $region12
      $region11: #{tpu_custom_call.1} parent=5 // pred_region
        %s231 = ssub.s32 %s15, 1
        // Predicated region
        $region13: #{tpu_custom_call.1} parent=11 // pred_check
          %p232 = pneg %p168
        $region14: #{tpu_custom_call.1} parent=11 // pred_check_branch
          %234 = sbr.rel (%p232) target = $region16
        $region15: #{tpu_custom_call.1} parent=11 // pred_region
          _
        $region16: #{tpu_custom_call.1} parent=11 // pred_fallthru
          _
        // Predicated region
        $region17: #{tpu_custom_call.1} parent=11 // pred_check
          %p235 = pneg %p189
        $region18: #{tpu_custom_call.1} parent=11 // pred_check_branch
          %237 = sbr.rel (%p235) target = $region20
        $region19: #{tpu_custom_call.1} parent=11 // pred_region
          _
        $region20: #{tpu_custom_call.1} parent=11 // pred_fallthru
          _
      $region12: #{tpu_custom_call.1} parent=5 // pred_fallthru
        _
      %p238 = scmp.lt.s32.totalorder %s15, 2
      // Predicated region
      $region21: #{tpu_custom_call.1} parent=5 // pred_check
        %p239 = pneg %p238
      $region22: #{tpu_custom_call.1} parent=5 // pred_check_branch
        %241 = sbr.rel (%p239) target = $region24
      $region23: #{tpu_custom_call.1} parent=5 // pred_region
        // Predicated region
        $region25: #{tpu_custom_call.1} parent=23 // pred_check
          %p242 = pneg %p49
        $region26: #{tpu_custom_call.1} parent=23 // pred_check_branch
          %244 = sbr.rel (%p242) target = $region28
        $region27: #{tpu_custom_call.1} parent=23 // pred_region
          %s245 = smul.u32 4, %s23
          %s246 = ssub.s32 6, %s245
          %p247 = scmp.lt.s32.totalorder %s246, 4
          %s248 = scalar_select %p247, %s246, 4
          %s249 = smul.u32 64, %s248
          %p250 = scmp.lt.s32.totalorder %s22, 1
          %s251 = scalar_select %p250, %s22, 1
          %p252 = scmp.lt.s32.totalorder %s245, 5
          %s253 = scalar_select %p252, %s245, 5
          %s254 = smul.addr %s251, 6
          %s255 = sadd.s32 %s253, %s254
          %s256 = smul.addr %s255, 4
          %s257 = scalar_lea.vmem %s0, %s256
          %s258 = smul.u32 4, %s23
          %s259 = ssub.s32 6, %s258
          %p260 = scmp.lt.s32.totalorder %s259, 4
          %s261 = scalar_select %p260, %s259, 4
          %s262 = smul.u32 64, %s261
        $region28: #{tpu_custom_call.1} parent=23 // pred_fallthru
          _
        // Predicated region
        $region29: #{tpu_custom_call.1} parent=23 // pred_check
          %p263 = pneg %p81
        $region30: #{tpu_custom_call.1} parent=23 // pred_check_branch
          %265 = sbr.rel (%p263) target = $region32
        $region31: #{tpu_custom_call.1} parent=23 // pred_region
          %s266 = sadd.s32 %s23, 1
          %s267 = smul.u32 %s266, 2
          %s268 = smul.u32 2, %s267
          %p269 = scmp.lt.s32.totalorder %s22, 1
          %s270 = scalar_select %p269, %s22, 1
          %p271 = scmp.lt.s32.totalorder %s268, 5
          %s272 = scalar_select %p271, %s268, 5
          %s273 = smul.addr %s270, 6
          %s274 = sadd.s32 %s272, %s273
          %s275 = smul.addr %s274, 4
          %s276 = scalar_lea.vmem %s1, %s275
          %s277 = sadd.s32 %s23, 1
          %s278 = smul.u32 %s277, 2
          %s279 = smul.u32 2, %s278
        $region32: #{tpu_custom_call.1} parent=23 // pred_fallthru
          _
        // Predicated region
        $region33: #{tpu_custom_call.1} parent=23 // pred_check
          %p280 = pneg %p109
        $region34: #{tpu_custom_call.1} parent=23 // pred_check_branch
          %282 = sbr.rel (%p280) target = $region36
        $region35: #{tpu_custom_call.1} parent=23 // pred_region
          %s283 = smul.u32 4, %s23
          %s284 = ssub.s32 6, %s283
          %p285 = scmp.lt.s32.totalorder %s284, 4
          %s286 = scalar_select %p285, %s284, 4
          %s287 = smul.u32 64, %s286
          %p288 = scmp.lt.s32.totalorder %s22, 1
          %s289 = scalar_select %p288, %s22, 1
          %p290 = scmp.lt.s32.totalorder %s283, 5
          %s291 = scalar_select %p290, %s283, 5
          %s292 = smul.addr %s289, 6
          %s293 = sadd.s32 %s291, %s292
          %s294 = smul.addr %s293, 4
          %s295 = scalar_lea.vmem %s2, %s294
          %s296 = smul.u32 4, %s23
          %s297 = ssub.s32 6, %s296
          %p298 = scmp.lt.s32.totalorder %s297, 4
          %s299 = scalar_select %p298, %s297, 4
          %s300 = smul.u32 64, %s299
        $region36: #{tpu_custom_call.1} parent=23 // pred_fallthru
          _
        // Predicated region
        $region37: #{tpu_custom_call.1} parent=23 // pred_check
          %p301 = pneg %p141
        $region38: #{tpu_custom_call.1} parent=23 // pred_check_branch
          %303 = sbr.rel (%p301) target = $region40
        $region39: #{tpu_custom_call.1} parent=23 // pred_region
          %s304 = sadd.s32 %s23, 1
          %s305 = smul.u32 %s304, 2
          %s306 = smul.u32 2, %s305
          %p307 = scmp.lt.s32.totalorder %s22, 1
          %s308 = scalar_select %p307, %s22, 1
          %p309 = scmp.lt.s32.totalorder %s306, 5
          %s310 = scalar_select %p309, %s306, 5
          %s311 = smul.addr %s308, 6
          %s312 = sadd.s32 %s310, %s311
          %s313 = smul.addr %s312, 4
          %s314 = scalar_lea.vmem %s3, %s313
          %s315 = sadd.s32 %s23, 1
          %s316 = smul.u32 %s315, 2
          %s317 = smul.u32 2, %s316
        $region40: #{tpu_custom_call.1} parent=23 // pred_fallthru
          _
      $region24: #{tpu_custom_call.1} parent=5 // pred_fallthru
        _
      %p318 = scmp.le.s32.totalorder 1, %s15
      %p319 = scmp.lt.s32.totalorder %s15, 3
      %p320 = pnand %p318, %p319
      %p321 = pneg %p320
      // Predicated region
      $region41: #{tpu_custom_call.1} parent=5 // pred_check
        _
      $region42: #{tpu_custom_call.1} parent=5 // pred_check_branch
        %323 = sbr.rel (%p320) target = $region44
      $region43: #{tpu_custom_call.1} parent=5 // pred_region
        %s324 = ssub.s32 %s15, 1
        %s325 = smul.u32 4, %s25
        %s326 = ssub.s32 6, %s325
        %p327 = scmp.lt.s32.totalorder %s326, 4
        %s328 = scalar_select %p327, %s326, 4
        %s329 = smul.u32 64, %s328
        %p330 = scmp.lt.s32.totalorder %s24, 1
        %s331 = scalar_select %p330, %s24, 1
        %p332 = scmp.lt.s32.totalorder %s325, 5
        %s333 = scalar_select %p332, %s325, 5
        %s334 = smul.addr %s331, 6
        %s335 = sadd.s32 %s333, %s334
        %s336 = smul.addr %s335, 4
        %s337 = scalar_lea.vmem %s0, %s336
        %p338 = pneg %p55
        %p339 = pneg %p52
        %s340 = sadd.s32 %s25, 1
        %s341 = smul.u32 %s340, 2
        %s342 = smul.u32 2, %s341
        %p343 = scmp.lt.s32.totalorder %s24, 1
        %s344 = scalar_select %p343, %s24, 1
        %p345 = scmp.lt.s32.totalorder %s342, 5
        %s346 = scalar_select %p345, %s342, 5
        %s347 = smul.addr %s344, 6
        %s348 = sadd.s32 %s346, %s347
        %s349 = smul.addr %s348, 4
        %s350 = scalar_lea.vmem %s1, %s349
        %p351 = pneg %p87
        %p352 = pneg %p84
        %s353 = smul.u32 4, %s25
        %s354 = ssub.s32 6, %s353
        %p355 = scmp.lt.s32.totalorder %s354, 4
        %s356 = scalar_select %p355, %s354, 4
        %s357 = smul.u32 64, %s356
        %p358 = scmp.lt.s32.totalorder %s24, 1
        %s359 = scalar_select %p358, %s24, 1
        %p360 = scmp.lt.s32.totalorder %s353, 5
        %s361 = scalar_select %p360, %s353, 5
        %s362 = smul.addr %s359, 6
        %s363 = sadd.s32 %s361, %s362
        %s364 = smul.addr %s363, 4
        %s365 = scalar_lea.vmem %s2, %s364
        %p366 = pneg %p115
        %p367 = pneg %p112
        %s368 = sadd.s32 %s25, 1
        %s369 = smul.u32 %s368, 2
        %s370 = smul.u32 2, %s369
        %p371 = scmp.lt.s32.totalorder %s24, 1
        %s372 = scalar_select %p371, %s24, 1
        %p373 = scmp.lt.s32.totalorder %s370, 5
        %s374 = scalar_select %p373, %s370, 5
        %s375 = smul.addr %s372, 6
        %s376 = sadd.s32 %s374, %s375
        %s377 = smul.addr %s376, 4
        %s378 = scalar_lea.vmem %s3, %s377
        %p379 = pneg %p147
        %p380 = pneg %p144
        %p381 = pneg %p168
        %p382 = pneg %p165
        %p383 = pneg %p189
        %p384 = pneg %p186
        %p385 = pneg %p217
        %p386 = pneg %p214
        %s387 = sand.u32 %s204, 1
        %s388 = scalar_lea.sflag [#allocation7], %s387
        %s389 = sand.u32 %s204, 1
        %s390 = smul.addr %s389, 3
        %s391 = scalar_lea.vmem [#allocation6], %s390
        %s392 = smul.u32 4, %s25
        %s393 = ssub.s32 6, %s392
        %p394 = scmp.lt.s32.totalorder %s393, 4
        %s395 = scalar_select %p394, %s393, 4
        %s396 = smul.u32 64, %s395
        %p397 = scmp.lt.s32.totalorder %s24, 1
        %s398 = scalar_select %p397, %s24, 1
        %p399 = scmp.lt.s32.totalorder %s392, 5
        %s400 = scalar_select %p399, %s392, 5
        %s401 = smul.addr %s398, 6
        %s402 = sadd.s32 %s400, %s401
        %s403 = smul.addr %s402, 4
        %s404 = scalar_lea.vmem %s0, %s403
        %s405 = smul.u32 4, %s25
        %s406 = ssub.s32 6, %s405
        %p407 = scmp.lt.s32.totalorder %s406, 4
        %s408 = scalar_select %p407, %s406, 4
        %s409 = smul.u32 64, %s408
        %s410 = sadd.s32 %s25, 1
        %s411 = smul.u32 %s410, 2
        %s412 = smul.u32 2, %s411
        %p413 = scmp.lt.s32.totalorder %s24, 1
        %s414 = scalar_select %p413, %s24, 1
        %p415 = scmp.lt.s32.totalorder %s412, 5
        %s416 = scalar_select %p415, %s412, 5
        %s417 = smul.addr %s414, 6
        %s418 = sadd.s32 %s416, %s417
        %s419 = smul.addr %s418, 4
        %s420 = scalar_lea.vmem %s1, %s419
        %s421 = sadd.s32 %s25, 1
        %s422 = smul.u32 %s421, 2
        %s423 = smul.u32 2, %s422
        %s424 = smul.u32 4, %s25
        %s425 = ssub.s32 6, %s424
        %p426 = scmp.lt.s32.totalorder %s425, 4
        %s427 = scalar_select %p426, %s425, 4
        %s428 = smul.u32 64, %s427
        %p429 = scmp.lt.s32.totalorder %s24, 1
        %s430 = scalar_select %p429, %s24, 1
        %p431 = scmp.lt.s32.totalorder %s424, 5
        %s432 = scalar_select %p431, %s424, 5
        %s433 = smul.addr %s430, 6
        %s434 = sadd.s32 %s432, %s433
        %s435 = smul.addr %s434, 4
        %s436 = scalar_lea.vmem %s2, %s435
        %s437 = smul.u32 4, %s25
        %s438 = ssub.s32 6, %s437
        %p439 = scmp.lt.s32.totalorder %s438, 4
        %s440 = scalar_select %p439, %s438, 4
        %s441 = smul.u32 64, %s440
        %s442 = sadd.s32 %s25, 1
        %s443 = smul.u32 %s442, 2
        %s444 = smul.u32 2, %s443
        %p445 = scmp.lt.s32.totalorder %s24, 1
        %s446 = scalar_select %p445, %s24, 1
        %p447 = scmp.lt.s32.totalorder %s444, 5
        %s448 = scalar_select %p447, %s444, 5
        %s449 = smul.addr %s446, 6
        %s450 = sadd.s32 %s448, %s449
        %s451 = smul.addr %s450, 4
        %s452 = scalar_lea.vmem %s3, %s451
        %s453 = sadd.s32 %s25, 1
        %s454 = smul.u32 %s453, 2
        %s455 = smul.u32 2, %s454
        %v457 = vld [vmem:[%s404] sm:$0xf]
        %v458 = vld [vmem:[%s404 + $0x4] sm:$0xf]
        %v459 = vld [vmem:[%s404 + $0x8] sm:$0xf]
        %v460 = vld [vmem:[%s404 + $0xc] sm:$0xf]
        %v465 = vunpack.c.l.b16 %v457
        %v466 = vunpack.c.l.b16 %v458
        %v467 = vunpack.c.l.b16 %v459
        %v468 = vunpack.c.l.b16 %v460
        %v469 = vpack.c.b16 %v466, %v465
        %v470 = vpack.c.b16 %v468, %v467
        %vm473 = vcmask 261120
        %474 = vst.msk [vmem:[#allocation2] sm:$0xff] %vm473, %v469
        %475 = vst.msk [vmem:[#allocation2 + $0x8] sm:$0xff] %vm473, %v470
        %v476 = vld [vmem:[%s420] sm:$0xf]
        %v477 = vld [vmem:[%s420 + $0x4] sm:$0xf]
        %v480 = vunpack.c.l.b16 %v476
        %v481 = vunpack.c.l.b16 %v477
        %v482 = vpack.c.b16 %v481, %v480
        %484 = vst.msk [vmem:[#allocation2 + $0x10] sm:$0xff] %vm473, %v482
        %v485 = vld [vmem:[%s436] sm:$0xf]
        %v486 = vld [vmem:[%s436 + $0x4] sm:$0xf]
        %v487 = vld [vmem:[%s436 + $0x8] sm:$0xf]
        %v488 = vld [vmem:[%s436 + $0xc] sm:$0xf]
        %v493 = vunpack.c.l.b16 %v485
        %v494 = vunpack.c.l.b16 %v486
        %v495 = vunpack.c.l.b16 %v487
        %v496 = vunpack.c.l.b16 %v488
        %v497 = vpack.c.b16 %v494, %v493
        %v498 = vpack.c.b16 %v496, %v495
        %501 = vst.msk [vmem:[#allocation3] sm:$0xff] %vm473, %v497
        %502 = vst.msk [vmem:[#allocation3 + $0x8] sm:$0xff] %vm473, %v498
        %v503 = vld [vmem:[%s452] sm:$0xf]
        %v504 = vld [vmem:[%s452 + $0x4] sm:$0xf]
        %v507 = vunpack.c.l.b16 %v503
        %v508 = vunpack.c.l.b16 %v504
        %v509 = vpack.c.b16 %v508, %v507
        %511 = vst.msk [vmem:[#allocation3 + $0x10] sm:$0xff] %vm473, %v509
        %v512 = vld [vmem:[#allocation2] sm:$0xff]
        %v513 = vld [vmem:[#allocation2 + $0x8] sm:$0xff]
        %v514 = vld [vmem:[#allocation3] sm:$0xff]
        %v515 = vld [vmem:[#allocation3 + $0x8] sm:$0xff]
        %v516 = vld [vmem:[%s4] sm:$0xff]
        %v517 = vld [vmem:[%s4 + $0x8] sm:$0xff]
        %v518 = vld [vmem:[%s4 + $0x10] sm:$0xff]
        %v519 = vld [vmem:[%s4 + $0x18] sm:$0xff]
        %v524 = vunpack.c.l.b16 %v516
        %v525 = vunpack.c.h.b16 %v516
        %v526 = vunpack.c.l.b16 %v517
        %v527 = vunpack.c.h.b16 %v517
        %v528 = vunpack.c.l.b16 %v518
        %v529 = vunpack.c.h.b16 %v518
        %v530 = vunpack.c.l.b16 %v519
        %v531 = vunpack.c.h.b16 %v519
        %v532 = vpack.c.b16 %v526, %v524
        %v533 = vpack.c.b16 %v527, %v525
        %v534 = vpack.c.b16 %v530, %v528
        %v535 = vpack.c.b16 %v531, %v529
        %v541 = vsel %vm473, %v512, 0
        %v544 = vsel %vm473, %v513, 0
        %546 = vmatprep.subr.bf16.mxu0 %v533
        %547 = vmatpush1.bf16.msra.mxu0 %v532
        %548 = vmatprep.subr.bf16.mxu0 %v535
        %549 = vmatpush1.bf16.msra.mxu0 %v534
        %550 = vmatprep.subr.bf16.mxu0 0
        %551 = vmatpush1.bf16.msra.mxu0 0
        %552 = vmatprep.subr.bf16.mxu0 0
        %553 = vmatpush1.bf16.msra.mxu0 0
        %554 = vmatprep.subr.bf16.mxu0 0
        %555 = vmatpush1.bf16.msra.mxu0 0
        %556 = vmatprep.subr.bf16.mxu0 0
        %557 = vmatpush1.bf16.msra.mxu0 0
        %558 = vmatprep.subr.bf16.mxu0 0
        %559 = vmatpush1.bf16.msra.mxu0 0
        %560 = vmatprep.subr.bf16.mxu0 0
        %561 = vmatpush1.bf16.msra.mxu0 0
        %562 = vmatprep.subr.bf16.mxu0 0
        %563 = vmatpush1.bf16.msra.mxu0 0
        %564 = vmatprep.subr.bf16.mxu0 0
        %565 = vmatpush1.bf16.msra.mxu0 0
        %566 = vmatprep.subr.bf16.mxu0 0
        %567 = vmatpush1.bf16.msra.mxu0 0
        %568 = vmatprep.subr.bf16.mxu0 0
        %569 = vmatpush1.bf16.msra.mxu0 0
        %570 = vmatprep.subr.bf16.mxu0 0
        %571 = vmatpush1.bf16.msra.mxu0 0
        %572 = vmatprep.subr.bf16.mxu0 0
        %573 = vmatpush1.bf16.msra.mxu0 0
        %574 = vmatprep.subr.bf16.mxu0 0
        %575 = vmatpush1.bf16.msra.mxu0 0
        %576 = vmatprep.subr.bf16.mxu0 0
        %577 = vmatpush1.bf16.msra.mxu0 0
        %578 = vmatprep.mubr.bf16.mxu0 0
        %579 = vmatmul.mubr.bf16.gmra.mrb[0].mxu0 %v541
        %v580 = vpop.f32.mrb[0].mxu0
        %v581 = vadd.f32 0.0, %v580
        %v582 = vpop.f32.mrb[0].mxu0
        %v583 = vadd.f32 0.0, %v582
        %v584 = vpop.f32.mrb[0].mxu0
        %v585 = vadd.f32 0.0, %v584
        %v586 = vpop.f32.mrb[0].mxu0
        %v587 = vadd.f32 0.0, %v586
        %588 = vmatprep.mubr.bf16.mxu0 0
        %589 = vmatmul.mubr.bf16.gmra.mrb[0].mxu0 %v544
        %v590 = vpop.f32.mrb[0].mxu0
        %v591 = vadd.f32 0.0, %v590
        %v592 = vpop.f32.mrb[0].mxu0
        %v593 = vadd.f32 0.0, %v592
        %v594 = vpop.f32.mrb[0].mxu0
        %v595 = vadd.f32 0.0, %v594
        %v596 = vpop.f32.mrb[0].mxu0
        %v597 = vadd.f32 0.0, %v596
        %598 = vdwg.mxu0
        %v600 = vsel %vm473, %v514, 0
        %v603 = vsel %vm473, %v515, 0
        %605 = vmatprep.subr.bf16.mxu0 %v533
        %606 = vmatpush1.bf16.msra.mxu0 %v532
        %607 = vmatprep.subr.bf16.mxu0 %v535
        %608 = vmatpush1.bf16.msra.mxu0 %v534
        %609 = vmatprep.subr.bf16.mxu0 0
        %610 = vmatpush1.bf16.msra.mxu0 0
        %611 = vmatprep.subr.bf16.mxu0 0
        %612 = vmatpush1.bf16.msra.mxu0 0
        %613 = vmatprep.subr.bf16.mxu0 0
        %614 = vmatpush1.bf16.msra.mxu0 0
        %615 = vmatprep.subr.bf16.mxu0 0
        %616 = vmatpush1.bf16.msra.mxu0 0
        %617 = vmatprep.subr.bf16.mxu0 0
        %618 = vmatpush1.bf16.msra.mxu0 0
        %619 = vmatprep.subr.bf16.mxu0 0
        %620 = vmatpush1.bf16.msra.mxu0 0
        %621 = vmatprep.subr.bf16.mxu0 0
        %622 = vmatpush1.bf16.msra.mxu0 0
        %623 = vmatprep.subr.bf16.mxu0 0
        %624 = vmatpush1.bf16.msra.mxu0 0
        %625 = vmatprep.subr.bf16.mxu0 0
        %626 = vmatpush1.bf16.msra.mxu0 0
        %627 = vmatprep.subr.bf16.mxu0 0
        %628 = vmatpush1.bf16.msra.mxu0 0
        %629 = vmatprep.subr.bf16.mxu0 0
        %630 = vmatpush1.bf16.msra.mxu0 0
        %631 = vmatprep.subr.bf16.mxu0 0
        %632 = vmatpush1.bf16.msra.mxu0 0
        %633 = vmatprep.subr.bf16.mxu0 0
        %634 = vmatpush1.bf16.msra.mxu0 0
        %635 = vmatprep.subr.bf16.mxu0 0
        %636 = vmatpush1.bf16.msra.mxu0 0
        %637 = vmatprep.mubr.bf16.mxu0 0
        %638 = vmatmul.mubr.bf16.gmra.mrb[0].mxu0 %v600
        %v639 = vpop.f32.mrb[0].mxu0
        %v640 = vadd.f32 0.0, %v639
        %v641 = vpop.f32.mrb[0].mxu0
        %v642 = vadd.f32 0.0, %v641
        %v643 = vpop.f32.mrb[0].mxu0
        %v644 = vadd.f32 0.0, %v643
        %v645 = vpop.f32.mrb[0].mxu0
        %v646 = vadd.f32 0.0, %v645
        %647 = vmatprep.mubr.bf16.mxu0 0
        %648 = vmatmul.mubr.bf16.gmra.mrb[0].mxu0 %v603
        %v649 = vpop.f32.mrb[0].mxu0
        %v650 = vadd.f32 0.0, %v649
        %v651 = vpop.f32.mrb[0].mxu0
        %v652 = vadd.f32 0.0, %v651
        %v653 = vpop.f32.mrb[0].mxu0
        %v654 = vadd.f32 0.0, %v653
        %v655 = vpop.f32.mrb[0].mxu0
        %v656 = vadd.f32 0.0, %v655
        %657 = vdwg.mxu0
        %658 = vst [vmem:[#allocation4] sm:$0xff] %v581
        %659 = vst [vmem:[#allocation4 + $0x8] sm:$0xff] %v583
        %660 = vst [vmem:[#allocation4 + $0x10] sm:$0xff] %v585
        %661 = vst [vmem:[#allocation4 + $0x18] sm:$0xff] %v587
        %662 = vst [vmem:[#allocation4 + $0x20] sm:$0xff] %v591
        %663 = vst [vmem:[#allocation4 + $0x28] sm:$0xff] %v593
        %664 = vst [vmem:[#allocation4 + $0x30] sm:$0xff] %v595
        %665 = vst [vmem:[#allocation4 + $0x38] sm:$0xff] %v597
        %666 = vst [vmem:[#allocation5] sm:$0xff] %v640
        %667 = vst [vmem:[#allocation5 + $0x8] sm:$0xff] %v642
        %668 = vst [vmem:[#allocation5 + $0x10] sm:$0xff] %v644
        %669 = vst [vmem:[#allocation5 + $0x18] sm:$0xff] %v646
        %670 = vst [vmem:[#allocation5 + $0x20] sm:$0xff] %v650
        %671 = vst [vmem:[#allocation5 + $0x28] sm:$0xff] %v652
        %672 = vst [vmem:[#allocation5 + $0x30] sm:$0xff] %v654
        %673 = vst [vmem:[#allocation5 + $0x38] sm:$0xff] %v656
        %v674 = vld [vmem:[%s5] sm:$0xff]
        %v675 = vld [vmem:[%s5 + $0x8] sm:$0xff]
        %v676 = vld [vmem:[%s5 + $0x10] sm:$0xff]
        %v677 = vld [vmem:[%s5 + $0x18] sm:$0xff]
        %v682 = vunpack.c.l.b16 %v674
        %v683 = vunpack.c.h.b16 %v674
        %v684 = vunpack.c.l.b16 %v675
        %v685 = vunpack.c.h.b16 %v675
        %v686 = vunpack.c.l.b16 %v676
        %v687 = vunpack.c.h.b16 %v676
        %v688 = vunpack.c.l.b16 %v677
        %v689 = vunpack.c.h.b16 %v677
        %v690 = vpack.c.b16 %v684, %v682
        %v691 = vpack.c.b16 %v685, %v683
        %v692 = vpack.c.b16 %v688, %v686
        %v693 = vpack.c.b16 %v689, %v687
        %698 = vmatprep.subr.bf16.mxu0 %v691
        %699 = vmatpush1.bf16.msra.mxu0 %v690
        %700 = vmatprep.subr.bf16.mxu0 %v693
        %701 = vmatpush1.bf16.msra.mxu0 %v692
        %702 = vmatprep.subr.bf16.mxu0 0
        %703 = vmatpush1.bf16.msra.mxu0 0
        %704 = vmatprep.subr.bf16.mxu0 0
        %705 = vmatpush1.bf16.msra.mxu0 0
        %706 = vmatprep.subr.bf16.mxu0 0
        %707 = vmatpush1.bf16.msra.mxu0 0
        %708 = vmatprep.subr.bf16.mxu0 0
        %709 = vmatpush1.bf16.msra.mxu0 0
        %710 = vmatprep.subr.bf16.mxu0 0
        %711 = vmatpush1.bf16.msra.mxu0 0
        %712 = vmatprep.subr.bf16.mxu0 0
        %713 = vmatpush1.bf16.msra.mxu0 0
        %714 = vmatprep.subr.bf16.mxu0 0
        %715 = vmatpush1.bf16.msra.mxu0 0
        %716 = vmatprep.subr.bf16.mxu0 0
        %717 = vmatpush1.bf16.msra.mxu0 0
        %718 = vmatprep.subr.bf16.mxu0 0
        %719 = vmatpush1.bf16.msra.mxu0 0
        %720 = vmatprep.subr.bf16.mxu0 0
        %721 = vmatpush1.bf16.msra.mxu0 0
        %722 = vmatprep.subr.bf16.mxu0 0
        %723 = vmatpush1.bf16.msra.mxu0 0
        %724 = vmatprep.subr.bf16.mxu0 0
        %725 = vmatpush1.bf16.msra.mxu0 0
        %726 = vmatprep.subr.bf16.mxu0 0
        %727 = vmatpush1.bf16.msra.mxu0 0
        %728 = vmatprep.subr.bf16.mxu0 0
        %729 = vmatpush1.bf16.msra.mxu0 0
        %730 = vmatprep.mubr.bf16.mxu0 0
        %731 = vmatmul.mubr.bf16.gmra.mrb[0].mxu0 %v541
        %v732 = vpop.f32.mrb[0].mxu0
        %v733 = vadd.f32 0.0, %v732
        %v734 = vpop.f32.mrb[0].mxu0
        %v735 = vadd.f32 0.0, %v734
        %v736 = vpop.f32.mrb[0].mxu0
        %v737 = vadd.f32 0.0, %v736
        %v738 = vpop.f32.mrb[0].mxu0
        %v739 = vadd.f32 0.0, %v738
        %740 = vmatprep.mubr.bf16.mxu0 0
        %741 = vmatmul.mubr.bf16.gmra.mrb[0].mxu0 %v544
        %v742 = vpop.f32.mrb[0].mxu0
        %v743 = vadd.f32 0.0, %v742
        %v744 = vpop.f32.mrb[0].mxu0
        %v745 = vadd.f32 0.0, %v744
        %v746 = vpop.f32.mrb[0].mxu0
        %v747 = vadd.f32 0.0, %v746
        %v748 = vpop.f32.mrb[0].mxu0
        %v749 = vadd.f32 0.0, %v748
        %750 = vdwg.mxu0
        %751 = vmatprep.subr.bf16.mxu0 %v691
        %752 = vmatpush1.bf16.msra.mxu0 %v690
        %753 = vmatprep.subr.bf16.mxu0 %v693
        %754 = vmatpush1.bf16.msra.mxu0 %v692
        %755 = vmatprep.subr.bf16.mxu0 0
        %756 = vmatpush1.bf16.msra.mxu0 0
        %757 = vmatprep.subr.bf16.mxu0 0
        %758 = vmatpush1.bf16.msra.mxu0 0
        %759 = vmatprep.subr.bf16.mxu0 0
        %760 = vmatpush1.bf16.msra.mxu0 0
        %761 = vmatprep.subr.bf16.mxu0 0
        %762 = vmatpush1.bf16.msra.mxu0 0
        %763 = vmatprep.subr.bf16.mxu0 0
        %764 = vmatpush1.bf16.msra.mxu0 0
        %765 = vmatprep.subr.bf16.mxu0 0
        %766 = vmatpush1.bf16.msra.mxu0 0
        %767 = vmatprep.subr.bf16.mxu0 0
        %768 = vmatpush1.bf16.msra.mxu0 0
        %769 = vmatprep.subr.bf16.mxu0 0
        %770 = vmatpush1.bf16.msra.mxu0 0
        %771 = vmatprep.subr.bf16.mxu0 0
        %772 = vmatpush1.bf16.msra.mxu0 0
        %773 = vmatprep.subr.bf16.mxu0 0
        %774 = vmatpush1.bf16.msra.mxu0 0
        %775 = vmatprep.subr.bf16.mxu0 0
        %776 = vmatpush1.bf16.msra.mxu0 0
        %777 = vmatprep.subr.bf16.mxu0 0
        %778 = vmatpush1.bf16.msra.mxu0 0
        %779 = vmatprep.subr.bf16.mxu0 0
        %780 = vmatpush1.bf16.msra.mxu0 0
        %781 = vmatprep.subr.bf16.mxu0 0
        %782 = vmatpush1.bf16.msra.mxu0 0
        %783 = vmatprep.mubr.bf16.mxu0 0
        %784 = vmatmul.mubr.bf16.gmra.mrb[0].mxu0 %v600
        %v785 = vpop.f32.mrb[0].mxu0
        %v786 = vadd.f32 0.0, %v785
        %v787 = vpop.f32.mrb[0].mxu0
        %v788 = vadd.f32 0.0, %v787
        %v789 = vpop.f32.mrb[0].mxu0
        %v790 = vadd.f32 0.0, %v789
        %v791 = vpop.f32.mrb[0].mxu0
        %v792 = vadd.f32 0.0, %v791
        %793 = vmatprep.mubr.bf16.mxu0 0
        %794 = vmatmul.mubr.bf16.gmra.mrb[0].mxu0 %v603
        %v795 = vpop.f32.mrb[0].mxu0
        %v796 = vadd.f32 0.0, %v795
        %v797 = vpop.f32.mrb[0].mxu0
        %v798 = vadd.f32 0.0, %v797
        %v799 = vpop.f32.mrb[0].mxu0
        %v800 = vadd.f32 0.0, %v799
        %v801 = vpop.f32.mrb[0].mxu0
        %v802 = vadd.f32 0.0, %v801
        %803 = vdwg.mxu0
        %v804 = vld [vmem:[#allocation4] sm:$0xff]
        %v805 = vld [vmem:[#allocation4 + $0x8] sm:$0xff]
        %v806 = vld [vmem:[#allocation4 + $0x10] sm:$0xff]
        %v807 = vld [vmem:[#allocation4 + $0x18] sm:$0xff]
        %v808 = vld [vmem:[#allocation4 + $0x20] sm:$0xff]
        %v809 = vld [vmem:[#allocation4 + $0x28] sm:$0xff]
        %v810 = vld [vmem:[#allocation4 + $0x30] sm:$0xff]
        %v811 = vld [vmem:[#allocation4 + $0x38] sm:$0xff]
        %v812 = vadd.f32 %v804, %v733
        %v813 = vadd.f32 %v805, %v735
        %v814 = vadd.f32 %v806, %v737
        %v815 = vadd.f32 %v807, %v739
        %v816 = vadd.f32 %v808, %v743
        %v817 = vadd.f32 %v809, %v745
        %v818 = vadd.f32 %v810, %v747
        %v819 = vadd.f32 %v811, %v749
        %820 = vst [vmem:[#allocation4] sm:$0xff] %v812
        %821 = vst [vmem:[#allocation4 + $0x8] sm:$0xff] %v813
        %822 = vst [vmem:[#allocation4 + $0x10] sm:$0xff] %v814
        %823 = vst [vmem:[#allocation4 + $0x18] sm:$0xff] %v815
        %824 = vst [vmem:[#allocation4 + $0x20] sm:$0xff] %v816
        %825 = vst [vmem:[#allocation4 + $0x28] sm:$0xff] %v817
        %826 = vst [vmem:[#allocation4 + $0x30] sm:$0xff] %v818
        %827 = vst [vmem:[#allocation4 + $0x38] sm:$0xff] %v819
        %v828 = vld [vmem:[#allocation5] sm:$0xff]
        %v829 = vld [vmem:[#allocation5 + $0x8] sm:$0xff]
        %v830 = vld [vmem:[#allocation5 + $0x10] sm:$0xff]
        %v831 = vld [vmem:[#allocation5 + $0x18] sm:$0xff]
        %v832 = vld [vmem:[#allocation5 + $0x20] sm:$0xff]
        %v833 = vld [vmem:[#allocation5 + $0x28] sm:$0xff]
        %v834 = vld [vmem:[#allocation5 + $0x30] sm:$0xff]
        %v835 = vld [vmem:[#allocation5 + $0x38] sm:$0xff]
        %v836 = vadd.f32 %v828, %v786
        %v837 = vadd.f32 %v829, %v788
        %v838 = vadd.f32 %v830, %v790
        %v839 = vadd.f32 %v831, %v792
        %v840 = vadd.f32 %v832, %v796
        %v841 = vadd.f32 %v833, %v798
        %v842 = vadd.f32 %v834, %v800
        %v843 = vadd.f32 %v835, %v802
        %844 = vst [vmem:[#allocation5] sm:$0xff] %v836
        %845 = vst [vmem:[#allocation5 + $0x8] sm:$0xff] %v837
        %846 = vst [vmem:[#allocation5 + $0x10] sm:$0xff] %v838
        %847 = vst [vmem:[#allocation5 + $0x18] sm:$0xff] %v839
        %848 = vst [vmem:[#allocation5 + $0x20] sm:$0xff] %v840
        %849 = vst [vmem:[#allocation5 + $0x28] sm:$0xff] %v841
        %850 = vst [vmem:[#allocation5 + $0x30] sm:$0xff] %v842
        %851 = vst [vmem:[#allocation5 + $0x38] sm:$0xff] %v843
        %v852 = vld [vmem:[#allocation2] sm:$0xff]
        %v853 = vld [vmem:[#allocation2 + $0x8] sm:$0xff]
        %v854 = vld [vmem:[#allocation2 + $0x10] sm:$0x1]
        %v855 = vld [vmem:[#allocation3] sm:$0xff]
        %v856 = vld [vmem:[#allocation3 + $0x8] sm:$0xff]
        %v857 = vld [vmem:[#allocation3 + $0x10] sm:$0x1]
        %s858 = scalar_lea.vmem %s4, 32
        %v859 = vld [vmem:[%s858] sm:$0xff]
        %v860 = vld [vmem:[%s858 + $0x8] sm:$0xff]
        %v861 = vld [vmem:[%s858 + $0x10] sm:$0xff]
        %v862 = vld [vmem:[%s858 + $0x18] sm:$0xff]
        %vm863 = vsmask.f32 7424
        %v865 = vshrl.u32 %v852, 16
        %v867 = vshll.u32 %v852, 16
        %v869 = vrot.slane %v867, 1
        %v870 = vor.u32 %v865, %v869
        %v872 = vshll.u32 %v853, 16
        %v874 = vrot.slane %v872, 1
        %v875 = vsel %vm863, %v870, %v874
        %v876 = vshrl.u32 %v853, 16
        %v878 = vor.u32 %v876, %v874
        %v880 = vshll.u32 %v854, 16
        %v882 = vrot.slane %v880, 1
        %v883 = vsel %vm863, %v878, %v882
        %v888 = vunpack.c.l.b16 %v859
        %v889 = vunpack.c.h.b16 %v859
        %v890 = vunpack.c.l.b16 %v860
        %v891 = vunpack.c.h.b16 %v860
        %v892 = vunpack.c.l.b16 %v861
        %v893 = vunpack.c.h.b16 %v861
        %v894 = vunpack.c.l.b16 %v862
        %v895 = vunpack.c.h.b16 %v862
        %v896 = vpack.c.b16 %v890, %v888
        %v897 = vpack.c.b16 %v891, %v889
        %v898 = vpack.c.b16 %v894, %v892
        %v899 = vpack.c.b16 %v895, %v893
        %v905 = vsel %vm473, %v875, 0
        %v908 = vsel %vm473, %v883, 0
        %910 = vmatprep.subr.bf16.mxu0 %v897
        %911 = vmatpush1.bf16.msra.mxu0 %v896
        %912 = vmatprep.subr.bf16.mxu0 %v899
        %913 = vmatpush1.bf16.msra.mxu0 %v898
        %914 = vmatprep.subr.bf16.mxu0 0
        %915 = vmatpush1.bf16.msra.mxu0 0
        %916 = vmatprep.subr.bf16.mxu0 0
        %917 = vmatpush1.bf16.msra.mxu0 0
        %918 = vmatprep.subr.bf16.mxu0 0
        %919 = vmatpush1.bf16.msra.mxu0 0
        %920 = vmatprep.subr.bf16.mxu0 0
        %921 = vmatpush1.bf16.msra.mxu0 0
        %922 = vmatprep.subr.bf16.mxu0 0
        %923 = vmatpush1.bf16.msra.mxu0 0
        %924 = vmatprep.subr.bf16.mxu0 0
        %925 = vmatpush1.bf16.msra.mxu0 0
        %926 = vmatprep.subr.bf16.mxu0 0
        %927 = vmatpush1.bf16.msra.mxu0 0
        %928 = vmatprep.subr.bf16.mxu0 0
        %929 = vmatpush1.bf16.msra.mxu0 0
        %930 = vmatprep.subr.bf16.mxu0 0
        %931 = vmatpush1.bf16.msra.mxu0 0
        %932 = vmatprep.subr.bf16.mxu0 0
        %933 = vmatpush1.bf16.msra.mxu0 0
        %934 = vmatprep.subr.bf16.mxu0 0
        %935 = vmatpush1.bf16.msra.mxu0 0
        %936 = vmatprep.subr.bf16.mxu0 0
        %937 = vmatpush1.bf16.msra.mxu0 0
        %938 = vmatprep.subr.bf16.mxu0 0
        %939 = vmatpush1.bf16.msra.mxu0 0
        %940 = vmatprep.subr.bf16.mxu0 0
        %941 = vmatpush1.bf16.msra.mxu0 0
        %942 = vmatprep.mubr.bf16.mxu0 0
        %943 = vmatmul.mubr.bf16.gmra.mrb[0].mxu0 %v905
        %v944 = vpop.f32.mrb[0].mxu0
        %v945 = vadd.f32 0.0, %v944
        %v946 = vpop.f32.mrb[0].mxu0
        %v947 = vadd.f32 0.0, %v946
        %v948 = vpop.f32.mrb[0].mxu0
        %v949 = vadd.f32 0.0, %v948
        %v950 = vpop.f32.mrb[0].mxu0
        %v951 = vadd.f32 0.0, %v950
        %952 = vmatprep.mubr.bf16.mxu0 0
        %953 = vmatmul.mubr.bf16.gmra.mrb[0].mxu0 %v908
        %v954 = vpop.f32.mrb[0].mxu0
        %v955 = vadd.f32 0.0, %v954
        %v956 = vpop.f32.mrb[0].mxu0
        %v957 = vadd.f32 0.0, %v956
        %v958 = vpop.f32.mrb[0].mxu0
        %v959 = vadd.f32 0.0, %v958
        %v960 = vpop.f32.mrb[0].mxu0
        %v961 = vadd.f32 0.0, %v960
        %962 = vdwg.mxu0
        %v964 = vshrl.u32 %v855, 16
        %v966 = vshll.u32 %v855, 16
        %v968 = vrot.slane %v966, 1
        %v969 = vor.u32 %v964, %v968
        %v971 = vshll.u32 %v856, 16
        %v973 = vrot.slane %v971, 1
        %v974 = vsel %vm863, %v969, %v973
        %v975 = vshrl.u32 %v856, 16
        %v977 = vor.u32 %v975, %v973
        %v979 = vshll.u32 %v857, 16
        %v981 = vrot.slane %v979, 1
        %v982 = vsel %vm863, %v977, %v981
        %v984 = vsel %vm473, %v974, 0
        %v987 = vsel %vm473, %v982, 0
        %989 = vmatprep.subr.bf16.mxu0 %v897
        %990 = vmatpush1.bf16.msra.mxu0 %v896
        %991 = vmatprep.subr.bf16.mxu0 %v899
        %992 = vmatpush1.bf16.msra.mxu0 %v898
        %993 = vmatprep.subr.bf16.mxu0 0
        %994 = vmatpush1.bf16.msra.mxu0 0
        %995 = vmatprep.subr.bf16.mxu0 0
        %996 = vmatpush1.bf16.msra.mxu0 0
        %997 = vmatprep.subr.bf16.mxu0 0
        %998 = vmatpush1.bf16.msra.mxu0 0
        %999 = vmatprep.subr.bf16.mxu0 0
        %1000 = vmatpush1.bf16.msra.mxu0 0
        %1001 = vmatprep.subr.bf16.mxu0 0
        %1002 = vmatpush1.bf16.msra.mxu0 0
        %1003 = vmatprep.subr.bf16.mxu0 0
        %1004 = vmatpush1.bf16.msra.mxu0 0
        %1005 = vmatprep.subr.bf16.mxu0 0
        %1006 = vmatpush1.bf16.msra.mxu0 0
        %1007 = vmatprep.subr.bf16.mxu0 0
        %1008 = vmatpush1.bf16.msra.mxu0 0
        %1009 = vmatprep.subr.bf16.mxu0 0
        %1010 = vmatpush1.bf16.msra.mxu0 0
        %1011 = vmatprep.subr.bf16.mxu0 0
        %1012 = vmatpush1.bf16.msra.mxu0 0
        %1013 = vmatprep.subr.bf16.mxu0 0
        %1014 = vmatpush1.bf16.msra.mxu0 0
        %1015 = vmatprep.subr.bf16.mxu0 0
        %1016 = vmatpush1.bf16.msra.mxu0 0
        %1017 = vmatprep.subr.bf16.mxu0 0
        %1018 = vmatpush1.bf16.msra.mxu0 0
        %1019 = vmatprep.subr.bf16.mxu0 0
        %1020 = vmatpush1.bf16.msra.mxu0 0
        %1021 = vmatprep.mubr.bf16.mxu0 0
        %1022 = vmatmul.mubr.bf16.gmra.mrb[0].mxu0 %v984
        %v1023 = vpop.f32.mrb[0].mxu0
        %v1024 = vadd.f32 0.0, %v1023
        %v1025 = vpop.f32.mrb[0].mxu0
        %v1026 = vadd.f32 0.0, %v1025
        %v1027 = vpop.f32.mrb[0].mxu0
        %v1028 = vadd.f32 0.0, %v1027
        %v1029 = vpop.f32.mrb[0].mxu0
        %v1030 = vadd.f32 0.0, %v1029
        %1031 = vmatprep.mubr.bf16.mxu0 0
        %1032 = vmatmul.mubr.bf16.gmra.mrb[0].mxu0 %v987
        %v1033 = vpop.f32.mrb[0].mxu0
        %v1034 = vadd.f32 0.0, %v1033
        %v1035 = vpop.f32.mrb[0].mxu0
        %v1036 = vadd.f32 0.0, %v1035
        %v1037 = vpop.f32.mrb[0].mxu0
        %v1038 = vadd.f32 0.0, %v1037
        %v1039 = vpop.f32.mrb[0].mxu0
        %v1040 = vadd.f32 0.0, %v1039
        %1041 = vdwg.mxu0
        %v1042 = vld [vmem:[#allocation4] sm:$0xff]
        %v1043 = vld [vmem:[#allocation4 + $0x8] sm:$0xff]
        %v1044 = vld [vmem:[#allocation4 + $0x10] sm:$0xff]
        %v1045 = vld [vmem:[#allocation4 + $0x18] sm:$0xff]
        %v1046 = vld [vmem:[#allocation4 + $0x20] sm:$0xff]
        %v1047 = vld [vmem:[#allocation4 + $0x28] sm:$0xff]
        %v1048 = vld [vmem:[#allocation4 + $0x30] sm:$0xff]
        %v1049 = vld [vmem:[#allocation4 + $0x38] sm:$0xff]
        %v1050 = vadd.f32 %v1042, %v945
        %v1051 = vadd.f32 %v1043, %v947
        %v1052 = vadd.f32 %v1044, %v949
        %v1053 = vadd.f32 %v1045, %v951
        %v1054 = vadd.f32 %v1046, %v955
        %v1055 = vadd.f32 %v1047, %v957
        %v1056 = vadd.f32 %v1048, %v959
        %v1057 = vadd.f32 %v1049, %v961
        %1058 = vst [vmem:[#allocation4] sm:$0xff] %v1050
        %1059 = vst [vmem:[#allocation4 + $0x8] sm:$0xff] %v1051
        %1060 = vst [vmem:[#allocation4 + $0x10] sm:$0xff] %v1052
        %1061 = vst [vmem:[#allocation4 + $0x18] sm:$0xff] %v1053
        %1062 = vst [vmem:[#allocation4 + $0x20] sm:$0xff] %v1054
        %1063 = vst [vmem:[#allocation4 + $0x28] sm:$0xff] %v1055
        %1064 = vst [vmem:[#allocation4 + $0x30] sm:$0xff] %v1056
        %1065 = vst [vmem:[#allocation4 + $0x38] sm:$0xff] %v1057
        %v1066 = vld [vmem:[#allocation5] sm:$0xff]
        %v1067 = vld [vmem:[#allocation5 + $0x8] sm:$0xff]
        %v1068 = vld [vmem:[#allocation5 + $0x10] sm:$0xff]
        %v1069 = vld [vmem:[#allocation5 + $0x18] sm:$0xff]
        %v1070 = vld [vmem:[#allocation5 + $0x20] sm:$0xff]
        %v1071 = vld [vmem:[#allocation5 + $0x28] sm:$0xff]
        %v1072 = vld [vmem:[#allocation5 + $0x30] sm:$0xff]
        %v1073 = vld [vmem:[#allocation5 + $0x38] sm:$0xff]
        %v1074 = vadd.f32 %v1066, %v1024
        %v1075 = vadd.f32 %v1067, %v1026
        %v1076 = vadd.f32 %v1068, %v1028
        %v1077 = vadd.f32 %v1069, %v1030
        %v1078 = vadd.f32 %v1070, %v1034
        %v1079 = vadd.f32 %v1071, %v1036
        %v1080 = vadd.f32 %v1072, %v1038
        %v1081 = vadd.f32 %v1073, %v1040
        %1082 = vst [vmem:[#allocation5] sm:$0xff] %v1074
        %1083 = vst [vmem:[#allocation5 + $0x8] sm:$0xff] %v1075
        %1084 = vst [vmem:[#allocation5 + $0x10] sm:$0xff] %v1076
        %1085 = vst [vmem:[#allocation5 + $0x18] sm:$0xff] %v1077
        %1086 = vst [vmem:[#allocation5 + $0x20] sm:$0xff] %v1078
        %1087 = vst [vmem:[#allocation5 + $0x28] sm:$0xff] %v1079
        %1088 = vst [vmem:[#allocation5 + $0x30] sm:$0xff] %v1080
        %1089 = vst [vmem:[#allocation5 + $0x38] sm:$0xff] %v1081
        %s1090 = scalar_lea.vmem %s5, 32
        %v1091 = vld [vmem:[%s1090] sm:$0xff]
        %v1092 = vld [vmem:[%s1090 + $0x8] sm:$0xff]
        %v1093 = vld [vmem:[%s1090 + $0x10] sm:$0xff]
        %v1094 = vld [vmem:[%s1090 + $0x18] sm:$0xff]
        %v1099 = vunpack.c.l.b16 %v1091
        %v1100 = vunpack.c.h.b16 %v1091
        %v1101 = vunpack.c.l.b16 %v1092
        %v1102 = vunpack.c.h.b16 %v1092
        %v1103 = vunpack.c.l.b16 %v1093
        %v1104 = vunpack.c.h.b16 %v1093
        %v1105 = vunpack.c.l.b16 %v1094
        %v1106 = vunpack.c.h.b16 %v1094
        %v1107 = vpack.c.b16 %v1101, %v1099
        %v1108 = vpack.c.b16 %v1102, %v1100
        %v1109 = vpack.c.b16 %v1105, %v1103
        %v1110 = vpack.c.b16 %v1106, %v1104
        %1115 = vmatprep.subr.bf16.mxu0 %v1108
        %1116 = vmatpush1.bf16.msra.mxu0 %v1107
        %1117 = vmatprep.subr.bf16.mxu0 %v1110
        %1118 = vmatpush1.bf16.msra.mxu0 %v1109
        %1119 = vmatprep.subr.bf16.mxu0 0
        %1120 = vmatpush1.bf16.msra.mxu0 0
        %1121 = vmatprep.subr.bf16.mxu0 0
        %1122 = vmatpush1.bf16.msra.mxu0 0
        %1123 = vmatprep.subr.bf16.mxu0 0
        %1124 = vmatpush1.bf16.msra.mxu0 0
        %1125 = vmatprep.subr.bf16.mxu0 0
        %1126 = vmatpush1.bf16.msra.mxu0 0
        %1127 = vmatprep.subr.bf16.mxu0 0
        %1128 = vmatpush1.bf16.msra.mxu0 0
        %1129 = vmatprep.subr.bf16.mxu0 0
        %1130 = vmatpush1.bf16.msra.mxu0 0
        %1131 = vmatprep.subr.bf16.mxu0 0
        %1132 = vmatpush1.bf16.msra.mxu0 0
        %1133 = vmatprep.subr.bf16.mxu0 0
        %1134 = vmatpush1.bf16.msra.mxu0 0
        %1135 = vmatprep.subr.bf16.mxu0 0
        %1136 = vmatpush1.bf16.msra.mxu0 0
        %1137 = vmatprep.subr.bf16.mxu0 0
        %1138 = vmatpush1.bf16.msra.mxu0 0
        %1139 = vmatprep.subr.bf16.mxu0 0
        %1140 = vmatpush1.bf16.msra.mxu0 0
        %1141 = vmatprep.subr.bf16.mxu0 0
        %1142 = vmatpush1.bf16.msra.mxu0 0
        %1143 = vmatprep.subr.bf16.mxu0 0
        %1144 = vmatpush1.bf16.msra.mxu0 0
        %1145 = vmatprep.subr.bf16.mxu0 0
        %1146 = vmatpush1.bf16.msra.mxu0 0
        %1147 = vmatprep.mubr.bf16.mxu0 0
        %1148 = vmatmul.mubr.bf16.gmra.mrb[0].mxu0 %v905
        %v1149 = vpop.f32.mrb[0].mxu0
        %v1150 = vadd.f32 0.0, %v1149
        %v1151 = vpop.f32.mrb[0].mxu0
        %v1152 = vadd.f32 0.0, %v1151
        %v1153 = vpop.f32.mrb[0].mxu0
        %v1154 = vadd.f32 0.0, %v1153
        %v1155 = vpop.f32.mrb[0].mxu0
        %v1156 = vadd.f32 0.0, %v1155
        %1157 = vmatprep.mubr.bf16.mxu0 0
        %1158 = vmatmul.mubr.bf16.gmra.mrb[0].mxu0 %v908
        %v1159 = vpop.f32.mrb[0].mxu0
        %v1160 = vadd.f32 0.0, %v1159
        %v1161 = vpop.f32.mrb[0].mxu0
        %v1162 = vadd.f32 0.0, %v1161
        %v1163 = vpop.f32.mrb[0].mxu0
        %v1164 = vadd.f32 0.0, %v1163
        %v1165 = vpop.f32.mrb[0].mxu0
        %v1166 = vadd.f32 0.0, %v1165
        %1167 = vdwg.mxu0
        %1168 = vmatprep.subr.bf16.mxu0 %v1108
        %1169 = vmatpush1.bf16.msra.mxu0 %v1107
        %1170 = vmatprep.subr.bf16.mxu0 %v1110
        %1171 = vmatpush1.bf16.msra.mxu0 %v1109
        %1172 = vmatprep.subr.bf16.mxu0 0
        %1173 = vmatpush1.bf16.msra.mxu0 0
        %1174 = vmatprep.subr.bf16.mxu0 0
        %1175 = vmatpush1.bf16.msra.mxu0 0
        %1176 = vmatprep.subr.bf16.mxu0 0
        %1177 = vmatpush1.bf16.msra.mxu0 0
        %1178 = vmatprep.subr.bf16.mxu0 0
        %1179 = vmatpush1.bf16.msra.mxu0 0
        %1180 = vmatprep.subr.bf16.mxu0 0
        %1181 = vmatpush1.bf16.msra.mxu0 0
        %1182 = vmatprep.subr.bf16.mxu0 0
        %1183 = vmatpush1.bf16.msra.mxu0 0
        %1184 = vmatprep.subr.bf16.mxu0 0
        %1185 = vmatpush1.bf16.msra.mxu0 0
        %1186 = vmatprep.subr.bf16.mxu0 0
        %1187 = vmatpush1.bf16.msra.mxu0 0
        %1188 = vmatprep.subr.bf16.mxu0 0
        %1189 = vmatpush1.bf16.msra.mxu0 0
        %1190 = vmatprep.subr.bf16.mxu0 0
        %1191 = vmatpush1.bf16.msra.mxu0 0
        %1192 = vmatprep.subr.bf16.mxu0 0
        %1193 = vmatpush1.bf16.msra.mxu0 0
        %1194 = vmatprep.subr.bf16.mxu0 0
        %1195 = vmatpush1.bf16.msra.mxu0 0
        %1196 = vmatprep.subr.bf16.mxu0 0
        %1197 = vmatpush1.bf16.msra.mxu0 0
        %1198 = vmatprep.subr.bf16.mxu0 0
        %1199 = vmatpush1.bf16.msra.mxu0 0
        %1200 = vmatprep.mubr.bf16.mxu0 0
        %1201 = vmatmul.mubr.bf16.gmra.mrb[0].mxu0 %v984
        %v1202 = vpop.f32.mrb[0].mxu0
        %v1203 = vadd.f32 0.0, %v1202
        %v1204 = vpop.f32.mrb[0].mxu0
        %v1205 = vadd.f32 0.0, %v1204
        %v1206 = vpop.f32.mrb[0].mxu0
        %v1207 = vadd.f32 0.0, %v1206
        %v1208 = vpop.f32.mrb[0].mxu0
        %v1209 = vadd.f32 0.0, %v1208
        %1210 = vmatprep.mubr.bf16.mxu0 0
        %1211 = vmatmul.mubr.bf16.gmra.mrb[0].mxu0 %v987
        %v1212 = vpop.f32.mrb[0].mxu0
        %v1213 = vadd.f32 0.0, %v1212
        %v1214 = vpop.f32.mrb[0].mxu0
        %v1215 = vadd.f32 0.0, %v1214
        %v1216 = vpop.f32.mrb[0].mxu0
        %v1217 = vadd.f32 0.0, %v1216
        %v1218 = vpop.f32.mrb[0].mxu0
        %v1219 = vadd.f32 0.0, %v1218
        %1220 = vdwg.mxu0
        %v1221 = vld [vmem:[#allocation4] sm:$0xff]
        %v1222 = vld [vmem:[#allocation4 + $0x8] sm:$0xff]
        %v1223 = vld [vmem:[#allocation4 + $0x10] sm:$0xff]
        %v1224 = vld [vmem:[#allocation4 + $0x18] sm:$0xff]
        %v1225 = vld [vmem:[#allocation4 + $0x20] sm:$0xff]
        %v1226 = vld [vmem:[#allocation4 + $0x28] sm:$0xff]
        %v1227 = vld [vmem:[#allocation4 + $0x30] sm:$0xff]
        %v1228 = vld [vmem:[#allocation4 + $0x38] sm:$0xff]
        %v1229 = vadd.f32 %v1221, %v1150
        %v1230 = vadd.f32 %v1222, %v1152
        %v1231 = vadd.f32 %v1223, %v1154
        %v1232 = vadd.f32 %v1224, %v1156
        %v1233 = vadd.f32 %v1225, %v1160
        %v1234 = vadd.f32 %v1226, %v1162
        %v1235 = vadd.f32 %v1227, %v1164
        %v1236 = vadd.f32 %v1228, %v1166
        %1237 = vst [vmem:[#allocation4] sm:$0xff] %v1229
        %1238 = vst [vmem:[#allocation4 + $0x8] sm:$0xff] %v1230
        %1239 = vst [vmem:[#allocation4 + $0x10] sm:$0xff] %v1231
        %1240 = vst [vmem:[#allocation4 + $0x18] sm:$0xff] %v1232
        %1241 = vst [vmem:[#allocation4 + $0x20] sm:$0xff] %v1233
        %1242 = vst [vmem:[#allocation4 + $0x28] sm:$0xff] %v1234
        %1243 = vst [vmem:[#allocation4 + $0x30] sm:$0xff] %v1235
        %1244 = vst [vmem:[#allocation4 + $0x38] sm:$0xff] %v1236
        %v1245 = vld [vmem:[#allocation5] sm:$0xff]
        %v1246 = vld [vmem:[#allocation5 + $0x8] sm:$0xff]
        %v1247 = vld [vmem:[#allocation5 + $0x10] sm:$0xff]
        %v1248 = vld [vmem:[#allocation5 + $0x18] sm:$0xff]
        %v1249 = vld [vmem:[#allocation5 + $0x20] sm:$0xff]
        %v1250 = vld [vmem:[#allocation5 + $0x28] sm:$0xff]
        %v1251 = vld [vmem:[#allocation5 + $0x30] sm:$0xff]
        %v1252 = vld [vmem:[#allocation5 + $0x38] sm:$0xff]
        %v1253 = vadd.f32 %v1245, %v1203
        %v1254 = vadd.f32 %v1246, %v1205
        %v1255 = vadd.f32 %v1247, %v1207
        %v1256 = vadd.f32 %v1248, %v1209
        %v1257 = vadd.f32 %v1249, %v1213
        %v1258 = vadd.f32 %v1250, %v1215
        %v1259 = vadd.f32 %v1251, %v1217
        %v1260 = vadd.f32 %v1252, %v1219
        %1261 = vst [vmem:[#allocation5] sm:$0xff] %v1253
        %1262 = vst [vmem:[#allocation5 + $0x8] sm:$0xff] %v1254
        %1263 = vst [vmem:[#allocation5 + $0x10] sm:$0xff] %v1255
        %1264 = vst [vmem:[#allocation5 + $0x18] sm:$0xff] %v1256
        %1265 = vst [vmem:[#allocation5 + $0x20] sm:$0xff] %v1257
        %1266 = vst [vmem:[#allocation5 + $0x28] sm:$0xff] %v1258
        %1267 = vst [vmem:[#allocation5 + $0x30] sm:$0xff] %v1259
        %1268 = vst [vmem:[#allocation5 + $0x38] sm:$0xff] %v1260
        %v1269 = vld [vmem:[#allocation2] sm:$0xfe]
        %v1270 = vld [vmem:[#allocation2 + $0x8] sm:$0xff]
        %v1271 = vld [vmem:[#allocation2 + $0x10] sm:$0x1]
        %v1272 = vld [vmem:[#allocation3] sm:$0xfe]
        %v1273 = vld [vmem:[#allocation3 + $0x8] sm:$0xff]
        %v1274 = vld [vmem:[#allocation3 + $0x10] sm:$0x1]
        %s1275 = scalar_lea.vmem %s4, 64
        %v1276 = vld [vmem:[%s1275] sm:$0xff]
        %v1277 = vld [vmem:[%s1275 + $0x8] sm:$0xff]
        %v1278 = vld [vmem:[%s1275 + $0x10] sm:$0xff]
        %v1279 = vld [vmem:[%s1275 + $0x18] sm:$0xff]
        %vm1283 = vcmask 1046528
        %v1284 = vrot.slane %v1269, 1
        %v1285 = vrot.slane %v1270, 1
        %v1286 = vsel %vm1283, %v1284, %v1285
        %v1287 = vrot.slane %v1271, 1
        %v1288 = vsel %vm1283, %v1285, %v1287
        %v1293 = vunpack.c.l.b16 %v1276
        %v1294 = vunpack.c.h.b16 %v1276
        %v1295 = vunpack.c.l.b16 %v1277
        %v1296 = vunpack.c.h.b16 %v1277
        %v1297 = vunpack.c.l.b16 %v1278
        %v1298 = vunpack.c.h.b16 %v1278
        %v1299 = vunpack.c.l.b16 %v1279
        %v1300 = vunpack.c.h.b16 %v1279
        %v1301 = vpack.c.b16 %v1295, %v1293
        %v1302 = vpack.c.b16 %v1296, %v1294
        %v1303 = vpack.c.b16 %v1299, %v1297
        %v1304 = vpack.c.b16 %v1300, %v1298
        %v1310 = vsel %vm473, %v1286, 0
        %v1313 = vsel %vm473, %v1288, 0
        %1315 = vmatprep.subr.bf16.mxu0 %v1302
        %1316 = vmatpush1.bf16.msra.mxu0 %v1301
        %1317 = vmatprep.subr.bf16.mxu0 %v1304
        %1318 = vmatpush1.bf16.msra.mxu0 %v1303
        %1319 = vmatprep.subr.bf16.mxu0 0
        %1320 = vmatpush1.bf16.msra.mxu0 0
        %1321 = vmatprep.subr.bf16.mxu0 0
        %1322 = vmatpush1.bf16.msra.mxu0 0
        %1323 = vmatprep.subr.bf16.mxu0 0
        %1324 = vmatpush1.bf16.msra.mxu0 0
        %1325 = vmatprep.subr.bf16.mxu0 0
        %1326 = vmatpush1.bf16.msra.mxu0 0
        %1327 = vmatprep.subr.bf16.mxu0 0
        %1328 = vmatpush1.bf16.msra.mxu0 0
        %1329 = vmatprep.subr.bf16.mxu0 0
        %1330 = vmatpush1.bf16.msra.mxu0 0
        %1331 = vmatprep.subr.bf16.mxu0 0
        %1332 = vmatpush1.bf16.msra.mxu0 0
        %1333 = vmatprep.subr.bf16.mxu0 0
        %1334 = vmatpush1.bf16.msra.mxu0 0
        %1335 = vmatprep.subr.bf16.mxu0 0
        %1336 = vmatpush1.bf16.msra.mxu0 0
        %1337 = vmatprep.subr.bf16.mxu0 0
        %1338 = vmatpush1.bf16.msra.mxu0 0
        %1339 = vmatprep.subr.bf16.mxu0 0
        %1340 = vmatpush1.bf16.msra.mxu0 0
        %1341 = vmatprep.subr.bf16.mxu0 0
        %1342 = vmatpush1.bf16.msra.mxu0 0
        %1343 = vmatprep.subr.bf16.mxu0 0
        %1344 = vmatpush1.bf16.msra.mxu0 0
        %1345 = vmatprep.subr.bf16.mxu0 0
        %1346 = vmatpush1.bf16.msra.mxu0 0
        %1347 = vmatprep.mubr.bf16.mxu0 0
        %1348 = vmatmul.mubr.bf16.gmra.mrb[0].mxu0 %v1310
        %v1349 = vpop.f32.mrb[0].mxu0
        %v1350 = vadd.f32 0.0, %v1349
        %v1351 = vpop.f32.mrb[0].mxu0
        %v1352 = vadd.f32 0.0, %v1351
        %v1353 = vpop.f32.mrb[0].mxu0
        %v1354 = vadd.f32 0.0, %v1353
        %v1355 = vpop.f32.mrb[0].mxu0
        %v1356 = vadd.f32 0.0, %v1355
        %1357 = vmatprep.mubr.bf16.mxu0 0
        %1358 = vmatmul.mubr.bf16.gmra.mrb[0].mxu0 %v1313
        %v1359 = vpop.f32.mrb[0].mxu0
        %v1360 = vadd.f32 0.0, %v1359
        %v1361 = vpop.f32.mrb[0].mxu0
        %v1362 = vadd.f32 0.0, %v1361
        %v1363 = vpop.f32.mrb[0].mxu0
        %v1364 = vadd.f32 0.0, %v1363
        %v1365 = vpop.f32.mrb[0].mxu0
        %v1366 = vadd.f32 0.0, %v1365
        %1367 = vdwg.mxu0
        %v1371 = vrot.slane %v1272, 1
        %v1372 = vrot.slane %v1273, 1
        %v1373 = vsel %vm1283, %v1371, %v1372
        %v1374 = vrot.slane %v1274, 1
        %v1375 = vsel %vm1283, %v1372, %v1374
        %v1377 = vsel %vm473, %v1373, 0
        %v1380 = vsel %vm473, %v1375, 0
        %1382 = vmatprep.subr.bf16.mxu0 %v1302
        %1383 = vmatpush1.bf16.msra.mxu0 %v1301
        %1384 = vmatprep.subr.bf16.mxu0 %v1304
        %1385 = vmatpush1.bf16.msra.mxu0 %v1303
        %1386 = vmatprep.subr.bf16.mxu0 0
        %1387 = vmatpush1.bf16.msra.mxu0 0
        %1388 = vmatprep.subr.bf16.mxu0 0
        %1389 = vmatpush1.bf16.msra.mxu0 0
        %1390 = vmatprep.subr.bf16.mxu0 0
        %1391 = vmatpush1.bf16.msra.mxu0 0
        %1392 = vmatprep.subr.bf16.mxu0 0
        %1393 = vmatpush1.bf16.msra.mxu0 0
        %1394 = vmatprep.subr.bf16.mxu0 0
        %1395 = vmatpush1.bf16.msra.mxu0 0
        %1396 = vmatprep.subr.bf16.mxu0 0
        %1397 = vmatpush1.bf16.msra.mxu0 0
        %1398 = vmatprep.subr.bf16.mxu0 0
        %1399 = vmatpush1.bf16.msra.mxu0 0
        %1400 = vmatprep.subr.bf16.mxu0 0
        %1401 = vmatpush1.bf16.msra.mxu0 0
        %1402 = vmatprep.subr.bf16.mxu0 0
        %1403 = vmatpush1.bf16.msra.mxu0 0
        %1404 = vmatprep.subr.bf16.mxu0 0
        %1405 = vmatpush1.bf16.msra.mxu0 0
        %1406 = vmatprep.subr.bf16.mxu0 0
        %1407 = vmatpush1.bf16.msra.mxu0 0
        %1408 = vmatprep.subr.bf16.mxu0 0
        %1409 = vmatpush1.bf16.msra.mxu0 0
        %1410 = vmatprep.subr.bf16.mxu0 0
        %1411 = vmatpush1.bf16.msra.mxu0 0
        %1412 = vmatprep.subr.bf16.mxu0 0
        %1413 = vmatpush1.bf16.msra.mxu0 0
        %1414 = vmatprep.mubr.bf16.mxu0 0
        %1415 = vmatmul.mubr.bf16.gmra.mrb[0].mxu0 %v1377
        %v1416 = vpop.f32.mrb[0].mxu0
        %v1417 = vadd.f32 0.0, %v1416
        %v1418 = vpop.f32.mrb[0].mxu0
        %v1419 = vadd.f32 0.0, %v1418
        %v1420 = vpop.f32.mrb[0].mxu0
        %v1421 = vadd.f32 0.0, %v1420
        %v1422 = vpop.f32.mrb[0].mxu0
        %v1423 = vadd.f32 0.0, %v1422
        %1424 = vmatprep.mubr.bf16.mxu0 0
        %1425 = vmatmul.mubr.bf16.gmra.mrb[0].mxu0 %v1380
        %v1426 = vpop.f32.mrb[0].mxu0
        %v1427 = vadd.f32 0.0, %v1426
        %v1428 = vpop.f32.mrb[0].mxu0
        %v1429 = vadd.f32 0.0, %v1428
        %v1430 = vpop.f32.mrb[0].mxu0
        %v1431 = vadd.f32 0.0, %v1430
        %v1432 = vpop.f32.mrb[0].mxu0
        %v1433 = vadd.f32 0.0, %v1432
        %1434 = vdwg.mxu0
        %v1435 = vld [vmem:[#allocation4] sm:$0xff]
        %v1436 = vld [vmem:[#allocation4 + $0x8] sm:$0xff]
        %v1437 = vld [vmem:[#allocation4 + $0x10] sm:$0xff]
        %v1438 = vld [vmem:[#allocation4 + $0x18] sm:$0xff]
        %v1439 = vld [vmem:[#allocation4 + $0x20] sm:$0xff]
        %v1440 = vld [vmem:[#allocation4 + $0x28] sm:$0xff]
        %v1441 = vld [vmem:[#allocation4 + $0x30] sm:$0xff]
        %v1442 = vld [vmem:[#allocation4 + $0x38] sm:$0xff]
        %v1443 = vadd.f32 %v1435, %v1350
        %v1444 = vadd.f32 %v1436, %v1352
        %v1445 = vadd.f32 %v1437, %v1354
        %v1446 = vadd.f32 %v1438, %v1356
        %v1447 = vadd.f32 %v1439, %v1360
        %v1448 = vadd.f32 %v1440, %v1362
        %v1449 = vadd.f32 %v1441, %v1364
        %v1450 = vadd.f32 %v1442, %v1366
        %1451 = vst [vmem:[#allocation4] sm:$0xff] %v1443
        %1452 = vst [vmem:[#allocation4 + $0x8] sm:$0xff] %v1444
        %1453 = vst [vmem:[#allocation4 + $0x10] sm:$0xff] %v1445
        %1454 = vst [vmem:[#allocation4 + $0x18] sm:$0xff] %v1446
        %1455 = vst [vmem:[#allocation4 + $0x20] sm:$0xff] %v1447
        %1456 = vst [vmem:[#allocation4 + $0x28] sm:$0xff] %v1448
        %1457 = vst [vmem:[#allocation4 + $0x30] sm:$0xff] %v1449
        %1458 = vst [vmem:[#allocation4 + $0x38] sm:$0xff] %v1450
        %v1459 = vld [vmem:[#allocation5] sm:$0xff]
        %v1460 = vld [vmem:[#allocation5 + $0x8] sm:$0xff]
        %v1461 = vld [vmem:[#allocation5 + $0x10] sm:$0xff]
        %v1462 = vld [vmem:[#allocation5 + $0x18] sm:$0xff]
        %v1463 = vld [vmem:[#allocation5 + $0x20] sm:$0xff]
        %v1464 = vld [vmem:[#allocation5 + $0x28] sm:$0xff]
        %v1465 = vld [vmem:[#allocation5 + $0x30] sm:$0xff]
        %v1466 = vld [vmem:[#allocation5 + $0x38] sm:$0xff]
        %v1467 = vadd.f32 %v1459, %v1417
        %v1468 = vadd.f32 %v1460, %v1419
        %v1469 = vadd.f32 %v1461, %v1421
        %v1470 = vadd.f32 %v1462, %v1423
        %v1471 = vadd.f32 %v1463, %v1427
        %v1472 = vadd.f32 %v1464, %v1429
        %v1473 = vadd.f32 %v1465, %v1431
        %v1474 = vadd.f32 %v1466, %v1433
        %1475 = vst [vmem:[#allocation5] sm:$0xff] %v1467
        %1476 = vst [vmem:[#allocation5 + $0x8] sm:$0xff] %v1468
        %1477 = vst [vmem:[#allocation5 + $0x10] sm:$0xff] %v1469
        %1478 = vst [vmem:[#allocation5 + $0x18] sm:$0xff] %v1470
        %1479 = vst [vmem:[#allocation5 + $0x20] sm:$0xff] %v1471
        %1480 = vst [vmem:[#allocation5 + $0x28] sm:$0xff] %v1472
        %1481 = vst [vmem:[#allocation5 + $0x30] sm:$0xff] %v1473
        %1482 = vst [vmem:[#allocation5 + $0x38] sm:$0xff] %v1474
        %s1483 = scalar_lea.vmem %s5, 64
        %v1484 = vld [vmem:[%s1483] sm:$0xff]
        %v1485 = vld [vmem:[%s1483 + $0x8] sm:$0xff]
        %v1486 = vld [vmem:[%s1483 + $0x10] sm:$0xff]
        %v1487 = vld [vmem:[%s1483 + $0x18] sm:$0xff]
        %v1492 = vunpack.c.l.b16 %v1484
        %v1493 = vunpack.c.h.b16 %v1484
        %v1494 = vunpack.c.l.b16 %v1485
        %v1495 = vunpack.c.h.b16 %v1485
        %v1496 = vunpack.c.l.b16 %v1486
        %v1497 = vunpack.c.h.b16 %v1486
        %v1498 = vunpack.c.l.b16 %v1487
        %v1499 = vunpack.c.h.b16 %v1487
        %v1500 = vpack.c.b16 %v1494, %v1492
        %v1501 = vpack.c.b16 %v1495, %v1493
        %v1502 = vpack.c.b16 %v1498, %v1496
        %v1503 = vpack.c.b16 %v1499, %v1497
        %1508 = vmatprep.subr.bf16.mxu0 %v1501
        %1509 = vmatpush1.bf16.msra.mxu0 %v1500
        %1510 = vmatprep.subr.bf16.mxu0 %v1503
        %1511 = vmatpush1.bf16.msra.mxu0 %v1502
        %1512 = vmatprep.subr.bf16.mxu0 0
        %1513 = vmatpush1.bf16.msra.mxu0 0
        %1514 = vmatprep.subr.bf16.mxu0 0
        %1515 = vmatpush1.bf16.msra.mxu0 0
        %1516 = vmatprep.subr.bf16.mxu0 0
        %1517 = vmatpush1.bf16.msra.mxu0 0
        %1518 = vmatprep.subr.bf16.mxu0 0
        %1519 = vmatpush1.bf16.msra.mxu0 0
        %1520 = vmatprep.subr.bf16.mxu0 0
        %1521 = vmatpush1.bf16.msra.mxu0 0
        %1522 = vmatprep.subr.bf16.mxu0 0
        %1523 = vmatpush1.bf16.msra.mxu0 0
        %1524 = vmatprep.subr.bf16.mxu0 0
        %1525 = vmatpush1.bf16.msra.mxu0 0
        %1526 = vmatprep.subr.bf16.mxu0 0
        %1527 = vmatpush1.bf16.msra.mxu0 0
        %1528 = vmatprep.subr.bf16.mxu0 0
        %1529 = vmatpush1.bf16.msra.mxu0 0
        %1530 = vmatprep.subr.bf16.mxu0 0
        %1531 = vmatpush1.bf16.msra.mxu0 0
        %1532 = vmatprep.subr.bf16.mxu0 0
        %1533 = vmatpush1.bf16.msra.mxu0 0
        %1534 = vmatprep.subr.bf16.mxu0 0
        %1535 = vmatpush1.bf16.msra.mxu0 0
        %1536 = vmatprep.subr.bf16.mxu0 0
        %1537 = vmatpush1.bf16.msra.mxu0 0
        %1538 = vmatprep.subr.bf16.mxu0 0
        %1539 = vmatpush1.bf16.msra.mxu0 0
        %1540 = vmatprep.mubr.bf16.mxu0 0
        %1541 = vmatmul.mubr.bf16.gmra.mrb[0].mxu0 %v1310
        %v1542 = vpop.f32.mrb[0].mxu0
        %v1543 = vadd.f32 0.0, %v1542
        %v1544 = vpop.f32.mrb[0].mxu0
        %v1545 = vadd.f32 0.0, %v1544
        %v1546 = vpop.f32.mrb[0].mxu0
        %v1547 = vadd.f32 0.0, %v1546
        %v1548 = vpop.f32.mrb[0].mxu0
        %v1549 = vadd.f32 0.0, %v1548
        %1550 = vmatprep.mubr.bf16.mxu0 0
        %1551 = vmatmul.mubr.bf16.gmra.mrb[0].mxu0 %v1313
        %v1552 = vpop.f32.mrb[0].mxu0
        %v1553 = vadd.f32 0.0, %v1552
        %v1554 = vpop.f32.mrb[0].mxu0
        %v1555 = vadd.f32 0.0, %v1554
        %v1556 = vpop.f32.mrb[0].mxu0
        %v1557 = vadd.f32 0.0, %v1556
        %v1558 = vpop.f32.mrb[0].mxu0
        %v1559 = vadd.f32 0.0, %v1558
        %1560 = vdwg.mxu0
        %1561 = vmatprep.subr.bf16.mxu0 %v1501
        %1562 = vmatpush1.bf16.msra.mxu0 %v1500
        %1563 = vmatprep.subr.bf16.mxu0 %v1503
        %1564 = vmatpush1.bf16.msra.mxu0 %v1502
        %1565 = vmatprep.subr.bf16.mxu0 0
        %1566 = vmatpush1.bf16.msra.mxu0 0
        %1567 = vmatprep.subr.bf16.mxu0 0
        %1568 = vmatpush1.bf16.msra.mxu0 0
        %1569 = vmatprep.subr.bf16.mxu0 0
        %1570 = vmatpush1.bf16.msra.mxu0 0
        %1571 = vmatprep.subr.bf16.mxu0 0
        %1572 = vmatpush1.bf16.msra.mxu0 0
        %1573 = vmatprep.subr.bf16.mxu0 0
        %1574 = vmatpush1.bf16.msra.mxu0 0
        %1575 = vmatprep.subr.bf16.mxu0 0
        %1576 = vmatpush1.bf16.msra.mxu0 0
        %1577 = vmatprep.subr.bf16.mxu0 0
        %1578 = vmatpush1.bf16.msra.mxu0 0
        %1579 = vmatprep.subr.bf16.mxu0 0
        %1580 = vmatpush1.bf16.msra.mxu0 0
        %1581 = vmatprep.subr.bf16.mxu0 0
        %1582 = vmatpush1.bf16.msra.mxu0 0
        %1583 = vmatprep.subr.bf16.mxu0 0
        %1584 = vmatpush1.bf16.msra.mxu0 0
        %1585 = vmatprep.subr.bf16.mxu0 0
        %1586 = vmatpush1.bf16.msra.mxu0 0
        %1587 = vmatprep.subr.bf16.mxu0 0
        %1588 = vmatpush1.bf16.msra.mxu0 0
        %1589 = vmatprep.subr.bf16.mxu0 0
        %1590 = vmatpush1.bf16.msra.mxu0 0
        %1591 = vmatprep.subr.bf16.mxu0 0
        %1592 = vmatpush1.bf16.msra.mxu0 0
        %1593 = vmatprep.mubr.bf16.mxu0 0
        %1594 = vmatmul.mubr.bf16.gmra.mrb[0].mxu0 %v1377
        %v1595 = vpop.f32.mrb[0].mxu0
        %v1596 = vadd.f32 0.0, %v1595
        %v1597 = vpop.f32.mrb[0].mxu0
        %v1598 = vadd.f32 0.0, %v1597
        %v1599 = vpop.f32.mrb[0].mxu0
        %v1600 = vadd.f32 0.0, %v1599
        %v1601 = vpop.f32.mrb[0].mxu0
        %v1602 = vadd.f32 0.0, %v1601
        %1603 = vmatprep.mubr.bf16.mxu0 0
        %1604 = vmatmul.mubr.bf16.gmra.mrb[0].mxu0 %v1380
        %v1605 = vpop.f32.mrb[0].mxu0
        %v1606 = vadd.f32 0.0, %v1605
        %v1607 = vpop.f32.mrb[0].mxu0
        %v1608 = vadd.f32 0.0, %v1607
        %v1609 = vpop.f32.mrb[0].mxu0
        %v1610 = vadd.f32 0.0, %v1609
        %v1611 = vpop.f32.mrb[0].mxu0
        %v1612 = vadd.f32 0.0, %v1611
        %1613 = vdwg.mxu0
        %v1614 = vld [vmem:[#allocation4] sm:$0xff]
        %v1615 = vld [vmem:[#allocation4 + $0x8] sm:$0xff]
        %v1616 = vld [vmem:[#allocation4 + $0x10] sm:$0xff]
        %v1617 = vld [vmem:[#allocation4 + $0x18] sm:$0xff]
        %v1618 = vld [vmem:[#allocation4 + $0x20] sm:$0xff]
        %v1619 = vld [vmem:[#allocation4 + $0x28] sm:$0xff]
        %v1620 = vld [vmem:[#allocation4 + $0x30] sm:$0xff]
        %v1621 = vld [vmem:[#allocation4 + $0x38] sm:$0xff]
        %v1622 = vadd.f32 %v1614, %v1543
        %v1623 = vadd.f32 %v1615, %v1545
        %v1624 = vadd.f32 %v1616, %v1547
        %v1625 = vadd.f32 %v1617, %v1549
        %v1626 = vadd.f32 %v1618, %v1553
        %v1627 = vadd.f32 %v1619, %v1555
        %v1628 = vadd.f32 %v1620, %v1557
        %v1629 = vadd.f32 %v1621, %v1559
        %1630 = vst [vmem:[#allocation4] sm:$0xff] %v1622
        %1631 = vst [vmem:[#allocation4 + $0x8] sm:$0xff] %v1623
        %1632 = vst [vmem:[#allocation4 + $0x10] sm:$0xff] %v1624
        %1633 = vst [vmem:[#allocation4 + $0x18] sm:$0xff] %v1625
        %1634 = vst [vmem:[#allocation4 + $0x20] sm:$0xff] %v1626
        %1635 = vst [vmem:[#allocation4 + $0x28] sm:$0xff] %v1627
        %1636 = vst [vmem:[#allocation4 + $0x30] sm:$0xff] %v1628
        %1637 = vst [vmem:[#allocation4 + $0x38] sm:$0xff] %v1629
        %v1638 = vld [vmem:[#allocation5] sm:$0xff]
        %v1639 = vld [vmem:[#allocation5 + $0x8] sm:$0xff]
        %v1640 = vld [vmem:[#allocation5 + $0x10] sm:$0xff]
        %v1641 = vld [vmem:[#allocation5 + $0x18] sm:$0xff]
        %v1642 = vld [vmem:[#allocation5 + $0x20] sm:$0xff]
        %v1643 = vld [vmem:[#allocation5 + $0x28] sm:$0xff]
        %v1644 = vld [vmem:[#allocation5 + $0x30] sm:$0xff]
        %v1645 = vld [vmem:[#allocation5 + $0x38] sm:$0xff]
        %v1646 = vadd.f32 %v1638, %v1596
        %v1647 = vadd.f32 %v1639, %v1598
        %v1648 = vadd.f32 %v1640, %v1600
        %v1649 = vadd.f32 %v1641, %v1602
        %v1650 = vadd.f32 %v1642, %v1606
        %v1651 = vadd.f32 %v1643, %v1608
        %v1652 = vadd.f32 %v1644, %v1610
        %v1653 = vadd.f32 %v1645, %v1612
        %1654 = vst [vmem:[#allocation5] sm:$0xff] %v1646
        %1655 = vst [vmem:[#allocation5 + $0x8] sm:$0xff] %v1647
        %1656 = vst [vmem:[#allocation5 + $0x10] sm:$0xff] %v1648
        %1657 = vst [vmem:[#allocation5 + $0x18] sm:$0xff] %v1649
        %1658 = vst [vmem:[#allocation5 + $0x20] sm:$0xff] %v1650
        %1659 = vst [vmem:[#allocation5 + $0x28] sm:$0xff] %v1651
        %1660 = vst [vmem:[#allocation5 + $0x30] sm:$0xff] %v1652
        %1661 = vst [vmem:[#allocation5 + $0x38] sm:$0xff] %v1653
        %v1662 = vld [vmem:[#allocation2] sm:$0xfe]
        %v1663 = vld [vmem:[#allocation2 + $0x8] sm:$0xff]
        %v1664 = vld [vmem:[#allocation2 + $0x10] sm:$0x3]
        %v1665 = vld [vmem:[#allocation3] sm:$0xfe]
        %v1666 = vld [vmem:[#allocation3 + $0x8] sm:$0xff]
        %v1667 = vld [vmem:[#allocation3 + $0x10] sm:$0x3]
        %s1668 = scalar_lea.vmem %s4, 96
        %v1669 = vld [vmem:[%s1668] sm:$0xff]
        %v1670 = vld [vmem:[%s1668 + $0x8] sm:$0xff]
        %v1671 = vld [vmem:[%s1668 + $0x10] sm:$0xff]
        %v1672 = vld [vmem:[%s1668 + $0x18] sm:$0xff]
        %vm1673 = vsmask.f32 6400
        %v1675 = vshrl.u32 %v1662, 16
        %v1677 = vrot.slane %v1675, 1
        %v1678 = vshll.u32 %v1662, 16
        %v1680 = vrot.slane %v1678, 2
        %v1681 = vor.u32 %v1677, %v1680
        %v1683 = vshrl.u32 %v1663, 16
        %v1685 = vrot.slane %v1683, 1
        %v1686 = vshll.u32 %v1663, 16
        %v1688 = vrot.slane %v1686, 2
        %v1689 = vor.u32 %v1685, %v1688
        %v1690 = vsel %vm1673, %v1681, %v1689
        %v1692 = vshrl.u32 %v1664, 16
        %v1694 = vrot.slane %v1692, 1
        %v1695 = vshll.u32 %v1664, 16
        %v1697 = vrot.slane %v1695, 2
        %v1698 = vor.u32 %v1694, %v1697
        %v1699 = vsel %vm1673, %v1689, %v1698
        %v1704 = vunpack.c.l.b16 %v1669
        %v1705 = vunpack.c.h.b16 %v1669
        %v1706 = vunpack.c.l.b16 %v1670
        %v1707 = vunpack.c.h.b16 %v1670
        %v1708 = vunpack.c.l.b16 %v1671
        %v1709 = vunpack.c.h.b16 %v1671
        %v1710 = vunpack.c.l.b16 %v1672
        %v1711 = vunpack.c.h.b16 %v1672
        %v1712 = vpack.c.b16 %v1706, %v1704
        %v1713 = vpack.c.b16 %v1707, %v1705
        %v1714 = vpack.c.b16 %v1710, %v1708
        %v1715 = vpack.c.b16 %v1711, %v1709
        %v1721 = vsel %vm473, %v1690, 0
        %v1724 = vsel %vm473, %v1699, 0
        %1726 = vmatprep.subr.bf16.mxu0 %v1713
        %1727 = vmatpush1.bf16.msra.mxu0 %v1712
        %1728 = vmatprep.subr.bf16.mxu0 %v1715
        %1729 = vmatpush1.bf16.msra.mxu0 %v1714
        %1730 = vmatprep.subr.bf16.mxu0 0
        %1731 = vmatpush1.bf16.msra.mxu0 0
        %1732 = vmatprep.subr.bf16.mxu0 0
        %1733 = vmatpush1.bf16.msra.mxu0 0
        %1734 = vmatprep.subr.bf16.mxu0 0
        %1735 = vmatpush1.bf16.msra.mxu0 0
        %1736 = vmatprep.subr.bf16.mxu0 0
        %1737 = vmatpush1.bf16.msra.mxu0 0
        %1738 = vmatprep.subr.bf16.mxu0 0
        %1739 = vmatpush1.bf16.msra.mxu0 0
        %1740 = vmatprep.subr.bf16.mxu0 0
        %1741 = vmatpush1.bf16.msra.mxu0 0
        %1742 = vmatprep.subr.bf16.mxu0 0
        %1743 = vmatpush1.bf16.msra.mxu0 0
        %1744 = vmatprep.subr.bf16.mxu0 0
        %1745 = vmatpush1.bf16.msra.mxu0 0
        %1746 = vmatprep.subr.bf16.mxu0 0
        %1747 = vmatpush1.bf16.msra.mxu0 0
        %1748 = vmatprep.subr.bf16.mxu0 0
        %1749 = vmatpush1.bf16.msra.mxu0 0
        %1750 = vmatprep.subr.bf16.mxu0 0
        %1751 = vmatpush1.bf16.msra.mxu0 0
        %1752 = vmatprep.subr.bf16.mxu0 0
        %1753 = vmatpush1.bf16.msra.mxu0 0
        %1754 = vmatprep.subr.bf16.mxu0 0
        %1755 = vmatpush1.bf16.msra.mxu0 0
        %1756 = vmatprep.subr.bf16.mxu0 0
        %1757 = vmatpush1.bf16.msra.mxu0 0
        %1758 = vmatprep.mubr.bf16.mxu0 0
        %1759 = vmatmul.mubr.bf16.gmra.mrb[0].mxu0 %v1721
        %v1760 = vpop.f32.mrb[0].mxu0
        %v1761 = vadd.f32 0.0, %v1760
        %v1762 = vpop.f32.mrb[0].mxu0
        %v1763 = vadd.f32 0.0, %v1762
        %v1764 = vpop.f32.mrb[0].mxu0
        %v1765 = vadd.f32 0.0, %v1764
        %v1766 = vpop.f32.mrb[0].mxu0
        %v1767 = vadd.f32 0.0, %v1766
        %1768 = vmatprep.mubr.bf16.mxu0 0
        %1769 = vmatmul.mubr.bf16.gmra.mrb[0].mxu0 %v1724
        %v1770 = vpop.f32.mrb[0].mxu0
        %v1771 = vadd.f32 0.0, %v1770
        %v1772 = vpop.f32.mrb[0].mxu0
        %v1773 = vadd.f32 0.0, %v1772
        %v1774 = vpop.f32.mrb[0].mxu0
        %v1775 = vadd.f32 0.0, %v1774
        %v1776 = vpop.f32.mrb[0].mxu0
        %v1777 = vadd.f32 0.0, %v1776
        %1778 = vdwg.mxu0
        %v1780 = vshrl.u32 %v1665, 16
        %v1782 = vrot.slane %v1780, 1
        %v1783 = vshll.u32 %v1665, 16
        %v1785 = vrot.slane %v1783, 2
        %v1786 = vor.u32 %v1782, %v1785
        %v1788 = vshrl.u32 %v1666, 16
        %v1790 = vrot.slane %v1788, 1
        %v1791 = vshll.u32 %v1666, 16
        %v1793 = vrot.slane %v1791, 2
        %v1794 = vor.u32 %v1790, %v1793
        %v1795 = vsel %vm1673, %v1786, %v1794
        %v1797 = vshrl.u32 %v1667, 16
        %v1799 = vrot.slane %v1797, 1
        %v1800 = vshll.u32 %v1667, 16
        %v1802 = vrot.slane %v1800, 2
        %v1803 = vor.u32 %v1799, %v1802
        %v1804 = vsel %vm1673, %v1794, %v1803
        %v1806 = vsel %vm473, %v1795, 0
        %v1809 = vsel %vm473, %v1804, 0
        %1811 = vmatprep.subr.bf16.mxu0 %v1713
        %1812 = vmatpush1.bf16.msra.mxu0 %v1712
        %1813 = vmatprep.subr.bf16.mxu0 %v1715
        %1814 = vmatpush1.bf16.msra.mxu0 %v1714
        %1815 = vmatprep.subr.bf16.mxu0 0
        %1816 = vmatpush1.bf16.msra.mxu0 0
        %1817 = vmatprep.subr.bf16.mxu0 0
        %1818 = vmatpush1.bf16.msra.mxu0 0
        %1819 = vmatprep.subr.bf16.mxu0 0
        %1820 = vmatpush1.bf16.msra.mxu0 0
        %1821 = vmatprep.subr.bf16.mxu0 0
        %1822 = vmatpush1.bf16.msra.mxu0 0
        %1823 = vmatprep.subr.bf16.mxu0 0
        %1824 = vmatpush1.bf16.msra.mxu0 0
        %1825 = vmatprep.subr.bf16.mxu0 0
        %1826 = vmatpush1.bf16.msra.mxu0 0
        %1827 = vmatprep.subr.bf16.mxu0 0
        %1828 = vmatpush1.bf16.msra.mxu0 0
        %1829 = vmatprep.subr.bf16.mxu0 0
        %1830 = vmatpush1.bf16.msra.mxu0 0
        %1831 = vmatprep.subr.bf16.mxu0 0
        %1832 = vmatpush1.bf16.msra.mxu0 0
        %1833 = vmatprep.subr.bf16.mxu0 0
        %1834 = vmatpush1.bf16.msra.mxu0 0
        %1835 = vmatprep.subr.bf16.mxu0 0
        %1836 = vmatpush1.bf16.msra.mxu0 0
        %1837 = vmatprep.subr.bf16.mxu0 0
        %1838 = vmatpush1.bf16.msra.mxu0 0
        %1839 = vmatprep.subr.bf16.mxu0 0
        %1840 = vmatpush1.bf16.msra.mxu0 0
        %1841 = vmatprep.subr.bf16.mxu0 0
        %1842 = vmatpush1.bf16.msra.mxu0 0
        %1843 = vmatprep.mubr.bf16.mxu0 0
        %1844 = vmatmul.mubr.bf16.gmra.mrb[0].mxu0 %v1806
        %v1845 = vpop.f32.mrb[0].mxu0
        %v1846 = vadd.f32 0.0, %v1845
        %v1847 = vpop.f32.mrb[0].mxu0
        %v1848 = vadd.f32 0.0, %v1847
        %v1849 = vpop.f32.mrb[0].mxu0
        %v1850 = vadd.f32 0.0, %v1849
        %v1851 = vpop.f32.mrb[0].mxu0
        %v1852 = vadd.f32 0.0, %v1851
        %1853 = vmatprep.mubr.bf16.mxu0 0
        %1854 = vmatmul.mubr.bf16.gmra.mrb[0].mxu0 %v1809
        %v1855 = vpop.f32.mrb[0].mxu0
        %v1856 = vadd.f32 0.0, %v1855
        %v1857 = vpop.f32.mrb[0].mxu0
        %v1858 = vadd.f32 0.0, %v1857
        %v1859 = vpop.f32.mrb[0].mxu0
        %v1860 = vadd.f32 0.0, %v1859
        %v1861 = vpop.f32.mrb[0].mxu0
        %v1862 = vadd.f32 0.0, %v1861
        %1863 = vdwg.mxu0
        %v1864 = vld [vmem:[#allocation4] sm:$0xff]
        %v1865 = vld [vmem:[#allocation4 + $0x8] sm:$0xff]
        %v1866 = vld [vmem:[#allocation4 + $0x10] sm:$0xff]
        %v1867 = vld [vmem:[#allocation4 + $0x18] sm:$0xff]
        %v1868 = vld [vmem:[#allocation4 + $0x20] sm:$0xff]
        %v1869 = vld [vmem:[#allocation4 + $0x28] sm:$0xff]
        %v1870 = vld [vmem:[#allocation4 + $0x30] sm:$0xff]
        %v1871 = vld [vmem:[#allocation4 + $0x38] sm:$0xff]
        %v1872 = vadd.f32 %v1864, %v1761
        %v1873 = vadd.f32 %v1865, %v1763
        %v1874 = vadd.f32 %v1866, %v1765
        %v1875 = vadd.f32 %v1867, %v1767
        %v1876 = vadd.f32 %v1868, %v1771
        %v1877 = vadd.f32 %v1869, %v1773
        %v1878 = vadd.f32 %v1870, %v1775
        %v1879 = vadd.f32 %v1871, %v1777
        %1880 = vst [vmem:[#allocation4] sm:$0xff] %v1872
        %1881 = vst [vmem:[#allocation4 + $0x8] sm:$0xff] %v1873
        %1882 = vst [vmem:[#allocation4 + $0x10] sm:$0xff] %v1874
        %1883 = vst [vmem:[#allocation4 + $0x18] sm:$0xff] %v1875
        %1884 = vst [vmem:[#allocation4 + $0x20] sm:$0xff] %v1876
        %1885 = vst [vmem:[#allocation4 + $0x28] sm:$0xff] %v1877
        %1886 = vst [vmem:[#allocation4 + $0x30] sm:$0xff] %v1878
        %1887 = vst [vmem:[#allocation4 + $0x38] sm:$0xff] %v1879
        %v1888 = vld [vmem:[#allocation5] sm:$0xff]
        %v1889 = vld [vmem:[#allocation5 + $0x8] sm:$0xff]
        %v1890 = vld [vmem:[#allocation5 + $0x10] sm:$0xff]
        %v1891 = vld [vmem:[#allocation5 + $0x18] sm:$0xff]
        %v1892 = vld [vmem:[#allocation5 + $0x20] sm:$0xff]
        %v1893 = vld [vmem:[#allocation5 + $0x28] sm:$0xff]
        %v1894 = vld [vmem:[#allocation5 + $0x30] sm:$0xff]
        %v1895 = vld [vmem:[#allocation5 + $0x38] sm:$0xff]
        %v1896 = vadd.f32 %v1888, %v1846
        %v1897 = vadd.f32 %v1889, %v1848
        %v1898 = vadd.f32 %v1890, %v1850
        %v1899 = vadd.f32 %v1891, %v1852
        %v1900 = vadd.f32 %v1892, %v1856
        %v1901 = vadd.f32 %v1893, %v1858
        %v1902 = vadd.f32 %v1894, %v1860
        %v1903 = vadd.f32 %v1895, %v1862
        %1904 = vst [vmem:[#allocation5] sm:$0xff] %v1896
        %1905 = vst [vmem:[#allocation5 + $0x8] sm:$0xff] %v1897
        %1906 = vst [vmem:[#allocation5 + $0x10] sm:$0xff] %v1898
        %1907 = vst [vmem:[#allocation5 + $0x18] sm:$0xff] %v1899
        %1908 = vst [vmem:[#allocation5 + $0x20] sm:$0xff] %v1900
        %1909 = vst [vmem:[#allocation5 + $0x28] sm:$0xff] %v1901
        %1910 = vst [vmem:[#allocation5 + $0x30] sm:$0xff] %v1902
        %1911 = vst [vmem:[#allocation5 + $0x38] sm:$0xff] %v1903
        %s1912 = scalar_lea.vmem %s5, 96
        %v1913 = vld [vmem:[%s1912] sm:$0xff]
        %v1914 = vld [vmem:[%s1912 + $0x8] sm:$0xff]
        %v1915 = vld [vmem:[%s1912 + $0x10] sm:$0xff]
        %v1916 = vld [vmem:[%s1912 + $0x18] sm:$0xff]
        %v1921 = vunpack.c.l.b16 %v1913
        %v1922 = vunpack.c.h.b16 %v1913
        %v1923 = vunpack.c.l.b16 %v1914
        %v1924 = vunpack.c.h.b16 %v1914
        %v1925 = vunpack.c.l.b16 %v1915
        %v1926 = vunpack.c.h.b16 %v1915
        %v1927 = vunpack.c.l.b16 %v1916
        %v1928 = vunpack.c.h.b16 %v1916
        %v1929 = vpack.c.b16 %v1923, %v1921
        %v1930 = vpack.c.b16 %v1924, %v1922
        %v1931 = vpack.c.b16 %v1927, %v1925
        %v1932 = vpack.c.b16 %v1928, %v1926
        %1937 = vmatprep.subr.bf16.mxu0 %v1930
        %1938 = vmatpush1.bf16.msra.mxu0 %v1929
        %1939 = vmatprep.subr.bf16.mxu0 %v1932
        %1940 = vmatpush1.bf16.msra.mxu0 %v1931
        %1941 = vmatprep.subr.bf16.mxu0 0
        %1942 = vmatpush1.bf16.msra.mxu0 0
        %1943 = vmatprep.subr.bf16.mxu0 0
        %1944 = vmatpush1.bf16.msra.mxu0 0
        %1945 = vmatprep.subr.bf16.mxu0 0
        %1946 = vmatpush1.bf16.msra.mxu0 0
        %1947 = vmatprep.subr.bf16.mxu0 0
        %1948 = vmatpush1.bf16.msra.mxu0 0
        %1949 = vmatprep.subr.bf16.mxu0 0
        %1950 = vmatpush1.bf16.msra.mxu0 0
        %1951 = vmatprep.subr.bf16.mxu0 0
        %1952 = vmatpush1.bf16.msra.mxu0 0
        %1953 = vmatprep.subr.bf16.mxu0 0
        %1954 = vmatpush1.bf16.msra.mxu0 0
        %1955 = vmatprep.subr.bf16.mxu0 0
        %1956 = vmatpush1.bf16.msra.mxu0 0
        %1957 = vmatprep.subr.bf16.mxu0 0
        %1958 = vmatpush1.bf16.msra.mxu0 0
        %1959 = vmatprep.subr.bf16.mxu0 0
        %1960 = vmatpush1.bf16.msra.mxu0 0
        %1961 = vmatprep.subr.bf16.mxu0 0
        %1962 = vmatpush1.bf16.msra.mxu0 0
        %1963 = vmatprep.subr.bf16.mxu0 0
        %1964 = vmatpush1.bf16.msra.mxu0 0
        %1965 = vmatprep.subr.bf16.mxu0 0
        %1966 = vmatpush1.bf16.msra.mxu0 0
        %1967 = vmatprep.subr.bf16.mxu0 0
        %1968 = vmatpush1.bf16.msra.mxu0 0
        %1969 = vmatprep.mubr.bf16.mxu0 0
        %1970 = vmatmul.mubr.bf16.gmra.mrb[0].mxu0 %v1721
        %v1971 = vpop.f32.mrb[0].mxu0
        %v1972 = vadd.f32 0.0, %v1971
        %v1973 = vpop.f32.mrb[0].mxu0
        %v1974 = vadd.f32 0.0, %v1973
        %v1975 = vpop.f32.mrb[0].mxu0
        %v1976 = vadd.f32 0.0, %v1975
        %v1977 = vpop.f32.mrb[0].mxu0
        %v1978 = vadd.f32 0.0, %v1977
        %1979 = vmatprep.mubr.bf16.mxu0 0
        %1980 = vmatmul.mubr.bf16.gmra.mrb[0].mxu0 %v1724
        %v1981 = vpop.f32.mrb[0].mxu0
        %v1982 = vadd.f32 0.0, %v1981
        %v1983 = vpop.f32.mrb[0].mxu0
        %v1984 = vadd.f32 0.0, %v1983
        %v1985 = vpop.f32.mrb[0].mxu0
        %v1986 = vadd.f32 0.0, %v1985
        %v1987 = vpop.f32.mrb[0].mxu0
        %v1988 = vadd.f32 0.0, %v1987
        %1989 = vdwg.mxu0
        %1990 = vmatprep.subr.bf16.mxu0 %v1930
        %1991 = vmatpush1.bf16.msra.mxu0 %v1929
        %1992 = vmatprep.subr.bf16.mxu0 %v1932
        %1993 = vmatpush1.bf16.msra.mxu0 %v1931
        %1994 = vmatprep.subr.bf16.mxu0 0
        %1995 = vmatpush1.bf16.msra.mxu0 0
        %1996 = vmatprep.subr.bf16.mxu0 0
        %1997 = vmatpush1.bf16.msra.mxu0 0
        %1998 = vmatprep.subr.bf16.mxu0 0
        %1999 = vmatpush1.bf16.msra.mxu0 0
        %2000 = vmatprep.subr.bf16.mxu0 0
        %2001 = vmatpush1.bf16.msra.mxu0 0
        %2002 = vmatprep.subr.bf16.mxu0 0
        %2003 = vmatpush1.bf16.msra.mxu0 0
        %2004 = vmatprep.subr.bf16.mxu0 0
        %2005 = vmatpush1.bf16.msra.mxu0 0
        %2006 = vmatprep.subr.bf16.mxu0 0
        %2007 = vmatpush1.bf16.msra.mxu0 0
        %2008 = vmatprep.subr.bf16.mxu0 0
        %2009 = vmatpush1.bf16.msra.mxu0 0
        %2010 = vmatprep.subr.bf16.mxu0 0
        %2011 = vmatpush1.bf16.msra.mxu0 0
        %2012 = vmatprep.subr.bf16.mxu0 0
        %2013 = vmatpush1.bf16.msra.mxu0 0
        %2014 = vmatprep.subr.bf16.mxu0 0
        %2015 = vmatpush1.bf16.msra.mxu0 0
        %2016 = vmatprep.subr.bf16.mxu0 0
        %2017 = vmatpush1.bf16.msra.mxu0 0
        %2018 = vmatprep.subr.bf16.mxu0 0
        %2019 = vmatpush1.bf16.msra.mxu0 0
        %2020 = vmatprep.subr.bf16.mxu0 0
        %2021 = vmatpush1.bf16.msra.mxu0 0
        %2022 = vmatprep.mubr.bf16.mxu0 0
        %2023 = vmatmul.mubr.bf16.gmra.mrb[0].mxu0 %v1806
        %v2024 = vpop.f32.mrb[0].mxu0
        %v2025 = vadd.f32 0.0, %v2024
        %v2026 = vpop.f32.mrb[0].mxu0
        %v2027 = vadd.f32 0.0, %v2026
        %v2028 = vpop.f32.mrb[0].mxu0
        %v2029 = vadd.f32 0.0, %v2028
        %v2030 = vpop.f32.mrb[0].mxu0
        %v2031 = vadd.f32 0.0, %v2030
        %2032 = vmatprep.mubr.bf16.mxu0 0
        %2033 = vmatmul.mubr.bf16.gmra.mrb[0].mxu0 %v1809
        %v2034 = vpop.f32.mrb[0].mxu0
        %v2035 = vadd.f32 0.0, %v2034
        %v2036 = vpop.f32.mrb[0].mxu0
        %v2037 = vadd.f32 0.0, %v2036
        %v2038 = vpop.f32.mrb[0].mxu0
        %v2039 = vadd.f32 0.0, %v2038
        %v2040 = vpop.f32.mrb[0].mxu0
        %v2041 = vadd.f32 0.0, %v2040
        %2042 = vdwg.mxu0
        %v2043 = vld [vmem:[#allocation4] sm:$0xff]
        %v2044 = vld [vmem:[#allocation4 + $0x8] sm:$0xff]
        %v2045 = vld [vmem:[#allocation4 + $0x10] sm:$0xff]
        %v2046 = vld [vmem:[#allocation4 + $0x18] sm:$0xff]
        %v2047 = vld [vmem:[#allocation4 + $0x20] sm:$0xff]
        %v2048 = vld [vmem:[#allocation4 + $0x28] sm:$0xff]
        %v2049 = vld [vmem:[#allocation4 + $0x30] sm:$0xff]
        %v2050 = vld [vmem:[#allocation4 + $0x38] sm:$0xff]
        %v2051 = vadd.f32 %v2043, %v1972
        %v2052 = vadd.f32 %v2044, %v1974
        %v2053 = vadd.f32 %v2045, %v1976
        %v2054 = vadd.f32 %v2046, %v1978
        %v2055 = vadd.f32 %v2047, %v1982
        %v2056 = vadd.f32 %v2048, %v1984
        %v2057 = vadd.f32 %v2049, %v1986
        %v2058 = vadd.f32 %v2050, %v1988
        %2059 = vst [vmem:[#allocation4] sm:$0xff] %v2051
        %2060 = vst [vmem:[#allocation4 + $0x8] sm:$0xff] %v2052
        %2061 = vst [vmem:[#allocation4 + $0x10] sm:$0xff] %v2053
        %2062 = vst [vmem:[#allocation4 + $0x18] sm:$0xff] %v2054
        %2063 = vst [vmem:[#allocation4 + $0x20] sm:$0xff] %v2055
        %2064 = vst [vmem:[#allocation4 + $0x28] sm:$0xff] %v2056
        %2065 = vst [vmem:[#allocation4 + $0x30] sm:$0xff] %v2057
        %2066 = vst [vmem:[#allocation4 + $0x38] sm:$0xff] %v2058
        %v2067 = vld [vmem:[#allocation5] sm:$0xff]
        %v2068 = vld [vmem:[#allocation5 + $0x8] sm:$0xff]
        %v2069 = vld [vmem:[#allocation5 + $0x10] sm:$0xff]
        %v2070 = vld [vmem:[#allocation5 + $0x18] sm:$0xff]
        %v2071 = vld [vmem:[#allocation5 + $0x20] sm:$0xff]
        %v2072 = vld [vmem:[#allocation5 + $0x28] sm:$0xff]
        %v2073 = vld [vmem:[#allocation5 + $0x30] sm:$0xff]
        %v2074 = vld [vmem:[#allocation5 + $0x38] sm:$0xff]
        %v2075 = vadd.f32 %v2067, %v2025
        %v2076 = vadd.f32 %v2068, %v2027
        %v2077 = vadd.f32 %v2069, %v2029
        %v2078 = vadd.f32 %v2070, %v2031
        %v2079 = vadd.f32 %v2071, %v2035
        %v2080 = vadd.f32 %v2072, %v2037
        %v2081 = vadd.f32 %v2073, %v2039
        %v2082 = vadd.f32 %v2074, %v2041
        %2083 = vst [vmem:[#allocation5] sm:$0xff] %v2075
        %2084 = vst [vmem:[#allocation5 + $0x8] sm:$0xff] %v2076
        %2085 = vst [vmem:[#allocation5 + $0x10] sm:$0xff] %v2077
        %2086 = vst [vmem:[#allocation5 + $0x18] sm:$0xff] %v2078
        %2087 = vst [vmem:[#allocation5 + $0x20] sm:$0xff] %v2079
        %2088 = vst [vmem:[#allocation5 + $0x28] sm:$0xff] %v2080
        %2089 = vst [vmem:[#allocation5 + $0x30] sm:$0xff] %v2081
        %2090 = vst [vmem:[#allocation5 + $0x38] sm:$0xff] %v2082
        %v2091 = vld [vmem:[#allocation4] sm:$0xff]
        %v2092 = vld [vmem:[#allocation4 + $0x8] sm:$0xff]
        %v2093 = vld [vmem:[#allocation4 + $0x10] sm:$0xff]
        %v2094 = vld [vmem:[#allocation4 + $0x18] sm:$0xff]
        %v2095 = vld [vmem:[#allocation4 + $0x20] sm:$0xff]
        %v2096 = vld [vmem:[#allocation4 + $0x28] sm:$0xff]
        %v2097 = vld [vmem:[#allocation4 + $0x30] sm:$0xff]
        %v2098 = vld [vmem:[#allocation4 + $0x38] sm:$0xff]
        %v2099 = vld [vmem:[#allocation5] sm:$0xff]
        %v2100 = vld [vmem:[#allocation5 + $0x8] sm:$0xff]
        %v2101 = vld [vmem:[#allocation5 + $0x10] sm:$0xff]
        %v2102 = vld [vmem:[#allocation5 + $0x18] sm:$0xff]
        %v2103 = vld [vmem:[#allocation5 + $0x20] sm:$0xff]
        %v2104 = vld [vmem:[#allocation5 + $0x28] sm:$0xff]
        %v2105 = vld [vmem:[#allocation5 + $0x30] sm:$0xff]
        %v2106 = vld [vmem:[#allocation5 + $0x38] sm:$0xff]
        %v2107 = vmul.f32 %v2091, %v2091
        %v2108 = vmul.f32 %v2093, %v2093
        %v2109 = vmul.f32 %v2095, %v2095
        %v2110 = vmul.f32 %v2097, %v2097
        %v2111 = vmul.f32 %v2092, %v2092
        %v2112 = vmul.f32 %v2094, %v2094
        %v2113 = vmul.f32 %v2096, %v2096
        %v2114 = vmul.f32 %v2098, %v2098
        %v2115 = vadd.f32 %v2107, %v2111
        %v2116 = vadd.f32 %v2108, %v2112
        %v2117 = vadd.f32 %v2109, %v2113
        %v2118 = vadd.f32 %v2110, %v2114
        %v2119 = vmax.f32 %v2115, 1e-07
        %v2120 = vmax.f32 %v2116, 1e-07
        %v2121 = vmax.f32 %v2117, 1e-07
        %v2122 = vmax.f32 %v2118, 1e-07
        %v2123 = vmul.f32 %v2099, %v2099
        %v2124 = vmul.f32 %v2101, %v2101
        %v2125 = vmul.f32 %v2103, %v2103
        %v2126 = vmul.f32 %v2105, %v2105
        %v2127 = vmul.f32 %v2100, %v2100
        %v2128 = vmul.f32 %v2102, %v2102
        %v2129 = vmul.f32 %v2104, %v2104
        %v2130 = vmul.f32 %v2106, %v2106
        %v2131 = vadd.f32 %v2123, %v2127
        %v2132 = vadd.f32 %v2124, %v2128
        %v2133 = vadd.f32 %v2125, %v2129
        %v2134 = vadd.f32 %v2126, %v2130
        %v2135 = vmax.f32 %v2131, 1e-07
        %v2136 = vmax.f32 %v2132, 1e-07
        %v2137 = vmax.f32 %v2133, 1e-07
        %v2138 = vmax.f32 %v2134, 1e-07
        %v2139 = vadd.f32 %v2135, %v2119
        %v2140 = vadd.f32 %v2136, %v2120
        %v2141 = vadd.f32 %v2137, %v2121
        %v2142 = vadd.f32 %v2138, %v2122
        %v2143 = vmul.f32 %v2119, %v2135
        %v2144 = vmul.f32 %v2120, %v2136
        %v2145 = vmul.f32 %v2121, %v2137
        %v2146 = vmul.f32 %v2122, %v2138
        %v2147 = vrsqrt.pop %v2143
        %v2148 = vmul.f32 %v2143, %v2147
        %vm2149 = vcmp.eq.f32.partialorder %v2143, inf
        %v2150 = vsel %vm2149, %v2143, %v2148
        %vm2151 = vcmp.eq.f32.partialorder %v2143, 0.0
        %v2152 = vand.u32 %v2143, 2147483648
        %v2153 = vsel %vm2151, %v2152, %v2150
        %v2154 = vrsqrt.pop %v2144
        %v2155 = vmul.f32 %v2144, %v2154
        %vm2156 = vcmp.eq.f32.partialorder %v2144, inf
        %v2157 = vsel %vm2156, %v2144, %v2155
        %vm2158 = vcmp.eq.f32.partialorder %v2144, 0.0
        %v2159 = vand.u32 %v2144, 2147483648
        %v2160 = vsel %vm2158, %v2159, %v2157
        %v2161 = vrsqrt.pop %v2145
        %v2162 = vmul.f32 %v2145, %v2161
        %vm2163 = vcmp.eq.f32.partialorder %v2145, inf
        %v2164 = vsel %vm2163, %v2145, %v2162
        %vm2165 = vcmp.eq.f32.partialorder %v2145, 0.0
        %v2166 = vand.u32 %v2145, 2147483648
        %v2167 = vsel %vm2165, %v2166, %v2164
        %v2168 = vrsqrt.pop %v2146
        %v2169 = vmul.f32 %v2146, %v2168
        %vm2170 = vcmp.eq.f32.partialorder %v2146, inf
        %v2171 = vsel %vm2170, %v2146, %v2169
        %vm2172 = vcmp.eq.f32.partialorder %v2146, 0.0
        %v2173 = vand.u32 %v2146, 2147483648
        %v2174 = vsel %vm2172, %v2173, %v2171
        %v2175 = vmul.f32 %v2153, 2.0
        %v2176 = vmul.f32 %v2160, 2.0
        %v2177 = vmul.f32 %v2167, 2.0
        %v2178 = vmul.f32 %v2174, 2.0
        %v2179 = vsub.f32 %v2139, %v2175
        %v2180 = vsub.f32 %v2140, %v2176
        %v2181 = vsub.f32 %v2141, %v2177
        %v2182 = vsub.f32 %v2142, %v2178
        %v2183 = vlog2.pop %v2135
        %v2184 = vmul.f32 %v2183, 0.6931472
        %v2185 = vlog2.pop %v2136
        %v2186 = vmul.f32 %v2185, 0.6931472
        %v2187 = vlog2.pop %v2137
        %v2188 = vmul.f32 %v2187, 0.6931472
        %v2189 = vlog2.pop %v2138
        %v2190 = vmul.f32 %v2189, 0.6931472
        %v2191 = vlog2.pop %v2119
        %v2192 = vmul.f32 %v2191, 0.6931472
        %v2193 = vlog2.pop %v2120
        %v2194 = vmul.f32 %v2193, 0.6931472
        %v2195 = vlog2.pop %v2121
        %v2196 = vmul.f32 %v2195, 0.6931472
        %v2197 = vlog2.pop %v2122
        %v2198 = vmul.f32 %v2197, 0.6931472
        %v2199 = vsub.f32 %v2184, %v2192
        %v2200 = vsub.f32 %v2186, %v2194
        %v2201 = vsub.f32 %v2188, %v2196
        %v2202 = vsub.f32 %v2190, %v2198
        %v2203 = vand.u32 2147483647, %v2199
        %v2204 = vand.u32 2147483647, %v2200
        %v2205 = vand.u32 2147483647, %v2201
        %v2206 = vand.u32 2147483647, %v2202
        %v2207 = vmul.f32 %v2203, 0.5
        %v2208 = vmul.f32 %v2204, 0.5
        %v2209 = vmul.f32 %v2205, 0.5
        %v2210 = vmul.f32 %v2206, 0.5
        %v2211 = vlaneseq
        %v2212 = vshrl.u32 %v2211, 7
        %v2213 = vadd.s32 %v2212, 8
        %v2214 = vadd.s32 %v2212, 16
        %v2215 = vadd.s32 %v2212, 24
        %s2216 = smul.u32 %s25, 32
        %v2217 = vstv %s2216
        %v2218 = vadd.s32 %v2212, %v2217
        %v2219 = vadd.s32 %v2213, %v2217
        %v2220 = vadd.s32 %v2214, %v2217
        %v2221 = vadd.s32 %v2215, %v2217
        %vm2222 = vcmp.lt.s32.totalorder %v2218, 26
        %vm2223 = vcmp.lt.s32.totalorder %v2219, 26
        %vm2224 = vcmp.lt.s32.totalorder %v2220, 26
        %vm2225 = vcmp.lt.s32.totalorder %v2221, 26
        %v2226 = vsel %vm2222, 1, 0
        %v2227 = vsel %vm2223, 1, 0
        %v2228 = vsel %vm2224, 1, 0
        %v2229 = vsel %vm2225, 1, 0
        %v2230 = vcvt.s32.f32 %v2226
        %v2231 = vcvt.s32.f32 %v2227
        %v2232 = vcvt.s32.f32 %v2228
        %v2233 = vcvt.s32.f32 %v2229
        %v2234 = vlaneseq
        %v2235 = vand.u32 %v2234, 127
        %vm2236 = vcmp.ge.s32.totalorder %v2235, 1
        %vm2237 = vcmp.lt.s32.totalorder %v2235, 64
        %vm2238 = vmand %vm2236, %vm2237
        %v2239 = vsel %vm2238, 1, 0
        %v2240 = vcvt.s32.f32 %v2239
        %v2241 = vmul.f32 %v2230, %v2240
        %v2242 = vmul.f32 %v2231, %v2240
        %v2243 = vmul.f32 %v2232, %v2240
        %v2244 = vmul.f32 %v2233, %v2240
        %v2245 = vmul.f32 %v2179, %v2241
        %v2246 = vmul.f32 %v2180, %v2242
        %v2247 = vmul.f32 %v2181, %v2243
        %v2248 = vmul.f32 %v2182, %v2244
        %v2249 = vadd.f32 %v2245, %v2246
        %v2250 = vadd.f32 %v2249, %v2247
        %v2251 = vadd.f32 %v2250, %v2248
        %v2252 = vrot.slane %v2251, 4
        %v2253 = vadd.f32 %v2251, %v2252
        %v2254 = vrot.slane %v2253, 2
        %v2255 = vadd.f32 %v2253, %v2254
        %v2256 = vrot.slane %v2255, 1
        %v2257 = vadd.f32 %v2255, %v2256
        %v2258 = vmul.f32 %v2135, %v2241
        %v2259 = vmul.f32 %v2136, %v2242
        %v2260 = vmul.f32 %v2137, %v2243
        %v2261 = vmul.f32 %v2138, %v2244
        %v2262 = vadd.f32 %v2258, %v2259
        %v2263 = vadd.f32 %v2262, %v2260
        %v2264 = vadd.f32 %v2263, %v2261
        %v2265 = vrot.slane %v2264, 4
        %v2266 = vadd.f32 %v2264, %v2265
        %v2267 = vrot.slane %v2266, 2
        %v2268 = vadd.f32 %v2266, %v2267
        %v2269 = vrot.slane %v2268, 1
        %v2270 = vadd.f32 %v2268, %v2269
        %v2271 = vmul.f32 %v2207, %v2241
        %v2272 = vmul.f32 %v2208, %v2242
        %v2273 = vmul.f32 %v2209, %v2243
        %v2274 = vmul.f32 %v2210, %v2244
        %v2275 = vadd.f32 %v2271, %v2272
        %v2276 = vadd.f32 %v2275, %v2273
        %v2277 = vadd.f32 %v2276, %v2274
        %v2278 = vrot.slane %v2277, 4
        %v2279 = vadd.f32 %v2277, %v2278
        %v2280 = vrot.slane %v2279, 2
        %v2281 = vadd.f32 %v2279, %v2280
        %v2282 = vrot.slane %v2281, 1
        %v2283 = vadd.f32 %v2281, %v2282
        %v2284 = vmax.f32 %v2107, 1e-07
        %v2285 = vmax.f32 %v2108, 1e-07
        %v2286 = vmax.f32 %v2109, 1e-07
        %v2287 = vmax.f32 %v2110, 1e-07
        %v2288 = vmax.f32 %v2123, 1e-07
        %v2289 = vmax.f32 %v2124, 1e-07
        %v2290 = vmax.f32 %v2125, 1e-07
        %v2291 = vmax.f32 %v2126, 1e-07
        %v2292 = vadd.f32 %v2288, %v2284
        %v2293 = vadd.f32 %v2289, %v2285
        %v2294 = vadd.f32 %v2290, %v2286
        %v2295 = vadd.f32 %v2291, %v2287
        %v2296 = vmul.f32 %v2284, %v2288
        %v2297 = vmul.f32 %v2285, %v2289
        %v2298 = vmul.f32 %v2286, %v2290
        %v2299 = vmul.f32 %v2287, %v2291
        %v2300 = vrsqrt.pop %v2296
        %v2301 = vmul.f32 %v2296, %v2300
        %vm2302 = vcmp.eq.f32.partialorder %v2296, inf
        %v2303 = vsel %vm2302, %v2296, %v2301
        %vm2304 = vcmp.eq.f32.partialorder %v2296, 0.0
        %v2305 = vand.u32 %v2296, 2147483648
        %v2306 = vsel %vm2304, %v2305, %v2303
        %v2307 = vrsqrt.pop %v2297
        %v2308 = vmul.f32 %v2297, %v2307
        %vm2309 = vcmp.eq.f32.partialorder %v2297, inf
        %v2310 = vsel %vm2309, %v2297, %v2308
        %vm2311 = vcmp.eq.f32.partialorder %v2297, 0.0
        %v2312 = vand.u32 %v2297, 2147483648
        %v2313 = vsel %vm2311, %v2312, %v2310
        %v2314 = vrsqrt.pop %v2298
        %v2315 = vmul.f32 %v2298, %v2314
        %vm2316 = vcmp.eq.f32.partialorder %v2298, inf
        %v2317 = vsel %vm2316, %v2298, %v2315
        %vm2318 = vcmp.eq.f32.partialorder %v2298, 0.0
        %v2319 = vand.u32 %v2298, 2147483648
        %v2320 = vsel %vm2318, %v2319, %v2317
        %v2321 = vrsqrt.pop %v2299
        %v2322 = vmul.f32 %v2299, %v2321
        %vm2323 = vcmp.eq.f32.partialorder %v2299, inf
        %v2324 = vsel %vm2323, %v2299, %v2322
        %vm2325 = vcmp.eq.f32.partialorder %v2299, 0.0
        %v2326 = vand.u32 %v2299, 2147483648
        %v2327 = vsel %vm2325, %v2326, %v2324
        %v2328 = vmul.f32 %v2306, 2.0
        %v2329 = vmul.f32 %v2313, 2.0
        %v2330 = vmul.f32 %v2320, 2.0
        %v2331 = vmul.f32 %v2327, 2.0
        %v2332 = vsub.f32 %v2292, %v2328
        %v2333 = vsub.f32 %v2293, %v2329
        %v2334 = vsub.f32 %v2294, %v2330
        %v2335 = vsub.f32 %v2295, %v2331
        %v2336 = vlog2.pop %v2288
        %v2337 = vmul.f32 %v2336, 0.6931472
        %v2338 = vlog2.pop %v2289
        %v2339 = vmul.f32 %v2338, 0.6931472
        %v2340 = vlog2.pop %v2290
        %v2341 = vmul.f32 %v2340, 0.6931472
        %v2342 = vlog2.pop %v2291
        %v2343 = vmul.f32 %v2342, 0.6931472
        %v2344 = vlog2.pop %v2284
        %v2345 = vmul.f32 %v2344, 0.6931472
        %v2346 = vlog2.pop %v2285
        %v2347 = vmul.f32 %v2346, 0.6931472
        %v2348 = vlog2.pop %v2286
        %v2349 = vmul.f32 %v2348, 0.6931472
        %v2350 = vlog2.pop %v2287
        %v2351 = vmul.f32 %v2350, 0.6931472
        %v2352 = vsub.f32 %v2337, %v2345
        %v2353 = vsub.f32 %v2339, %v2347
        %v2354 = vsub.f32 %v2341, %v2349
        %v2355 = vsub.f32 %v2343, %v2351
        %v2356 = vand.u32 2147483647, %v2352
        %v2357 = vand.u32 2147483647, %v2353
        %v2358 = vand.u32 2147483647, %v2354
        %v2359 = vand.u32 2147483647, %v2355
        %v2360 = vmul.f32 %v2356, 0.5
        %v2361 = vmul.f32 %v2357, 0.5
        %v2362 = vmul.f32 %v2358, 0.5
        %v2363 = vmul.f32 %v2359, 0.5
        %v2364 = vmax.f32 %v2111, 1e-07
        %v2365 = vmax.f32 %v2112, 1e-07
        %v2366 = vmax.f32 %v2113, 1e-07
        %v2367 = vmax.f32 %v2114, 1e-07
        %v2368 = vmax.f32 %v2127, 1e-07
        %v2369 = vmax.f32 %v2128, 1e-07
        %v2370 = vmax.f32 %v2129, 1e-07
        %v2371 = vmax.f32 %v2130, 1e-07
        %v2372 = vadd.f32 %v2368, %v2364
        %v2373 = vadd.f32 %v2369, %v2365
        %v2374 = vadd.f32 %v2370, %v2366
        %v2375 = vadd.f32 %v2371, %v2367
        %v2376 = vmul.f32 %v2364, %v2368
        %v2377 = vmul.f32 %v2365, %v2369
        %v2378 = vmul.f32 %v2366, %v2370
        %v2379 = vmul.f32 %v2367, %v2371
        %v2380 = vrsqrt.pop %v2376
        %v2381 = vmul.f32 %v2376, %v2380
        %vm2382 = vcmp.eq.f32.partialorder %v2376, inf
        %v2383 = vsel %vm2382, %v2376, %v2381
        %vm2384 = vcmp.eq.f32.partialorder %v2376, 0.0
        %v2385 = vand.u32 %v2376, 2147483648
        %v2386 = vsel %vm2384, %v2385, %v2383
        %v2387 = vrsqrt.pop %v2377
        %v2388 = vmul.f32 %v2377, %v2387
        %vm2389 = vcmp.eq.f32.partialorder %v2377, inf
        %v2390 = vsel %vm2389, %v2377, %v2388
        %vm2391 = vcmp.eq.f32.partialorder %v2377, 0.0
        %v2392 = vand.u32 %v2377, 2147483648
        %v2393 = vsel %vm2391, %v2392, %v2390
        %v2394 = vrsqrt.pop %v2378
        %v2395 = vmul.f32 %v2378, %v2394
        %vm2396 = vcmp.eq.f32.partialorder %v2378, inf
        %v2397 = vsel %vm2396, %v2378, %v2395
        %vm2398 = vcmp.eq.f32.partialorder %v2378, 0.0
        %v2399 = vand.u32 %v2378, 2147483648
        %v2400 = vsel %vm2398, %v2399, %v2397
        %v2401 = vrsqrt.pop %v2379
        %v2402 = vmul.f32 %v2379, %v2401
        %vm2403 = vcmp.eq.f32.partialorder %v2379, inf
        %v2404 = vsel %vm2403, %v2379, %v2402
        %vm2405 = vcmp.eq.f32.partialorder %v2379, 0.0
        %v2406 = vand.u32 %v2379, 2147483648
        %v2407 = vsel %vm2405, %v2406, %v2404
        %v2408 = vmul.f32 %v2386, 2.0
        %v2409 = vmul.f32 %v2393, 2.0
        %v2410 = vmul.f32 %v2400, 2.0
        %v2411 = vmul.f32 %v2407, 2.0
        %v2412 = vsub.f32 %v2372, %v2408
        %v2413 = vsub.f32 %v2373, %v2409
        %v2414 = vsub.f32 %v2374, %v2410
        %v2415 = vsub.f32 %v2375, %v2411
        %v2416 = vlog2.pop %v2368
        %v2417 = vmul.f32 %v2416, 0.6931472
        %v2418 = vlog2.pop %v2369
        %v2419 = vmul.f32 %v2418, 0.6931472
        %v2420 = vlog2.pop %v2370
        %v2421 = vmul.f32 %v2420, 0.6931472
        %v2422 = vlog2.pop %v2371
        %v2423 = vmul.f32 %v2422, 0.6931472
        %v2424 = vlog2.pop %v2364
        %v2425 = vmul.f32 %v2424, 0.6931472
        %v2426 = vlog2.pop %v2365
        %v2427 = vmul.f32 %v2426, 0.6931472
        %v2428 = vlog2.pop %v2366
        %v2429 = vmul.f32 %v2428, 0.6931472
        %v2430 = vlog2.pop %v2367
        %v2431 = vmul.f32 %v2430, 0.6931472
        %v2432 = vsub.f32 %v2417, %v2425
        %v2433 = vsub.f32 %v2419, %v2427
        %v2434 = vsub.f32 %v2421, %v2429
        %v2435 = vsub.f32 %v2423, %v2431
        %v2436 = vand.u32 2147483647, %v2432
        %v2437 = vand.u32 2147483647, %v2433
        %v2438 = vand.u32 2147483647, %v2434
        %v2439 = vand.u32 2147483647, %v2435
        %v2440 = vmul.f32 %v2436, 0.5
        %v2441 = vmul.f32 %v2437, 0.5
        %v2442 = vmul.f32 %v2438, 0.5
        %v2443 = vmul.f32 %v2439, 0.5
        %vm2444 = vcmp.eq.s32.totalorder %v2235, 0
        %v2445 = vsel %vm2444, 1, 0
        %v2446 = vcvt.s32.f32 %v2445
        %v2447 = vadd.f32 %v2332, %v2412
        %v2448 = vadd.f32 %v2333, %v2413
        %v2449 = vadd.f32 %v2334, %v2414
        %v2450 = vadd.f32 %v2335, %v2415
        %v2451 = vmul.f32 %v2447, %v2230
        %v2452 = vmul.f32 %v2448, %v2231
        %v2453 = vmul.f32 %v2449, %v2232
        %v2454 = vmul.f32 %v2450, %v2233
        %vm2455 = vcmask 7168
        %v2456 = vsel %vm2455, %v2451, 0.0
        %v2457 = vsel %vm2455, %v2452, 0.0
        %v2458 = vadd.f32 %v2456, %v2457
        %v2459 = vsel %vm2455, %v2453, 0.0
        %v2460 = vadd.f32 %v2458, %v2459
        %v2461 = vsel %vm2455, %v2454, 0.0
        %v2462 = vadd.f32 %v2460, %v2461
        %v2463 = vrot.slane %v2462, 4
        %v2464 = vadd.f32 %v2462, %v2463
        %v2465 = vrot.slane %v2464, 2
        %v2466 = vadd.f32 %v2464, %v2465
        %v2467 = vrot.slane %v2466, 1
        %v2468 = vadd.f32 %v2466, %v2467
        %2470 = vset.pattern.permute.xlu0 0
        %2471 = vperm.xlu0 %2470, %v2468
        %v2472 = vpop.permute.xlu0 %2471
        %v2474 = vmul.f32 %v2472, %v2446
        %v2475 = vadd.f32 %v2257, %v2474
        %v2476 = vadd.f32 %v2288, %v2368
        %v2477 = vadd.f32 %v2289, %v2369
        %v2478 = vadd.f32 %v2290, %v2370
        %v2479 = vadd.f32 %v2291, %v2371
        %v2480 = vmul.f32 %v2476, %v2230
        %v2481 = vmul.f32 %v2477, %v2231
        %v2482 = vmul.f32 %v2478, %v2232
        %v2483 = vmul.f32 %v2479, %v2233
        %v2484 = vsel %vm2455, %v2480, 0.0
        %v2485 = vsel %vm2455, %v2481, 0.0
        %v2486 = vadd.f32 %v2484, %v2485
        %v2487 = vsel %vm2455, %v2482, 0.0
        %v2488 = vadd.f32 %v2486, %v2487
        %v2489 = vsel %vm2455, %v2483, 0.0
        %v2490 = vadd.f32 %v2488, %v2489
        %v2491 = vrot.slane %v2490, 4
        %v2492 = vadd.f32 %v2490, %v2491
        %v2493 = vrot.slane %v2492, 2
        %v2494 = vadd.f32 %v2492, %v2493
        %v2495 = vrot.slane %v2494, 1
        %v2496 = vadd.f32 %v2494, %v2495
        %2498 = vset.pattern.permute.xlu0 0
        %2499 = vperm.xlu0 %2498, %v2496
        %v2500 = vpop.permute.xlu0 %2499
        %v2502 = vmul.f32 %v2500, %v2446
        %v2503 = vadd.f32 %v2270, %v2502
        %v2504 = vadd.f32 %v2360, %v2440
        %v2505 = vadd.f32 %v2361, %v2441
        %v2506 = vadd.f32 %v2362, %v2442
        %v2507 = vadd.f32 %v2363, %v2443
        %v2508 = vmul.f32 %v2504, %v2230
        %v2509 = vmul.f32 %v2505, %v2231
        %v2510 = vmul.f32 %v2506, %v2232
        %v2511 = vmul.f32 %v2507, %v2233
        %v2512 = vsel %vm2455, %v2508, 0.0
        %v2513 = vsel %vm2455, %v2509, 0.0
        %v2514 = vadd.f32 %v2512, %v2513
        %v2515 = vsel %vm2455, %v2510, 0.0
        %v2516 = vadd.f32 %v2514, %v2515
        %v2517 = vsel %vm2455, %v2511, 0.0
        %v2518 = vadd.f32 %v2516, %v2517
        %v2519 = vrot.slane %v2518, 4
        %v2520 = vadd.f32 %v2518, %v2519
        %v2521 = vrot.slane %v2520, 2
        %v2522 = vadd.f32 %v2520, %v2521
        %v2523 = vrot.slane %v2522, 1
        %v2524 = vadd.f32 %v2522, %v2523
        %2526 = vset.pattern.permute.xlu0 0
        %2527 = vperm.xlu0 %2526, %v2524
        %v2528 = vpop.permute.xlu0 %2527
        %v2530 = vmul.f32 %v2528, %v2446
        %v2531 = vadd.f32 %v2283, %v2530
        %v2535 = vcombine.low %v2475, %v2503
        %v2537 = vunpack.c.l.s4 1966171168
        %v2538 = vunpack.c.0.s8 %v2537
        %v2539 = vlaneseq
        %v2540 = vshrl.u32 %v2539, 7
        %v2541 = vsub.s32 %v2538, %v2540
        %v2542 = vrot.slane %v2535, %v2541
        %v2544 = vunpack.c.l.s4 1966171168
        %v2545 = vunpack.c.0.s8 %v2544
        %v2546 = vlaneseq
        %v2547 = vshrl.u32 %v2546, 7
        %v2548 = vsub.s32 %v2545, %v2547
        %v2549 = vrot.slane %v2531, %v2548
        %v2550 = vcombine.low %v2542, %v2549
        %v2552 = vunpack.c.l.s4 1966171168
        %v2553 = vunpack.c.0.s8 %v2552
        %v2554 = vlaneseq
        %v2555 = vshrl.u32 %v2554, 7
        %v2556 = vsub.s32 %v2553, %v2555
        %v2557 = vrot.slane %v2550, %v2556
        %v2559 = vlaneseq
        %vm2560 = vcmp.ge.s32.totalorder %v2559, 0
        %vm2561 = vcmp.lt.s32.totalorder %v2559, 384
        %vm2562 = vmand %vm2560, %vm2561
        %2563 = vst.msk [vmem:[%s391] sm:$0x7] %vm2562, %v2557
        %s2564 = sand.u32 %s204, 1
        %s2565 = scalar_lea.sflag [#allocation7], %s2564
        %s2566 = sand.u32 %s204, 1
        %s2567 = smul.addr %s2566, 3
        %s2568 = scalar_lea.vmem [#allocation6], %s2567
        // Predicated region
        $region45: #{tpu_custom_call.1} parent=43 // pred_check
          %p2569 = pneg %p214
        $region46: #{tpu_custom_call.1} parent=43 // pred_check_branch
          %2571 = sbr.rel (%p2569) target = $region48
        $region47: #{tpu_custom_call.1} parent=43 // pred_region
          %s2573 = ssub.s32 48, 48
          %2574 = vsyncadd %s2565, %s2573
          %s2575 = smul.addr %s25, 3
          %s2576 = smul.addr %s24, 3
          %s2577 = sadd.s32 %s2575, %s2576
          %s2578 = smul.addr %s2577, 16
          %s2579 = scalar_lea.hbm %s6, %s2578
          %s2581 = sshll.u32 %s2568, 4
          %s2582 = int_to_ptr.vmem [resolvable:$true] %s2581
          %2584 = dma.vmem_to_hbm [thread:$0]  %s2582, 48, %s2579, %s2565
        $region48: #{tpu_custom_call.1} parent=43 // pred_fallthru
          _
      $region44: #{tpu_custom_call.1} parent=5 // pred_fallthru
        _
      %p2585 = scmp.le.s32.totalorder 2, %s15
      // Predicated region
      $region49: #{tpu_custom_call.1} parent=5 // pred_check
        %p2586 = pneg %p2585
      $region50: #{tpu_custom_call.1} parent=5 // pred_check_branch
        %2588 = sbr.rel (%p2586) target = $region52
      $region51: #{tpu_custom_call.1} parent=5 // pred_region
        %s2589 = ssub.s32 %s15, 2
        // Predicated region
        $region53: #{tpu_custom_call.1} parent=51 // pred_check
          %p2590 = pneg %p220
        $region54: #{tpu_custom_call.1} parent=51 // pred_check_branch
          %2592 = sbr.rel (%p2590) target = $region56
        $region55: #{tpu_custom_call.1} parent=51 // pred_region
          %s2593 = sand.u32 %s205, 1
          %s2594 = scalar_lea.sflag [#allocation7], %s2593
          %s2595 = sand.u32 %s205, 1
          %s2596 = smul.addr %s2595, 3
          %s2597 = scalar_lea.vmem [#allocation6], %s2596
          %2598 = dma.done %s2594, 48
        $region56: #{tpu_custom_call.1} parent=51 // pred_fallthru
          _
      $region52: #{tpu_custom_call.1} parent=5 // pred_fallthru
        _
    $region6: #{tpu_custom_call.1} parent=1 // loop_footer
      %s19 = sadd.s32 1, %s15
    $region7: #{tpu_custom_call.1} parent=1 // loop_footer_branch
      %14 = sbr.rel target = $region3
    $region8: #{tpu_custom_call.1} parent=1 // loop_exit
      _
    %2599 = vsyncpa [#allocation7], 1
    %s2600 = scalar_lea.sflag [#allocation7], 1
    %2601 = vsyncpa %s2600, 1

</llo_original>
